<compile_context>
chip_gen: v7x
topology: tpu7x:2x2x1
jax: 0.10.0
libtpu: 0.0.40
codegen_flags: <defaults>
</compile_context>

<pallas_src>
import jax
import jax.numpy as jnp
from jax import lax
from jax.experimental import pallas as pl
from jax.experimental.pallas import tpu as pltpu


def _double_conv_kernel(xm_ref, xh_ref, w1_ref, s1_ref, b1_ref,
                        w2_ref, s2_ref, b2_ref, o_ref,
                        xpad_ref, midpad_ref):
    """Fused (conv3x3 -> BN affine -> ReLU) x 2 for one H-strip of one image.

    xm_ref:   (1, S, W+2, Cin)   bf16 main strip rows of the pre-padded input
    xh_ref:   (1, 4, W+2, Cin)   bf16 halo rows (next 4 rows of the same array)
    w1_ref:   (9, Cin, Cmid)     bf16 per-tap weights, stage 1
    s1_ref/b1_ref: (1, Cmid)     f32 folded BN1 scale / bias
    w2_ref:   (9, Cmid, Cout)    bf16 per-tap weights, stage 2
    s2_ref/b2_ref: (1, Cout)     f32 folded BN2 scale / bias
    o_ref:    (1, Cout, S*W)     channel-major output block (== NCHW, lane-dense)
    xpad_ref:   (S+4, W+2, Cin)  bf16 VMEM scratch, padded input strip
    midpad_ref: (S+2, W+2, Cmid) bf16 VMEM scratch, zero-bordered intermediate
    """
    S = xm_ref.shape[1]
    W = xm_ref.shape[2] - 2
    Cin = xm_ref.shape[3]
    Cmid = w1_ref.shape[2]
    Cout = w2_ref.shape[2]
    i = pl.program_id(1)
    ns = pl.num_programs(1)

    # Assemble the zero-padded input strip from the two auto-pipelined blocks.
    # Both stores are aligned row-range copies along the outermost axis.
    xpad_ref[0:S, :, :] = xm_ref[0]
    xpad_ref[S:S + 4, :, :] = xh_ref[0]

    # ---- stage 1: conv3x3 as 9 accumulating K=Cin matmuls ------------------
    acc1 = jnp.zeros(((S + 2) * W, Cmid), jnp.float32)
    for t in range(9):
        dy, dx = divmod(t, 3)
        a_tap = xpad_ref[dy:dy + S + 2, dx:dx + W, :].reshape((S + 2) * W, Cin)
        acc1 = acc1 + jnp.dot(a_tap, w1_ref[t],
                              preferred_element_type=jnp.float32)
    mid = jnp.maximum(acc1 * s1_ref[...] + b1_ref[...], 0.0)      # f32 epilogue
    mid_bf = mid.astype(midpad_ref.dtype).reshape(S + 2, W, Cmid)

    # ---- stage 2 input: VMEM-resident, zero-bordered ------------------------
    midpad_ref[:, 1:W + 1, :] = mid_bf
    zcol = jnp.zeros((S + 2, 1, Cmid), midpad_ref.dtype)
    midpad_ref[:, 0:1, :] = zcol
    midpad_ref[:, W + 1:W + 2, :] = zcol

    @pl.when(i == 0)
    def _():
        # mid image row "-1" is conv2 zero padding, not a conv1 output.
        midpad_ref[0:1, :, :] = jnp.zeros((1, W + 2, Cmid), midpad_ref.dtype)

    @pl.when(i == ns - 1)
    def _():
        # mid image row "H" likewise.
        midpad_ref[S + 1:S + 2, :, :] = jnp.zeros((1, W + 2, Cmid),
                                                  midpad_ref.dtype)

    # ---- stage 2: conv3x3 as 9 accumulating K=Cmid matmuls ------------------
    acc2 = jnp.zeros((S * W, Cout), jnp.float32)
    for t in range(9):
        dy, dx = divmod(t, 3)
        b_tap = midpad_ref[dy:dy + S, dx:dx + W, :].reshape(S * W, Cmid)
        acc2 = acc2 + jnp.dot(b_tap, w2_ref[t],
                              preferred_element_type=jnp.float32)
    y = jnp.maximum(acc2 * s2_ref[...] + b2_ref[...], 0.0)        # f32 epilogue

    # Transpose only the small (S*W, Cout) result -> channel-major, lane-dense.
    o_ref[0] = jnp.transpose(y, (1, 0)).astype(o_ref.dtype)


def _fold_bn(gamma, beta, mean, var, eps):
    """Eval-mode BatchNorm -> per-channel (scale, bias) in f32."""
    scale = (gamma / jnp.sqrt(var + eps)).astype(jnp.float32)
    bias = (beta - mean * scale).astype(jnp.float32)
    return scale, bias


def _taps(w_oihw):
    """PyTorch conv weight (Cout, Cin, 3, 3) -> (9, Cin, Cout) per-tap weights."""
    cout, cin, kh, kw = w_oihw.shape
    return jnp.transpose(w_oihw, (2, 3, 1, 0)).reshape(kh * kw, cin, cout)


def _vmem_estimate(S, W, Cin, Cmid, Cout):
    """Rough per-core VMEM usage (bytes) for a strip of S output rows."""
    bf, f4 = 2, 4
    io_blocks = 2 * (S * (W + 2) * Cin * bf          # main strip (double buf)
                     + 4 * (W + 2) * Cin * bf        # halo rows
                     + Cout * S * W * f4)            # output block
    weights = 9 * (Cin * Cmid + Cmid * Cout) * bf + 2 * (Cmid + Cout) * f4
    scratch = (S + 4) * (W + 2) * Cin * bf + (S + 2) * (W + 2) * Cmid * bf
    live = ((S + 2) * W * Cmid * f4                  # stage-1 accumulator
            + 2 * S * W * Cout * f4                  # stage-2 acc + transpose
            + 2 * (S + 2) * W * max(Cin, Cmid) * bf)  # tap operand copies
    return int(1.4 * (io_blocks + weights + scratch + live))


def _pick_strip_h(H, W, Cin, Cmid, Cout, budget_bytes=40 * (1 << 20)):
    """Largest strip height that divides H, is a multiple of 4, keeps the
    output block lane-dense, and fits the VMEM budget (v7x-safe)."""
    cands = [s for s in range(H, 3, -1)
             if H % s == 0 and s % 4 == 0 and (s == H or (s * W) % 128 == 0)]
    if not cands:
        return H
    for s in cands:
        if _vmem_estimate(s, W, Cin, Cmid, Cout) <= budget_bytes:
            return s
    return cands[-1]


def double_conv_forward(x_nchw, params, eps=1e-5, strip_h=None):
    """DoubleConv forward pass. x_nchw: (N, Cin, H, W) -> (N, Cout, H, W)."""
    N, Cin, H, W = x_nchw.shape
    if H % 4 != 0:
        raise ValueError("H must be a multiple of 4 for the halo-block tiling")

    w1_taps = _taps(params["conv1_w"]).astype(jnp.bfloat16)   # (9, Cin, Cmid)
    w2_taps = _taps(params["conv2_w"]).astype(jnp.bfloat16)   # (9, Cmid, Cout)
    Cmid, Cout = w1_taps.shape[2], w2_taps.shape[2]
    s1, b1 = _fold_bn(params["bn1_gamma"], params["bn1_beta"],
                      params["bn1_mean"], params["bn1_var"], eps)
    s2, b2 = _fold_bn(params["bn2_gamma"], params["bn2_beta"],
                      params["bn2_mean"], params["bn2_var"], eps)

    S = _pick_strip_h(H, W, Cin, Cmid, Cout) if strip_h is None else strip_h
    assert H % S == 0 and S % 4 == 0, (H, S)
    ns = H // S
    assert ns == 1 or (S * W) % 128 == 0, "strip output block must be lane-dense"

    # NCHW -> NHWC (channels on lanes) + zero pre-pad: 2 rows top/bottom for the
    # two-stage halo, 1 col left/right for conv SAME padding.  Fuses with the
    # layout transpose (single HBM pass) under jit.
    x_pad = jnp.pad(
        jnp.transpose(x_nchw, (0, 2, 3, 1)).astype(jnp.bfloat16),
        ((0, 0), (2, 2), (1, 1), (0, 0)))

    vmem_limit = int(min(max(_vmem_estimate(S, W, Cin, Cmid, Cout),
                             32 * (1 << 20)), 64 * (1 << 20)))
    flops = 2 * N * H * W * 9 * (Cin * Cmid + Cmid * Cout)
    bytes_accessed = int(x_pad.size * 2 + N * Cout * H * W * 4
                         + (w1_taps.size + w2_taps.size) * 2)

    def wspec(shape):
        # Grid-invariant operand: constant index map + single buffer.
        return pl.BlockSpec(shape, lambda n, i: (0,) * len(shape),
                            pipeline_mode=pl.Buffered(1))

    grid_spec = pltpu.PrefetchScalarGridSpec(
        num_scalar_prefetch=0,
        grid=(N, ns),
        in_specs=[
            # main strip: pre-padded rows [i*S, i*S+S)
            pl.BlockSpec((1, S, W + 2, Cin), lambda n, i: (n, i, 0, 0)),
            # halo: pre-padded rows [i*S+S, i*S+S+4) of the same array
            pl.BlockSpec((1, 4, W + 2, Cin),
                         lambda n, i: (n, (i + 1) * (S // 4), 0, 0)),
            wspec((9, Cin, Cmid)),
            wspec((1, Cmid)),
            wspec((1, Cmid)),
            wspec((9, Cmid, Cout)),
            wspec((1, Cout)),
            wspec((1, Cout)),
        ],
        out_specs=pl.BlockSpec((1, Cout, S * W), lambda n, i: (n, 0, i)),
        scratch_shapes=[
            pltpu.VMEM((S + 4, W + 2, Cin), jnp.bfloat16),
            pltpu.VMEM((S + 2, W + 2, Cmid), jnp.bfloat16),
        ],
    )

    out = pl.pallas_call(
        _double_conv_kernel,
        out_shape=jax.ShapeDtypeStruct((N, Cout, H * W), x_nchw.dtype),
        grid_spec=grid_spec,
        compiler_params=pltpu.CompilerParams(
            dimension_semantics=("parallel", "parallel"),
            vmem_limit_bytes=vmem_limit),
        cost_estimate=pl.CostEstimate(flops=flops, transcendentals=0,
                                      bytes_accessed=bytes_accessed),
    )(x_pad, x_pad, w1_taps,
      s1.reshape(1, Cmid), b1.reshape(1, Cmid),
      w2_taps, s2.reshape(1, Cout), b2.reshape(1, Cout))

    return out.reshape(N, Cout, H, W)   # contiguous reshape, already NCHW


def reference_forward(x_nchw, params, eps=1e-5, quantize_bf16=False):
    """Pure-JAX reference mirroring the PyTorch module (eval-mode BN).

    quantize_bf16=True rounds conv inputs/weights to bf16 (what the kernel
    consumes) for a tight structural parity check.
    """
    def q(a):
        return a.astype(jnp.bfloat16).astype(jnp.float32) if quantize_bf16 else a

    def conv(x, w):
        return lax.conv_general_dilated(
            q(x), q(w), window_strides=(1, 1), padding="SAME",
            dimension_numbers=("NCHW", "OIHW", "NCHW"))

    def bn_relu(x, g, b, m, v):
        s = g / jnp.sqrt(v + eps)
        bi = b - m * s
        return jnp.maximum(x * s[None, :, None, None]
                           + bi[None, :, None, None], 0.0)

    x = bn_relu(conv(x_nchw, params["conv1_w"]), params["bn1_gamma"],
                params["bn1_beta"], params["bn1_mean"], params["bn1_var"])
    x = bn_relu(conv(x, params["conv2_w"]), params["bn2_gamma"],
                params["bn2_beta"], params["bn2_mean"], params["bn2_var"])
    return x


if __name__ == "__main__":
    key = jax.random.PRNGKey(0)
    in_ch, mid_ch, out_ch = 4, 8, 8   # mid_channel defaults to out_channel
    N, H, W = 2, 16, 16

    ks = jax.random.split(key, 8)
    x = jax.random.normal(ks[0], (N, in_ch, H, W), jnp.float32)

    params = {
        "conv1_w": 0.1 * jax.random.normal(ks[1], (mid_ch, in_ch, 3, 3), jnp.float32),
        "bn1_gamma": 1.0 + 0.1 * jax.random.normal(ks[2], (mid_ch,), jnp.float32),
        "bn1_beta": 0.1 * jax.random.normal(ks[3], (mid_ch,), jnp.float32),
        "bn1_mean": 0.05 * jax.random.normal(ks[4], (mid_ch,), jnp.float32),
        "bn1_var": jnp.abs(1.0 + 0.1 * jax.random.normal(ks[5], (mid_ch,), jnp.float32)),
        "conv2_w": 0.1 * jax.random.normal(ks[6], (out_ch, mid_ch, 3, 3), jnp.float32),
        "bn2_gamma": jnp.linspace(0.9, 1.1, out_ch, dtype=jnp.float32),
        "bn2_beta": jnp.linspace(-0.1, 0.1, out_ch, dtype=jnp.float32),
        "bn2_mean": jnp.linspace(-0.05, 0.05, out_ch, dtype=jnp.float32),
        "bn2_var": jnp.linspace(0.8, 1.2, out_ch, dtype=jnp.float32),
    }

    # strip_h=8 -> 2 H-strips, exercising the halo / multi-strip path.
    fwd = jax.jit(lambda xx, pp: double_conv_forward(xx, pp, strip_h=8))
    out = jax.block_until_ready(fwd(x, params))

    ref = jax.block_until_ready(reference_forward(x, params))
    ref_q = jax.block_until_ready(reference_forward(x, params, quantize_bf16=True))

    assert out.shape == (N, out_ch, H, W), out.shape
    err_q = float(jnp.max(jnp.abs(out - ref_q)))
    err_f = float(jnp.max(jnp.abs(out - ref)))
    # Tight structural check against the bf16-quantized reference, and a
    # loose check against the pure-f32 PyTorch-equivalent reference.
    assert jnp.allclose(out, ref_q, atol=1e-2, rtol=1e-2), err_q
    assert jnp.allclose(out, ref, atol=5e-2, rtol=5e-2), err_f
    print("KERNEL_OK")
</pallas_src>

<mosaic_0001>
module attributes {stable_mosaic.version = 11 : i64} {
  func.func @_double_conv_kernel(%arg0: i32, %arg1: i32, %arg2: memref<1x8x18x4xbf16, #tpu.memory_space<vmem>>, %arg3: memref<1x4x18x4xbf16, #tpu.memory_space<vmem>>, %arg4: memref<9x4x8xbf16, #tpu.memory_space<vmem>>, %arg5: memref<1x8xf32, #tpu.memory_space<vmem>>, %arg6: memref<1x8xf32, #tpu.memory_space<vmem>>, %arg7: memref<9x8x8xbf16, #tpu.memory_space<vmem>>, %arg8: memref<1x8xf32, #tpu.memory_space<vmem>>, %arg9: memref<1x8xf32, #tpu.memory_space<vmem>>, %arg10: memref<1x8x128xf32, #tpu.memory_space<vmem>>, %arg11: memref<12x18x4xbf16, #tpu.memory_space<vmem>>, %arg12: memref<10x18x8xbf16, #tpu.memory_space<vmem>>) attributes {dimension_semantics = [#tpu.dimension_semantics<parallel>, #tpu.dimension_semantics<parallel>], iteration_bounds = array<i64: 2, 2>, scalar_prefetch = 0 : i64, scratch_operands = 2 : i64, tpu.core_type = #tpu.core_type<tc>, window_params = [{transform_indices = @transform_0, window_bounds = array<i64: 1, 8, 18, 4>}, {transform_indices = @transform_1, window_bounds = array<i64: 1, 4, 18, 4>}, {pipeline_mode = #tpu.pipeline_mode<synchronous>, transform_indices = @transform_2, window_bounds = array<i64: 9, 4, 8>}, {pipeline_mode = #tpu.pipeline_mode<synchronous>, transform_indices = @transform_3, window_bounds = array<i64: 1, 8>}, {pipeline_mode = #tpu.pipeline_mode<synchronous>, transform_indices = @transform_4, window_bounds = array<i64: 1, 8>}, {pipeline_mode = #tpu.pipeline_mode<synchronous>, transform_indices = @transform_5, window_bounds = array<i64: 9, 8, 8>}, {pipeline_mode = #tpu.pipeline_mode<synchronous>, transform_indices = @transform_6, window_bounds = array<i64: 1, 8>}, {pipeline_mode = #tpu.pipeline_mode<synchronous>, transform_indices = @transform_7, window_bounds = array<i64: 1, 8>}, {transform_indices = @transform_8, window_bounds = array<i64: 1, 8, 128>}]} {
    %c0 = arith.constant 0 : index
    %c0_0 = arith.constant 0 : index
    %c0_1 = arith.constant 0 : index
    %c0_2 = arith.constant 0 : index
    %0 = vector.load %arg2[%c0, %c0_0, %c0_1, %c0_2] : memref<1x8x18x4xbf16, #tpu.memory_space<vmem>>, vector<1x8x18x4xbf16>
    %1 = vector.shape_cast %0 : vector<1x8x18x4xbf16> to vector<8x18x4xbf16>
    %c0_3 = arith.constant 0 : index
    %c0_4 = arith.constant 0 : index
    %c0_5 = arith.constant 0 : index
    %2 = vector.load %arg11[%c0_3, %c0_4, %c0_5] : memref<12x18x4xbf16, #tpu.memory_space<vmem>>, vector<8x18x4xbf16>
    tpu.vector_store %arg11[%c0_3, %c0_4, %c0_5], %1 {strides = array<i32>} : memref<12x18x4xbf16, #tpu.memory_space<vmem>>, vector<8x18x4xbf16>,
    %c0_6 = arith.constant 0 : index
    %c0_7 = arith.constant 0 : index
    %c0_8 = arith.constant 0 : index
    %c0_9 = arith.constant 0 : index
    %3 = vector.load %arg3[%c0_6, %c0_7, %c0_8, %c0_9] : memref<1x4x18x4xbf16, #tpu.memory_space<vmem>>, vector<1x4x18x4xbf16>
    %4 = vector.shape_cast %3 : vector<1x4x18x4xbf16> to vector<4x18x4xbf16>
    %c8 = arith.constant 8 : index
    %c0_10 = arith.constant 0 : index
    %c0_11 = arith.constant 0 : index
    %5 = vector.load %arg11[%c8, %c0_10, %c0_11] : memref<12x18x4xbf16, #tpu.memory_space<vmem>>, vector<4x18x4xbf16>
    tpu.vector_store %arg11[%c8, %c0_10, %c0_11], %4 {strides = array<i32>} : memref<12x18x4xbf16, #tpu.memory_space<vmem>>, vector<4x18x4xbf16>,
    %cst = arith.constant 0.000000e+00 : f32
    %6 = vector.broadcast %cst : f32 to vector<160x8xf32>
    %c0_12 = arith.constant 0 : index
    %c0_13 = arith.constant 0 : index
    %c0_14 = arith.constant 0 : index
    %7 = vector.load %arg11[%c0_12, %c0_13, %c0_14] : memref<12x18x4xbf16, #tpu.memory_space<vmem>>, vector<10x16x4xbf16>
    %8 = vector.shape_cast %7 : vector<10x16x4xbf16> to vector<160x4xbf16>
    %c0_15 = arith.constant 0 : index
    %c0_16 = arith.constant 0 : index
    %c0_17 = arith.constant 0 : index
    %9 = vector.load %arg4[%c0_15, %c0_16, %c0_17] : memref<9x4x8xbf16, #tpu.memory_space<vmem>>, vector<1x4x8xbf16>
    %10 = vector.shape_cast %9 : vector<1x4x8xbf16> to vector<4x8xbf16>
    %cst_18 = arith.constant dense<0.000000e+00> : vector<160x8xf32>
    %11 = tpu.matmul %8, %10, %cst_18 {dimension_numbers = #tpu.dot_dimension_numbers<[1], [0], [0], [1], [0, 0, 1, 1], [], []>} : vector<160x4xbf16>, vector<4x8xbf16>, vector<160x8xf32> -> vector<160x8xf32>
    %12 = arith.addf %6, %11 : vector<160x8xf32>
    %c0_19 = arith.constant 0 : index
    %c1 = arith.constant 1 : index
    %c0_20 = arith.constant 0 : index
    %13 = vector.load %arg11[%c0_19, %c1, %c0_20] : memref<12x18x4xbf16, #tpu.memory_space<vmem>>, vector<10x16x4xbf16>
    %14 = vector.shape_cast %13 : vector<10x16x4xbf16> to vector<160x4xbf16>
    %c1_21 = arith.constant 1 : index
    %c0_22 = arith.constant 0 : index
    %c0_23 = arith.constant 0 : index
    %15 = vector.load %arg4[%c1_21, %c0_22, %c0_23] : memref<9x4x8xbf16, #tpu.memory_space<vmem>>, vector<1x4x8xbf16>
    %16 = vector.shape_cast %15 : vector<1x4x8xbf16> to vector<4x8xbf16>
    %cst_24 = arith.constant dense<0.000000e+00> : vector<160x8xf32>
    %17 = tpu.matmul %14, %16, %cst_24 {dimension_numbers = #tpu.dot_dimension_numbers<[1], [0], [0], [1], [0, 0, 1, 1], [], []>} : vector<160x4xbf16>, vector<4x8xbf16>, vector<160x8xf32> -> vector<160x8xf32>
    %18 = arith.addf %12, %17 : vector<160x8xf32>
    %c0_25 = arith.constant 0 : index
    %c2 = arith.constant 2 : index
    %c0_26 = arith.constant 0 : index
    %19 = vector.load %arg11[%c0_25, %c2, %c0_26] : memref<12x18x4xbf16, #tpu.memory_space<vmem>>, vector<10x16x4xbf16>
    %20 = vector.shape_cast %19 : vector<10x16x4xbf16> to vector<160x4xbf16>
    %c2_27 = arith.constant 2 : index
    %c0_28 = arith.constant 0 : index
    %c0_29 = arith.constant 0 : index
    %21 = vector.load %arg4[%c2_27, %c0_28, %c0_29] : memref<9x4x8xbf16, #tpu.memory_space<vmem>>, vector<1x4x8xbf16>
    %22 = vector.shape_cast %21 : vector<1x4x8xbf16> to vector<4x8xbf16>
    %cst_30 = arith.constant dense<0.000000e+00> : vector<160x8xf32>
    %23 = tpu.matmul %20, %22, %cst_30 {dimension_numbers = #tpu.dot_dimension_numbers<[1], [0], [0], [1], [0, 0, 1, 1], [], []>} : vector<160x4xbf16>, vector<4x8xbf16>, vector<160x8xf32> -> vector<160x8xf32>
    %24 = arith.addf %18, %23 : vector<160x8xf32>
    %c1_31 = arith.constant 1 : index
    %c0_32 = arith.constant 0 : index
    %c0_33 = arith.constant 0 : index
    %25 = vector.load %arg11[%c1_31, %c0_32, %c0_33] : memref<12x18x4xbf16, #tpu.memory_space<vmem>>, vector<10x16x4xbf16>
    %26 = vector.shape_cast %25 : vector<10x16x4xbf16> to vector<160x4xbf16>
    %c3 = arith.constant 3 : index
    %c0_34 = arith.constant 0 : index
    %c0_35 = arith.constant 0 : index
    %27 = vector.load %arg4[%c3, %c0_34, %c0_35] : memref<9x4x8xbf16, #tpu.memory_space<vmem>>, vector<1x4x8xbf16>
    %28 = vector.shape_cast %27 : vector<1x4x8xbf16> to vector<4x8xbf16>
    %cst_36 = arith.constant dense<0.000000e+00> : vector<160x8xf32>
    %29 = tpu.matmul %26, %28, %cst_36 {dimension_numbers = #tpu.dot_dimension_numbers<[1], [0], [0], [1], [0, 0, 1, 1], [], []>} : vector<160x4xbf16>, vector<4x8xbf16>, vector<160x8xf32> -> vector<160x8xf32>
    %30 = arith.addf %24, %29 : vector<160x8xf32>
    %c1_37 = arith.constant 1 : index
    %c1_38 = arith.constant 1 : index
    %c0_39 = arith.constant 0 : index
    %31 = vector.load %arg11[%c1_37, %c1_38, %c0_39] : memref<12x18x4xbf16, #tpu.memory_space<vmem>>, vector<10x16x4xbf16>
    %32 = vector.shape_cast %31 : vector<10x16x4xbf16> to vector<160x4xbf16>
    %c4 = arith.constant 4 : index
    %c0_40 = arith.constant 0 : index
    %c0_41 = arith.constant 0 : index
    %33 = vector.load %arg4[%c4, %c0_40, %c0_41] : memref<9x4x8xbf16, #tpu.memory_space<vmem>>, vector<1x4x8xbf16>
    %34 = vector.shape_cast %33 : vector<1x4x8xbf16> to vector<4x8xbf16>
    %cst_42 = arith.constant dense<0.000000e+00> : vector<160x8xf32>
    %35 = tpu.matmul %32, %34, %cst_42 {dimension_numbers = #tpu.dot_dimension_numbers<[1], [0], [0], [1], [0, 0, 1, 1], [], []>} : vector<160x4xbf16>, vector<4x8xbf16>, vector<160x8xf32> -> vector<160x8xf32>
    %36 = arith.addf %30, %35 : vector<160x8xf32>
    %c1_43 = arith.constant 1 : index
    %c2_44 = arith.constant 2 : index
    %c0_45 = arith.constant 0 : index
    %37 = vector.load %arg11[%c1_43, %c2_44, %c0_45] : memref<12x18x4xbf16, #tpu.memory_space<vmem>>, vector<10x16x4xbf16>
    %38 = vector.shape_cast %37 : vector<10x16x4xbf16> to vector<160x4xbf16>
    %c5 = arith.constant 5 : index
    %c0_46 = arith.constant 0 : index
    %c0_47 = arith.constant 0 : index
    %39 = vector.load %arg4[%c5, %c0_46, %c0_47] : memref<9x4x8xbf16, #tpu.memory_space<vmem>>, vector<1x4x8xbf16>
    %40 = vector.shape_cast %39 : vector<1x4x8xbf16> to vector<4x8xbf16>
    %cst_48 = arith.constant dense<0.000000e+00> : vector<160x8xf32>
    %41 = tpu.matmul %38, %40, %cst_48 {dimension_numbers = #tpu.dot_dimension_numbers<[1], [0], [0], [1], [0, 0, 1, 1], [], []>} : vector<160x4xbf16>, vector<4x8xbf16>, vector<160x8xf32> -> vector<160x8xf32>
    %42 = arith.addf %36, %41 : vector<160x8xf32>
    %c2_49 = arith.constant 2 : index
    %c0_50 = arith.constant 0 : index
    %c0_51 = arith.constant 0 : index
    %43 = vector.load %arg11[%c2_49, %c0_50, %c0_51] : memref<12x18x4xbf16, #tpu.memory_space<vmem>>, vector<10x16x4xbf16>
    %44 = vector.shape_cast %43 : vector<10x16x4xbf16> to vector<160x4xbf16>
    %c6 = arith.constant 6 : index
    %c0_52 = arith.constant 0 : index
    %c0_53 = arith.constant 0 : index
    %45 = vector.load %arg4[%c6, %c0_52, %c0_53] : memref<9x4x8xbf16, #tpu.memory_space<vmem>>, vector<1x4x8xbf16>
    %46 = vector.shape_cast %45 : vector<1x4x8xbf16> to vector<4x8xbf16>
    %cst_54 = arith.constant dense<0.000000e+00> : vector<160x8xf32>
    %47 = tpu.matmul %44, %46, %cst_54 {dimension_numbers = #tpu.dot_dimension_numbers<[1], [0], [0], [1], [0, 0, 1, 1], [], []>} : vector<160x4xbf16>, vector<4x8xbf16>, vector<160x8xf32> -> vector<160x8xf32>
    %48 = arith.addf %42, %47 : vector<160x8xf32>
    %c2_55 = arith.constant 2 : index
    %c1_56 = arith.constant 1 : index
    %c0_57 = arith.constant 0 : index
    %49 = vector.load %arg11[%c2_55, %c1_56, %c0_57] : memref<12x18x4xbf16, #tpu.memory_space<vmem>>, vector<10x16x4xbf16>
    %50 = vector.shape_cast %49 : vector<10x16x4xbf16> to vector<160x4xbf16>
    %c7 = arith.constant 7 : index
    %c0_58 = arith.constant 0 : index
    %c0_59 = arith.constant 0 : index
    %51 = vector.load %arg4[%c7, %c0_58, %c0_59] : memref<9x4x8xbf16, #tpu.memory_space<vmem>>, vector<1x4x8xbf16>
    %52 = vector.shape_cast %51 : vector<1x4x8xbf16> to vector<4x8xbf16>
    %cst_60 = arith.constant dense<0.000000e+00> : vector<160x8xf32>
    %53 = tpu.matmul %50, %52, %cst_60 {dimension_numbers = #tpu.dot_dimension_numbers<[1], [0], [0], [1], [0, 0, 1, 1], [], []>} : vector<160x4xbf16>, vector<4x8xbf16>, vector<160x8xf32> -> vector<160x8xf32>
    %54 = arith.addf %48, %53 : vector<160x8xf32>
    %c2_61 = arith.constant 2 : index
    %c2_62 = arith.constant 2 : index
    %c0_63 = arith.constant 0 : index
    %55 = vector.load %arg11[%c2_61, %c2_62, %c0_63] : memref<12x18x4xbf16, #tpu.memory_space<vmem>>, vector<10x16x4xbf16>
    %56 = vector.shape_cast %55 : vector<10x16x4xbf16> to vector<160x4xbf16>
    %c8_64 = arith.constant 8 : index
    %c0_65 = arith.constant 0 : index
    %c0_66 = arith.constant 0 : index
    %57 = vector.load %arg4[%c8_64, %c0_65, %c0_66] : memref<9x4x8xbf16, #tpu.memory_space<vmem>>, vector<1x4x8xbf16>
    %58 = vector.shape_cast %57 : vector<1x4x8xbf16> to vector<4x8xbf16>
    %cst_67 = arith.constant dense<0.000000e+00> : vector<160x8xf32>
    %59 = tpu.matmul %56, %58, %cst_67 {dimension_numbers = #tpu.dot_dimension_numbers<[1], [0], [0], [1], [0, 0, 1, 1], [], []>} : vector<160x4xbf16>, vector<4x8xbf16>, vector<160x8xf32> -> vector<160x8xf32>
    %60 = arith.addf %54, %59 : vector<160x8xf32>
    %c0_68 = arith.constant 0 : index
    %c0_69 = arith.constant 0 : index
    %61 = vector.load %arg5[%c0_68, %c0_69] : memref<1x8xf32, #tpu.memory_space<vmem>>, vector<1x8xf32>
    %62 = vector.broadcast %61 : vector<1x8xf32> to vector<160x8xf32>
    %63 = arith.mulf %60, %62 : vector<160x8xf32>
    %c0_70 = arith.constant 0 : index
    %c0_71 = arith.constant 0 : index
    %64 = vector.load %arg6[%c0_70, %c0_71] : memref<1x8xf32, #tpu.memory_space<vmem>>, vector<1x8xf32>
    %65 = vector.broadcast %64 : vector<1x8xf32> to vector<160x8xf32>
    %66 = arith.addf %63, %65 : vector<160x8xf32>
    %cst_72 = arith.constant 0.000000e+00 : f32
    %67 = vector.broadcast %cst_72 : f32 to vector<160x8xf32>
    %68 = arith.maximumf %66, %67 : vector<160x8xf32>
    %69 = arith.truncf %68 : vector<160x8xf32> to vector<160x8xbf16>
    %70 = vector.shape_cast %69 : vector<160x8xbf16> to vector<10x16x8xbf16>
    %c0_73 = arith.constant 0 : index
    %c1_74 = arith.constant 1 : index
    %c0_75 = arith.constant 0 : index
    %71 = vector.load %arg12[%c0_73, %c1_74, %c0_75] : memref<10x18x8xbf16, #tpu.memory_space<vmem>>, vector<10x16x8xbf16>
    tpu.vector_store %arg12[%c0_73, %c1_74, %c0_75], %70 {strides = array<i32>} : memref<10x18x8xbf16, #tpu.memory_space<vmem>>, vector<10x16x8xbf16>,
    %cst_76 = arith.constant 0.000000e+00 : bf16
    %72 = vector.broadcast %cst_76 : bf16 to vector<10x1x8xbf16>
    %c0_77 = arith.constant 0 : index
    %c0_78 = arith.constant 0 : index
    %c0_79 = arith.constant 0 : index
    %73 = vector.load %arg12[%c0_77, %c0_78, %c0_79] : memref<10x18x8xbf16, #tpu.memory_space<vmem>>, vector<10x1x8xbf16>
    tpu.vector_store %arg12[%c0_77, %c0_78, %c0_79], %72 {strides = array<i32>} : memref<10x18x8xbf16, #tpu.memory_space<vmem>>, vector<10x1x8xbf16>,
    %c0_80 = arith.constant 0 : index
    %c17 = arith.constant 17 : index
    %c0_81 = arith.constant 0 : index
    %74 = vector.load %arg12[%c0_80, %c17, %c0_81] : memref<10x18x8xbf16, #tpu.memory_space<vmem>>, vector<10x1x8xbf16>
    tpu.vector_store %arg12[%c0_80, %c17, %c0_81], %72 {strides = array<i32>} : memref<10x18x8xbf16, #tpu.memory_space<vmem>>, vector<10x1x8xbf16>,
    %c0_i32 = arith.constant 0 : i32
    %75 = arith.cmpi eq, %arg1, %c0_i32 : i32
    %76 = arith.extui %75 : i1 to i32
    %c0_i32_82 = arith.constant 0 : i32
    %77 = arith.cmpi ne, %76, %c0_i32_82 : i32
    scf.if %77 {
      %cst_156 = arith.constant 0.000000e+00 : bf16
      %148 = vector.broadcast %cst_156 : bf16 to vector<1x18x8xbf16>
      %c0_157 = arith.constant 0 : index
      %c0_158 = arith.constant 0 : index
      %c0_159 = arith.constant 0 : index
      %149 = vector.load %arg12[%c0_157, %c0_158, %c0_159] : memref<10x18x8xbf16, #tpu.memory_space<vmem>>, vector<1x18x8xbf16>
      tpu.vector_store %arg12[%c0_157, %c0_158, %c0_159], %148 {strides = array<i32>} : memref<10x18x8xbf16, #tpu.memory_space<vmem>>, vector<1x18x8xbf16>,
    } else {
    }
    %c1_i32 = arith.constant 1 : i32
    %78 = arith.cmpi eq, %arg1, %c1_i32 : i32
    %79 = arith.extui %78 : i1 to i32
    %c0_i32_83 = arith.constant 0 : i32
    %80 = arith.cmpi ne, %79, %c0_i32_83 : i32
    scf.if %80 {
      %cst_156 = arith.constant 0.000000e+00 : bf16
      %148 = vector.broadcast %cst_156 : bf16 to vector<1x18x8xbf16>
      %c9 = arith.constant 9 : index
      %c0_157 = arith.constant 0 : index
      %c0_158 = arith.constant 0 : index
      %149 = vector.load %arg12[%c9, %c0_157, %c0_158] : memref<10x18x8xbf16, #tpu.memory_space<vmem>>, vector<1x18x8xbf16>
      tpu.vector_store %arg12[%c9, %c0_157, %c0_158], %148 {strides = array<i32>} : memref<10x18x8xbf16, #tpu.memory_space<vmem>>, vector<1x18x8xbf16>,
    } else {
    }
    %cst_84 = arith.constant 0.000000e+00 : f32
    %81 = vector.broadcast %cst_84 : f32 to vector<128x8xf32>
    %c0_85 = arith.constant 0 : index
    %c0_86 = arith.constant 0 : index
    %c0_87 = arith.constant 0 : index
    %82 = vector.load %arg12[%c0_85, %c0_86, %c0_87] : memref<10x18x8xbf16, #tpu.memory_space<vmem>>, vector<8x16x8xbf16>
    %83 = vector.shape_cast %82 : vector<8x16x8xbf16> to vector<128x8xbf16>
    %c0_88 = arith.constant 0 : index
    %c0_89 = arith.constant 0 : index
    %c0_90 = arith.constant 0 : index
    %84 = vector.load %arg7[%c0_88, %c0_89, %c0_90] : memref<9x8x8xbf16, #tpu.memory_space<vmem>>, vector<1x8x8xbf16>
    %85 = vector.shape_cast %84 : vector<1x8x8xbf16> to vector<8x8xbf16>
    %cst_91 = arith.constant dense<0.000000e+00> : vector<128x8xf32>
    %86 = tpu.matmul %83, %85, %cst_91 {dimension_numbers = #tpu.dot_dimension_numbers<[1], [0], [0], [1], [0, 0, 1, 1], [], []>} : vector<128x8xbf16>, vector<8x8xbf16>, vector<128x8xf32> -> vector<128x8xf32>
    %87 = arith.addf %81, %86 : vector<128x8xf32>
    %c0_92 = arith.constant 0 : index
    %c1_93 = arith.constant 1 : index
    %c0_94 = arith.constant 0 : index
    %88 = vector.load %arg12[%c0_92, %c1_93, %c0_94] : memref<10x18x8xbf16, #tpu.memory_space<vmem>>, vector<8x16x8xbf16>
    %89 = vector.shape_cast %88 : vector<8x16x8xbf16> to vector<128x8xbf16>
    %c1_95 = arith.constant 1 : index
    %c0_96 = arith.constant 0 : index
    %c0_97 = arith.constant 0 : index
    %90 = vector.load %arg7[%c1_95, %c0_96, %c0_97] : memref<9x8x8xbf16, #tpu.memory_space<vmem>>, vector<1x8x8xbf16>
    %91 = vector.shape_cast %90 : vector<1x8x8xbf16> to vector<8x8xbf16>
    %cst_98 = arith.constant dense<0.000000e+00> : vector<128x8xf32>
    %92 = tpu.matmul %89, %91, %cst_98 {dimension_numbers = #tpu.dot_dimension_numbers<[1], [0], [0], [1], [0, 0, 1, 1], [], []>} : vector<128x8xbf16>, vector<8x8xbf16>, vector<128x8xf32> -> vector<128x8xf32>
    %93 = arith.addf %87, %92 : vector<128x8xf32>
    %c0_99 = arith.constant 0 : index
    %c2_100 = arith.constant 2 : index
    %c0_101 = arith.constant 0 : index
    %94 = vector.load %arg12[%c0_99, %c2_100, %c0_101] : memref<10x18x8xbf16, #tpu.memory_space<vmem>>, vector<8x16x8xbf16>
    %95 = vector.shape_cast %94 : vector<8x16x8xbf16> to vector<128x8xbf16>
    %c2_102 = arith.constant 2 : index
    %c0_103 = arith.constant 0 : index
    %c0_104 = arith.constant 0 : index
    %96 = vector.load %arg7[%c2_102, %c0_103, %c0_104] : memref<9x8x8xbf16, #tpu.memory_space<vmem>>, vector<1x8x8xbf16>
    %97 = vector.shape_cast %96 : vector<1x8x8xbf16> to vector<8x8xbf16>
    %cst_105 = arith.constant dense<0.000000e+00> : vector<128x8xf32>
    %98 = tpu.matmul %95, %97, %cst_105 {dimension_numbers = #tpu.dot_dimension_numbers<[1], [0], [0], [1], [0, 0, 1, 1], [], []>} : vector<128x8xbf16>, vector<8x8xbf16>, vector<128x8xf32> -> vector<128x8xf32>
    %99 = arith.addf %93, %98 : vector<128x8xf32>
    %c1_106 = arith.constant 1 : index
    %c0_107 = arith.constant 0 : index
    %c0_108 = arith.constant 0 : index
    %100 = vector.load %arg12[%c1_106, %c0_107, %c0_108] : memref<10x18x8xbf16, #tpu.memory_space<vmem>>, vector<8x16x8xbf16>
    %101 = vector.shape_cast %100 : vector<8x16x8xbf16> to vector<128x8xbf16>
    %c3_109 = arith.constant 3 : index
    %c0_110 = arith.constant 0 : index
    %c0_111 = arith.constant 0 : index
    %102 = vector.load %arg7[%c3_109, %c0_110, %c0_111] : memref<9x8x8xbf16, #tpu.memory_space<vmem>>, vector<1x8x8xbf16>
    %103 = vector.shape_cast %102 : vector<1x8x8xbf16> to vector<8x8xbf16>
    %cst_112 = arith.constant dense<0.000000e+00> : vector<128x8xf32>
    %104 = tpu.matmul %101, %103, %cst_112 {dimension_numbers = #tpu.dot_dimension_numbers<[1], [0], [0], [1], [0, 0, 1, 1], [], []>} : vector<128x8xbf16>, vector<8x8xbf16>, vector<128x8xf32> -> vector<128x8xf32>
    %105 = arith.addf %99, %104 : vector<128x8xf32>
    %c1_113 = arith.constant 1 : index
    %c1_114 = arith.constant 1 : index
    %c0_115 = arith.constant 0 : index
    %106 = vector.load %arg12[%c1_113, %c1_114, %c0_115] : memref<10x18x8xbf16, #tpu.memory_space<vmem>>, vector<8x16x8xbf16>
    %107 = vector.shape_cast %106 : vector<8x16x8xbf16> to vector<128x8xbf16>
    %c4_116 = arith.constant 4 : index
    %c0_117 = arith.constant 0 : index
    %c0_118 = arith.constant 0 : index
    %108 = vector.load %arg7[%c4_116, %c0_117, %c0_118] : memref<9x8x8xbf16, #tpu.memory_space<vmem>>, vector<1x8x8xbf16>
    %109 = vector.shape_cast %108 : vector<1x8x8xbf16> to vector<8x8xbf16>
    %cst_119 = arith.constant dense<0.000000e+00> : vector<128x8xf32>
    %110 = tpu.matmul %107, %109, %cst_119 {dimension_numbers = #tpu.dot_dimension_numbers<[1], [0], [0], [1], [0, 0, 1, 1], [], []>} : vector<128x8xbf16>, vector<8x8xbf16>, vector<128x8xf32> -> vector<128x8xf32>
    %111 = arith.addf %105, %110 : vector<128x8xf32>
    %c1_120 = arith.constant 1 : index
    %c2_121 = arith.constant 2 : index
    %c0_122 = arith.constant 0 : index
    %112 = vector.load %arg12[%c1_120, %c2_121, %c0_122] : memref<10x18x8xbf16, #tpu.memory_space<vmem>>, vector<8x16x8xbf16>
    %113 = vector.shape_cast %112 : vector<8x16x8xbf16> to vector<128x8xbf16>
    %c5_123 = arith.constant 5 : index
    %c0_124 = arith.constant 0 : index
    %c0_125 = arith.constant 0 : index
    %114 = vector.load %arg7[%c5_123, %c0_124, %c0_125] : memref<9x8x8xbf16, #tpu.memory_space<vmem>>, vector<1x8x8xbf16>
    %115 = vector.shape_cast %114 : vector<1x8x8xbf16> to vector<8x8xbf16>
    %cst_126 = arith.constant dense<0.000000e+00> : vector<128x8xf32>
    %116 = tpu.matmul %113, %115, %cst_126 {dimension_numbers = #tpu.dot_dimension_numbers<[1], [0], [0], [1], [0, 0, 1, 1], [], []>} : vector<128x8xbf16>, vector<8x8xbf16>, vector<128x8xf32> -> vector<128x8xf32>
    %117 = arith.addf %111, %116 : vector<128x8xf32>
    %c2_127 = arith.constant 2 : index
    %c0_128 = arith.constant 0 : index
    %c0_129 = arith.constant 0 : index
    %118 = vector.load %arg12[%c2_127, %c0_128, %c0_129] : memref<10x18x8xbf16, #tpu.memory_space<vmem>>, vector<8x16x8xbf16>
    %119 = vector.shape_cast %118 : vector<8x16x8xbf16> to vector<128x8xbf16>
    %c6_130 = arith.constant 6 : index
    %c0_131 = arith.constant 0 : index
    %c0_132 = arith.constant 0 : index
    %120 = vector.load %arg7[%c6_130, %c0_131, %c0_132] : memref<9x8x8xbf16, #tpu.memory_space<vmem>>, vector<1x8x8xbf16>
    %121 = vector.shape_cast %120 : vector<1x8x8xbf16> to vector<8x8xbf16>
    %cst_133 = arith.constant dense<0.000000e+00> : vector<128x8xf32>
    %122 = tpu.matmul %119, %121, %cst_133 {dimension_numbers = #tpu.dot_dimension_numbers<[1], [0], [0], [1], [0, 0, 1, 1], [], []>} : vector<128x8xbf16>, vector<8x8xbf16>, vector<128x8xf32> -> vector<128x8xf32>
    %123 = arith.addf %117, %122 : vector<128x8xf32>
    %c2_134 = arith.constant 2 : index
    %c1_135 = arith.constant 1 : index
    %c0_136 = arith.constant 0 : index
    %124 = vector.load %arg12[%c2_134, %c1_135, %c0_136] : memref<10x18x8xbf16, #tpu.memory_space<vmem>>, vector<8x16x8xbf16>
    %125 = vector.shape_cast %124 : vector<8x16x8xbf16> to vector<128x8xbf16>
    %c7_137 = arith.constant 7 : index
    %c0_138 = arith.constant 0 : index
    %c0_139 = arith.constant 0 : index
    %126 = vector.load %arg7[%c7_137, %c0_138, %c0_139] : memref<9x8x8xbf16, #tpu.memory_space<vmem>>, vector<1x8x8xbf16>
    %127 = vector.shape_cast %126 : vector<1x8x8xbf16> to vector<8x8xbf16>
    %cst_140 = arith.constant dense<0.000000e+00> : vector<128x8xf32>
    %128 = tpu.matmul %125, %127, %cst_140 {dimension_numbers = #tpu.dot_dimension_numbers<[1], [0], [0], [1], [0, 0, 1, 1], [], []>} : vector<128x8xbf16>, vector<8x8xbf16>, vector<128x8xf32> -> vector<128x8xf32>
    %129 = arith.addf %123, %128 : vector<128x8xf32>
    %c2_141 = arith.constant 2 : index
    %c2_142 = arith.constant 2 : index
    %c0_143 = arith.constant 0 : index
    %130 = vector.load %arg12[%c2_141, %c2_142, %c0_143] : memref<10x18x8xbf16, #tpu.memory_space<vmem>>, vector<8x16x8xbf16>
    %131 = vector.shape_cast %130 : vector<8x16x8xbf16> to vector<128x8xbf16>
    %c8_144 = arith.constant 8 : index
    %c0_145 = arith.constant 0 : index
    %c0_146 = arith.constant 0 : index
    %132 = vector.load %arg7[%c8_144, %c0_145, %c0_146] : memref<9x8x8xbf16, #tpu.memory_space<vmem>>, vector<1x8x8xbf16>
    %133 = vector.shape_cast %132 : vector<1x8x8xbf16> to vector<8x8xbf16>
    %cst_147 = arith.constant dense<0.000000e+00> : vector<128x8xf32>
    %134 = tpu.matmul %131, %133, %cst_147 {dimension_numbers = #tpu.dot_dimension_numbers<[1], [0], [0], [1], [0, 0, 1, 1], [], []>} : vector<128x8xbf16>, vector<8x8xbf16>, vector<128x8xf32> -> vector<128x8xf32>
    %135 = arith.addf %129, %134 : vector<128x8xf32>
    %c0_148 = arith.constant 0 : index
    %c0_149 = arith.constant 0 : index
    %136 = vector.load %arg8[%c0_148, %c0_149] : memref<1x8xf32, #tpu.memory_space<vmem>>, vector<1x8xf32>
    %137 = vector.broadcast %136 : vector<1x8xf32> to vector<128x8xf32>
    %138 = arith.mulf %135, %137 : vector<128x8xf32>
    %c0_150 = arith.constant 0 : index
    %c0_151 = arith.constant 0 : index
    %139 = vector.load %arg9[%c0_150, %c0_151] : memref<1x8xf32, #tpu.memory_space<vmem>>, vector<1x8xf32>
    %140 = vector.broadcast %139 : vector<1x8xf32> to vector<128x8xf32>
    %141 = arith.addf %138, %140 : vector<128x8xf32>
    %cst_152 = arith.constant 0.000000e+00 : f32
    %142 = vector.broadcast %cst_152 : f32 to vector<128x8xf32>
    %143 = arith.maximumf %141, %142 : vector<128x8xf32>
    %144 = tpu.transpose %143, [1, 0] : vector<128x8xf32> -> vector<8x128xf32>
    %c0_153 = arith.constant 0 : index
    %c0_154 = arith.constant 0 : index
    %c0_155 = arith.constant 0 : index
    %145 = vector.load %arg10[%c0_153, %c0_154, %c0_155] : memref<1x8x128xf32, #tpu.memory_space<vmem>>, vector<1x8x128xf32>
    %146 = vector.shape_cast %145 : vector<1x8x128xf32> to vector<8x128xf32>
    %147 = vector.shape_cast %144 : vector<8x128xf32> to vector<1x8x128xf32>
    tpu.vector_store %arg10[%c0_153, %c0_154, %c0_155], %147 {strides = array<i32>} : memref<1x8x128xf32, #tpu.memory_space<vmem>>, vector<1x8x128xf32>,
    return
  }
  func.func @transform_0(%arg0: i32, %arg1: i32) -> (i32, i32, i32, i32) {
    %c0_i32 = arith.constant 0 : i32
    %c0_i32_0 = arith.constant 0 : i32
    %c0_i32_1 = arith.constant 0 : i32
    return %arg0, %arg1, %c0_i32, %c0_i32_0 : i32, i32, i32, i32
  }
  func.func @transform_1(%arg0: i32, %arg1: i32) -> (i32, i32, i32, i32) {
    %c1_i32 = arith.constant 1 : i32
    %0 = arith.addi %arg1, %c1_i32 : i32
    %c2_i32 = arith.constant 2 : i32
    %1 = arith.muli %0, %c2_i32 : i32
    %c0_i32 = arith.constant 0 : i32
    %c0_i32_0 = arith.constant 0 : i32
    %c0_i32_1 = arith.constant 0 : i32
    return %arg0, %1, %c0_i32, %c0_i32_0 : i32, i32, i32, i32
  }
  func.func @transform_2(%arg0: i32, %arg1: i32) -> (i32, i32, i32) {
    %c0_i32 = arith.constant 0 : i32
    %c0_i32_0 = arith.constant 0 : i32
    %c0_i32_1 = arith.constant 0 : i32
    %c0_i32_2 = arith.constant 0 : i32
    return %c0_i32, %c0_i32_0, %c0_i32_1 : i32, i32, i32
  }
  func.func @transform_3(%arg0: i32, %arg1: i32) -> (i32, i32) {
    %c0_i32 = arith.constant 0 : i32
    %c0_i32_0 = arith.constant 0 : i32
    %c0_i32_1 = arith.constant 0 : i32
    return %c0_i32, %c0_i32_0 : i32, i32
  }
  func.func @transform_4(%arg0: i32, %arg1: i32) -> (i32, i32) {
    %c0_i32 = arith.constant 0 : i32
    %c0_i32_0 = arith.constant 0 : i32
    %c0_i32_1 = arith.constant 0 : i32
    return %c0_i32, %c0_i32_0 : i32, i32
  }
  func.func @transform_5(%arg0: i32, %arg1: i32) -> (i32, i32, i32) {
    %c0_i32 = arith.constant 0 : i32
    %c0_i32_0 = arith.constant 0 : i32
    %c0_i32_1 = arith.constant 0 : i32
    %c0_i32_2 = arith.constant 0 : i32
    return %c0_i32, %c0_i32_0, %c0_i32_1 : i32, i32, i32
  }
  func.func @transform_6(%arg0: i32, %arg1: i32) -> (i32, i32) {
    %c0_i32 = arith.constant 0 : i32
    %c0_i32_0 = arith.constant 0 : i32
    %c0_i32_1 = arith.constant 0 : i32
    return %c0_i32, %c0_i32_0 : i32, i32
  }
  func.func @transform_7(%arg0: i32, %arg1: i32) -> (i32, i32) {
    %c0_i32 = arith.constant 0 : i32
    %c0_i32_0 = arith.constant 0 : i32
    %c0_i32_1 = arith.constant 0 : i32
    return %c0_i32, %c0_i32_0 : i32, i32
  }
  func.func @transform_8(%arg0: i32, %arg1: i32) -> (i32, i32, i32) {
    %c0_i32 = arith.constant 0 : i32
    %c0_i32_0 = arith.constant 0 : i32
    return %arg0, %c0_i32, %arg1 : i32, i32, i32
  }
}

</mosaic_0001>

<llo_original>
// kernel: _lambda_.1
$region0: #{_lambda_.1}
  #allocation0 [shape = 'u32[]', space=smem, size = 0x4, offset = 0x4, fixed_abs, tag = 'smem constant byte address 0x4 - core index']
  #allocation1 [shape = 'u32[144,128]{1,0:T(1,128)}', space=vmem, size = 0x12000, scoped, tag = 'internal scratch']
  #allocation2 [shape = 'bf16[12,18,4]{2,1,0:T(8,128)(2,1)}', space=vmem, size = 0x12000, scoped, tag = 'scratch operand']
  #allocation3 [shape = 'bf16[10,18,8]{2,1,0:T(8,128)(2,1)}', space=vmem, size = 0xf000, scoped, tag = 'scratch operand']
  %s0 = inlined_call_operand.vmem [shape: bf16[2,20,18,4], index: 0, kind: input, shape index: {}, may-alias: {0,1}]
  %s1 = inlined_call_operand.vmem [shape: bf16[2,20,18,4], index: 1, kind: input, shape index: {}, may-alias: {0,1}]
  %s2 = inlined_call_operand.vmem [shape: bf16[9,4,8], index: 2, kind: input, shape index: {}]
  %s3 = inlined_call_operand.vmem [shape: f32[1,8], index: 3, kind: input, shape index: {}]
  %s4 = inlined_call_operand.vmem [shape: f32[1,8], index: 4, kind: input, shape index: {}]
  %s5 = inlined_call_operand.vmem [shape: bf16[9,8,8], index: 5, kind: input, shape index: {}]
  %s6 = inlined_call_operand.vmem [shape: f32[1,8], index: 6, kind: input, shape index: {}]
  %s7 = inlined_call_operand.vmem [shape: f32[1,8], index: 7, kind: input, shape index: {}]
  %s8 = inlined_call_operand.vmem [shape: f32[2,8,256], index: 8, kind: output, shape index: {}]
  %s9 = sld [smem:[#allocation0]]
  $region73: #{_lambda_.1} parent=0
    _
  %s11 = ssub.s32 1, %s9
  %s12 = scalar_select 0, %s11, %s9
  loop: start=0, step=1, limit=6
  $region2: #{_lambda_.1} parent=0 // loop_pre_header
    _
  $region3: #{_lambda_.1} parent=0 // loop_header
    %s14 = sphi 0, %s18
    %p15 = scmp.ge.s32.totalorder %s14, 6
    %s21 = sphi 0, %s33
    %s22 = sphi 0, %s29
    %s23 = sphi 0, %s21
    %s24 = sphi 0, %s22
    %s25 = sphi 0, %s23
    %s26 = sphi 0, %s24
    %s38 = sphi 0, %s40
    %s41 = sphi 0, %s38
    %s42 = sphi 0, %s41
    %s58 = sphi 0, %s42
    %s70 = sphi 0, %s72
    %s73 = sphi 0, %s70
    %s74 = sphi 0, %s73
    %s90 = sphi 0, %s74
    %s94 = sphi 0, %s94
    %s96 = sphi 0, %s94
    %s97 = sphi 0, %s96
    %s111 = sphi 0, %s97
    %s115 = sphi 0, %s115
    %s117 = sphi 0, %s115
    %s118 = sphi 0, %s117
    %s132 = sphi 0, %s118
    %s136 = sphi 0, %s136
    %s138 = sphi 0, %s136
    %s139 = sphi 0, %s138
    %s153 = sphi 0, %s139
    %s157 = sphi 0, %s157
    %s159 = sphi 0, %s157
    %s160 = sphi 0, %s159
    %s174 = sphi 0, %s160
    %s178 = sphi 0, %s178
    %s180 = sphi 0, %s178
    %s181 = sphi 0, %s180
    %s195 = sphi 0, %s181
    %s199 = sphi 0, %s199
    %s201 = sphi 0, %s199
    %s202 = sphi 0, %s201
    %s216 = sphi 0, %s202
    %s224 = sphi 0, %s226
    %s227 = sphi 0, %s224
    %s228 = sphi 0, %s227
    %s244 = sphi 0, %s228
  $region4: #{_lambda_.1} parent=0 // loop_header_branch
    %17 = sbr.rel (%p15) target = $region8
  $region5: #{_lambda_.1} parent=0 // loop_body
    %s19 = ssub.s32 %s14, 1
    %s20 = ssub.s32 %s14, 2
    %s27 = sadd.s32 1, %s22
    %p28 = scmp.ge.s32.totalorder %s27, 2
    %s29 = scalar_select %p28, 0, %s27
    %s30 = sadd.s32 1, %s21
    %s31 = scalar_select %p28, %s30, %s21
    %p32 = scmp.ge.s32.totalorder %s31, 2
    %s33 = scalar_select %p32, 0, %s31
    %s34 = ssub.s32 %s21, %s33
    %s35 = ssub.s32 %s22, %s29
    %s36 = sor.u32 %s34, %s35
    %p37 = scmp.eq.s32.totalorder %s36, 0
    %s39 = sadd.s32 %s38, 1
    %s40 = scalar_select %p37, %s38, %s39
    %p43 = pneg %p37
    %p44 = scmp.eq.s32.totalorder %s14, 3
    %p45 = por %p43, %p44
    %p46 = scmp.ne.s32.totalorder %s38, %s41
    %p47 = scmp.eq.s32.totalorder %s14, 0
    %p48 = por %p46, %p47
    %p49 = scmp.ne.s32.totalorder %s38, %s41
    %p50 = scmp.eq.s32.totalorder %s19, 3
    %p51 = por %p49, %p50
    %p52 = scmp.ne.s32.totalorder %s41, %s42
    %p53 = scmp.eq.s32.totalorder %s19, 0
    %p54 = por %p52, %p53
    %p55 = scmp.ne.s32.totalorder %s41, %s42
    %p56 = scmp.eq.s32.totalorder %s20, 3
    %p57 = por %p55, %p56
    %p59 = scmp.ne.s32.totalorder %s42, %s58
    %p60 = scmp.eq.s32.totalorder %s20, 0
    %p61 = por %p59, %p60
    %s62 = sadd.s32 %s22, 1
    %s63 = smul.u32 %s62, 2
    %s64 = sadd.s32 %s29, 1
    %s65 = smul.u32 %s64, 2
    %s66 = ssub.s32 %s21, %s33
    %s67 = ssub.s32 %s63, %s65
    %s68 = sor.u32 %s66, %s67
    %p69 = scmp.eq.s32.totalorder %s68, 0
    %s71 = sadd.s32 %s70, 1
    %s72 = scalar_select %p69, %s70, %s71
    %p75 = pneg %p69
    %p76 = scmp.eq.s32.totalorder %s14, 3
    %p77 = por %p75, %p76
    %p78 = scmp.ne.s32.totalorder %s70, %s73
    %p79 = scmp.eq.s32.totalorder %s14, 0
    %p80 = por %p78, %p79
    %p81 = scmp.ne.s32.totalorder %s70, %s73
    %p82 = scmp.eq.s32.totalorder %s19, 3
    %p83 = por %p81, %p82
    %p84 = scmp.ne.s32.totalorder %s73, %s74
    %p85 = scmp.eq.s32.totalorder %s19, 0
    %p86 = por %p84, %p85
    %p87 = scmp.ne.s32.totalorder %s73, %s74
    %p88 = scmp.eq.s32.totalorder %s20, 3
    %p89 = por %p87, %p88
    %p91 = scmp.ne.s32.totalorder %s74, %s90
    %p92 = scmp.eq.s32.totalorder %s20, 0
    %p93 = por %p91, %p92
    %s95 = sadd.s32 %s94, 1
    %p98 = scmp.eq.s32.totalorder %s14, 3
    %p99 = scmp.ne.s32.totalorder %s94, %s96
    %p100 = scmp.eq.s32.totalorder %s14, 0
    %p101 = por %p99, %p100
    %p102 = scmp.ne.s32.totalorder %s94, %s96
    %p103 = scmp.eq.s32.totalorder %s19, 3
    %p104 = por %p102, %p103
    %p105 = scmp.ne.s32.totalorder %s96, %s97
    %p106 = scmp.eq.s32.totalorder %s19, 0
    %p107 = por %p105, %p106
    %p108 = scmp.ne.s32.totalorder %s96, %s97
    %p109 = scmp.eq.s32.totalorder %s20, 3
    %p110 = por %p108, %p109
    %p112 = scmp.ne.s32.totalorder %s97, %s111
    %p113 = scmp.eq.s32.totalorder %s20, 0
    %p114 = por %p112, %p113
    %s116 = sadd.s32 %s115, 1
    %p119 = scmp.eq.s32.totalorder %s14, 3
    %p120 = scmp.ne.s32.totalorder %s115, %s117
    %p121 = scmp.eq.s32.totalorder %s14, 0
    %p122 = por %p120, %p121
    %p123 = scmp.ne.s32.totalorder %s115, %s117
    %p124 = scmp.eq.s32.totalorder %s19, 3
    %p125 = por %p123, %p124
    %p126 = scmp.ne.s32.totalorder %s117, %s118
    %p127 = scmp.eq.s32.totalorder %s19, 0
    %p128 = por %p126, %p127
    %p129 = scmp.ne.s32.totalorder %s117, %s118
    %p130 = scmp.eq.s32.totalorder %s20, 3
    %p131 = por %p129, %p130
    %p133 = scmp.ne.s32.totalorder %s118, %s132
    %p134 = scmp.eq.s32.totalorder %s20, 0
    %p135 = por %p133, %p134
    %s137 = sadd.s32 %s136, 1
    %p140 = scmp.eq.s32.totalorder %s14, 3
    %p141 = scmp.ne.s32.totalorder %s136, %s138
    %p142 = scmp.eq.s32.totalorder %s14, 0
    %p143 = por %p141, %p142
    %p144 = scmp.ne.s32.totalorder %s136, %s138
    %p145 = scmp.eq.s32.totalorder %s19, 3
    %p146 = por %p144, %p145
    %p147 = scmp.ne.s32.totalorder %s138, %s139
    %p148 = scmp.eq.s32.totalorder %s19, 0
    %p149 = por %p147, %p148
    %p150 = scmp.ne.s32.totalorder %s138, %s139
    %p151 = scmp.eq.s32.totalorder %s20, 3
    %p152 = por %p150, %p151
    %p154 = scmp.ne.s32.totalorder %s139, %s153
    %p155 = scmp.eq.s32.totalorder %s20, 0
    %p156 = por %p154, %p155
    %s158 = sadd.s32 %s157, 1
    %p161 = scmp.eq.s32.totalorder %s14, 3
    %p162 = scmp.ne.s32.totalorder %s157, %s159
    %p163 = scmp.eq.s32.totalorder %s14, 0
    %p164 = por %p162, %p163
    %p165 = scmp.ne.s32.totalorder %s157, %s159
    %p166 = scmp.eq.s32.totalorder %s19, 3
    %p167 = por %p165, %p166
    %p168 = scmp.ne.s32.totalorder %s159, %s160
    %p169 = scmp.eq.s32.totalorder %s19, 0
    %p170 = por %p168, %p169
    %p171 = scmp.ne.s32.totalorder %s159, %s160
    %p172 = scmp.eq.s32.totalorder %s20, 3
    %p173 = por %p171, %p172
    %p175 = scmp.ne.s32.totalorder %s160, %s174
    %p176 = scmp.eq.s32.totalorder %s20, 0
    %p177 = por %p175, %p176
    %s179 = sadd.s32 %s178, 1
    %p182 = scmp.eq.s32.totalorder %s14, 3
    %p183 = scmp.ne.s32.totalorder %s178, %s180
    %p184 = scmp.eq.s32.totalorder %s14, 0
    %p185 = por %p183, %p184
    %p186 = scmp.ne.s32.totalorder %s178, %s180
    %p187 = scmp.eq.s32.totalorder %s19, 3
    %p188 = por %p186, %p187
    %p189 = scmp.ne.s32.totalorder %s180, %s181
    %p190 = scmp.eq.s32.totalorder %s19, 0
    %p191 = por %p189, %p190
    %p192 = scmp.ne.s32.totalorder %s180, %s181
    %p193 = scmp.eq.s32.totalorder %s20, 3
    %p194 = por %p192, %p193
    %p196 = scmp.ne.s32.totalorder %s181, %s195
    %p197 = scmp.eq.s32.totalorder %s20, 0
    %p198 = por %p196, %p197
    %s200 = sadd.s32 %s199, 1
    %p203 = scmp.eq.s32.totalorder %s14, 3
    %p204 = scmp.ne.s32.totalorder %s199, %s201
    %p205 = scmp.eq.s32.totalorder %s14, 0
    %p206 = por %p204, %p205
    %p207 = scmp.ne.s32.totalorder %s199, %s201
    %p208 = scmp.eq.s32.totalorder %s19, 3
    %p209 = por %p207, %p208
    %p210 = scmp.ne.s32.totalorder %s201, %s202
    %p211 = scmp.eq.s32.totalorder %s19, 0
    %p212 = por %p210, %p211
    %p213 = scmp.ne.s32.totalorder %s201, %s202
    %p214 = scmp.eq.s32.totalorder %s20, 3
    %p215 = por %p213, %p214
    %p217 = scmp.ne.s32.totalorder %s202, %s216
    %p218 = scmp.eq.s32.totalorder %s20, 0
    %p219 = por %p217, %p218
    %s220 = ssub.s32 %s21, %s33
    %s221 = ssub.s32 %s22, %s29
    %s222 = sor.u32 %s220, %s221
    %p223 = scmp.eq.s32.totalorder %s222, 0
    %s225 = sadd.s32 %s224, 1
    %s226 = scalar_select %p223, %s224, %s225
    %p229 = pneg %p223
    %p230 = scmp.eq.s32.totalorder %s14, 3
    %p231 = por %p229, %p230
    %p232 = scmp.ne.s32.totalorder %s224, %s227
    %p233 = scmp.eq.s32.totalorder %s14, 0
    %p234 = por %p232, %p233
    %p235 = scmp.ne.s32.totalorder %s224, %s227
    %p236 = scmp.eq.s32.totalorder %s19, 3
    %p237 = por %p235, %p236
    %p238 = scmp.ne.s32.totalorder %s227, %s228
    %p239 = scmp.eq.s32.totalorder %s19, 0
    %p240 = por %p238, %p239
    %p241 = scmp.ne.s32.totalorder %s227, %s228
    %p242 = scmp.eq.s32.totalorder %s20, 3
    %p243 = por %p241, %p242
    %p245 = scmp.ne.s32.totalorder %s228, %s244
    %p246 = scmp.eq.s32.totalorder %s20, 0
    %p247 = por %p245, %p246
    %p248 = scmp.le.s32.totalorder 1, %s14
    %p249 = scmp.lt.s32.totalorder %s14, 5
    %p250 = pnand %p248, %p249
    %p251 = pneg %p250
    // Predicated region
    $region9: #{_lambda_.1} parent=5 // pred_check
      _
    $region10: #{_lambda_.1} parent=5 // pred_check_branch
      %253 = sbr.rel (%p250) target = $region12
    $region11: #{_lambda_.1} parent=5 // pred_region
      %s254 = ssub.s32 %s14, 1
      // Predicated region
      $region13: #{_lambda_.1} parent=11 // pred_check
        %p255 = pneg %p107
      $region14: #{_lambda_.1} parent=11 // pred_check_branch
        %257 = sbr.rel (%p255) target = $region16
      $region15: #{_lambda_.1} parent=11 // pred_region
        _
      $region16: #{_lambda_.1} parent=11 // pred_fallthru
        _
      // Predicated region
      $region17: #{_lambda_.1} parent=11 // pred_check
        %p258 = pneg %p128
      $region18: #{_lambda_.1} parent=11 // pred_check_branch
        %260 = sbr.rel (%p258) target = $region20
      $region19: #{_lambda_.1} parent=11 // pred_region
        _
      $region20: #{_lambda_.1} parent=11 // pred_fallthru
        _
      // Predicated region
      $region21: #{_lambda_.1} parent=11 // pred_check
        %p261 = pneg %p149
      $region22: #{_lambda_.1} parent=11 // pred_check_branch
        %263 = sbr.rel (%p261) target = $region24
      $region23: #{_lambda_.1} parent=11 // pred_region
        _
      $region24: #{_lambda_.1} parent=11 // pred_fallthru
        _
      // Predicated region
      $region25: #{_lambda_.1} parent=11 // pred_check
        %p264 = pneg %p170
      $region26: #{_lambda_.1} parent=11 // pred_check_branch
        %266 = sbr.rel (%p264) target = $region28
      $region27: #{_lambda_.1} parent=11 // pred_region
        _
      $region28: #{_lambda_.1} parent=11 // pred_fallthru
        _
      // Predicated region
      $region29: #{_lambda_.1} parent=11 // pred_check
        %p267 = pneg %p191
      $region30: #{_lambda_.1} parent=11 // pred_check_branch
        %269 = sbr.rel (%p267) target = $region32
      $region31: #{_lambda_.1} parent=11 // pred_region
        _
      $region32: #{_lambda_.1} parent=11 // pred_fallthru
        _
      // Predicated region
      $region33: #{_lambda_.1} parent=11 // pred_check
        %p270 = pneg %p212
      $region34: #{_lambda_.1} parent=11 // pred_check_branch
        %272 = sbr.rel (%p270) target = $region36
      $region35: #{_lambda_.1} parent=11 // pred_region
        _
      $region36: #{_lambda_.1} parent=11 // pred_fallthru
        _
    $region12: #{_lambda_.1} parent=5 // pred_fallthru
      _
    %p273 = scmp.lt.s32.totalorder %s14, 4
    // Predicated region
    $region37: #{_lambda_.1} parent=5 // pred_check
      %p274 = pneg %p273
    $region38: #{_lambda_.1} parent=5 // pred_check_branch
      %276 = sbr.rel (%p274) target = $region40
    $region39: #{_lambda_.1} parent=5 // pred_region
      // Predicated region
      $region41: #{_lambda_.1} parent=39 // pred_check
        %p277 = pneg %p48
      $region42: #{_lambda_.1} parent=39 // pred_check_branch
        %279 = sbr.rel (%p277) target = $region44
      $region43: #{_lambda_.1} parent=39 // pred_region
        %s280 = smul.u32 8, %s22
        %s281 = ssub.s32 20, %s280
        %p282 = scmp.lt.s32.totalorder %s281, 8
        %s283 = scalar_select %p282, %s281, 8
        %s284 = smul.u32 64, %s283
        %s285 = smul.u32 %s284, 3
        %p286 = scmp.lt.s32.totalorder %s21, 1
        %s287 = scalar_select %p286, %s21, 1
        %p288 = scmp.lt.s32.totalorder %s280, 19
        %s289 = scalar_select %p288, %s280, 19
        %s290 = smul.addr %s289, 3
        %s291 = smul.addr %s287, 60
        %s292 = sadd.s32 %s290, %s291
        %s293 = smul.addr %s292, 4
        %s294 = scalar_lea.vmem %s0, %s293
        %s295 = smul.u32 8, %s22
        %s296 = ssub.s32 20, %s295
        %p297 = scmp.lt.s32.totalorder %s296, 8
        %s298 = scalar_select %p297, %s296, 8
        %s299 = smul.u32 64, %s298
        %s300 = smul.u32 %s299, 3
      $region44: #{_lambda_.1} parent=39 // pred_fallthru
        _
      // Predicated region
      $region45: #{_lambda_.1} parent=39 // pred_check
        %p301 = pneg %p80
      $region46: #{_lambda_.1} parent=39 // pred_check_branch
        %303 = sbr.rel (%p301) target = $region48
      $region47: #{_lambda_.1} parent=39 // pred_region
        %s304 = sadd.s32 %s22, 1
        %s305 = smul.u32 %s304, 2
        %s306 = smul.u32 4, %s305
        %p307 = scmp.lt.s32.totalorder %s21, 1
        %s308 = scalar_select %p307, %s21, 1
        %p309 = scmp.lt.s32.totalorder %s306, 19
        %s310 = scalar_select %p309, %s306, 19
        %s311 = smul.addr %s310, 3
        %s312 = smul.addr %s308, 60
        %s313 = sadd.s32 %s311, %s312
        %s314 = smul.addr %s313, 4
        %s315 = scalar_lea.vmem %s1, %s314
        %s316 = sadd.s32 %s22, 1
        %s317 = smul.u32 %s316, 2
        %s318 = smul.u32 4, %s317
      $region48: #{_lambda_.1} parent=39 // pred_fallthru
        _
    $region40: #{_lambda_.1} parent=5 // pred_fallthru
      _
    %p319 = scmp.le.s32.totalorder 1, %s14
    %p320 = scmp.lt.s32.totalorder %s14, 5
    %p321 = pnand %p319, %p320
    %p322 = pneg %p321
    // Predicated region
    $region49: #{_lambda_.1} parent=5 // pred_check
      _
    $region50: #{_lambda_.1} parent=5 // pred_check_branch
      %324 = sbr.rel (%p321) target = $region52
    $region51: #{_lambda_.1} parent=5 // pred_region
      %s325 = ssub.s32 %s14, 1
      %s326 = smul.u32 8, %s24
      %s327 = ssub.s32 20, %s326
      %p328 = scmp.lt.s32.totalorder %s327, 8
      %s329 = scalar_select %p328, %s327, 8
      %s330 = smul.u32 64, %s329
      %s331 = smul.u32 %s330, 3
      %p332 = scmp.lt.s32.totalorder %s23, 1
      %s333 = scalar_select %p332, %s23, 1
      %p334 = scmp.lt.s32.totalorder %s326, 19
      %s335 = scalar_select %p334, %s326, 19
      %s336 = smul.addr %s335, 3
      %s337 = smul.addr %s333, 60
      %s338 = sadd.s32 %s336, %s337
      %s339 = smul.addr %s338, 4
      %s340 = scalar_lea.vmem %s0, %s339
      %p341 = pneg %p54
      %p342 = pneg %p51
      %s343 = sadd.s32 %s24, 1
      %s344 = smul.u32 %s343, 2
      %s345 = smul.u32 4, %s344
      %p346 = scmp.lt.s32.totalorder %s23, 1
      %s347 = scalar_select %p346, %s23, 1
      %p348 = scmp.lt.s32.totalorder %s345, 19
      %s349 = scalar_select %p348, %s345, 19
      %s350 = smul.addr %s349, 3
      %s351 = smul.addr %s347, 60
      %s352 = sadd.s32 %s350, %s351
      %s353 = smul.addr %s352, 4
      %s354 = scalar_lea.vmem %s1, %s353
      %p355 = pneg %p86
      %p356 = pneg %p83
      %p357 = pneg %p107
      %p358 = pneg %p104
      %p359 = pneg %p128
      %p360 = pneg %p125
      %p361 = pneg %p149
      %p362 = pneg %p146
      %p363 = pneg %p170
      %p364 = pneg %p167
      %p365 = pneg %p191
      %p366 = pneg %p188
      %p367 = pneg %p212
      %p368 = pneg %p209
      %p369 = pneg %p240
      %p370 = pneg %p237
      %p371 = scmp.lt.s32.totalorder %s23, 1
      %s372 = scalar_select %p371, %s23, 1
      %p373 = scmp.lt.s32.totalorder %s24, 1
      %s374 = scalar_select %p373, %s24, 1
      %s375 = smul.addr %s372, 2
      %s376 = sadd.s32 %s374, %s375
      %s377 = smul.addr %s376, 8
      %s378 = scalar_lea.vmem %s8, %s377
      %s379 = smul.u32 8, %s24
      %s380 = ssub.s32 20, %s379
      %p381 = scmp.lt.s32.totalorder %s380, 8
      %s382 = scalar_select %p381, %s380, 8
      %s383 = smul.u32 64, %s382
      %s384 = smul.u32 %s383, 3
      %p385 = scmp.lt.s32.totalorder %s23, 1
      %s386 = scalar_select %p385, %s23, 1
      %p387 = scmp.lt.s32.totalorder %s379, 19
      %s388 = scalar_select %p387, %s379, 19
      %s389 = smul.addr %s388, 3
      %s390 = smul.addr %s386, 60
      %s391 = sadd.s32 %s389, %s390
      %s392 = smul.addr %s391, 4
      %s393 = scalar_lea.vmem %s0, %s392
      %s394 = smul.u32 8, %s24
      %s395 = ssub.s32 20, %s394
      %p396 = scmp.lt.s32.totalorder %s395, 8
      %s397 = scalar_select %p396, %s395, 8
      %s398 = smul.u32 64, %s397
      %s399 = smul.u32 %s398, 3
      %s400 = sadd.s32 %s24, 1
      %s401 = smul.u32 %s400, 2
      %s402 = smul.u32 4, %s401
      %p403 = scmp.lt.s32.totalorder %s23, 1
      %s404 = scalar_select %p403, %s23, 1
      %p405 = scmp.lt.s32.totalorder %s402, 19
      %s406 = scalar_select %p405, %s402, 19
      %s407 = smul.addr %s406, 3
      %s408 = smul.addr %s404, 60
      %s409 = sadd.s32 %s407, %s408
      %s410 = smul.addr %s409, 4
      %s411 = scalar_lea.vmem %s1, %s410
      %s412 = sadd.s32 %s24, 1
      %s413 = smul.u32 %s412, 2
      %s414 = smul.u32 4, %s413
      %p415 = scmp.lt.s32.totalorder %s23, 1
      %s416 = scalar_select %p415, %s23, 1
      %p417 = scmp.lt.s32.totalorder %s24, 1
      %s418 = scalar_select %p417, %s24, 1
      %s419 = smul.addr %s416, 2
      %s420 = sadd.s32 %s418, %s419
      %s421 = smul.addr %s420, 8
      %s422 = scalar_lea.vmem %s8, %s421
      %v424 = vld [vmem:[%s393] sm:$0xf]
      %v425 = vld [vmem:[%s393 + $0x4] sm:$0xf]
      %v426 = vld [vmem:[%s393 + $0x8] sm:$0x1]
      %v427 = vld [vmem:[%s393 + $0xc] sm:$0xf]
      %v428 = vld [vmem:[%s393 + $0x10] sm:$0xf]
      %v429 = vld [vmem:[%s393 + $0x14] sm:$0x1]
      %v430 = vld [vmem:[%s393 + $0x18] sm:$0xf]
      %v431 = vld [vmem:[%s393 + $0x1c] sm:$0xf]
      %v432 = vld [vmem:[%s393 + $0x20] sm:$0x1]
      %v433 = vld [vmem:[%s393 + $0x24] sm:$0xf]
      %v434 = vld [vmem:[%s393 + $0x28] sm:$0xf]
      %v435 = vld [vmem:[%s393 + $0x2c] sm:$0x1]
      %v436 = vld [vmem:[%s393 + $0x30] sm:$0xf]
      %v437 = vld [vmem:[%s393 + $0x34] sm:$0xf]
      %v438 = vld [vmem:[%s393 + $0x38] sm:$0x1]
      %v439 = vld [vmem:[%s393 + $0x3c] sm:$0xf]
      %v440 = vld [vmem:[%s393 + $0x40] sm:$0xf]
      %v441 = vld [vmem:[%s393 + $0x44] sm:$0x1]
      %v442 = vld [vmem:[%s393 + $0x48] sm:$0xf]
      %v443 = vld [vmem:[%s393 + $0x4c] sm:$0xf]
      %v444 = vld [vmem:[%s393 + $0x50] sm:$0x1]
      %v445 = vld [vmem:[%s393 + $0x54] sm:$0xf]
      %v446 = vld [vmem:[%s393 + $0x58] sm:$0xf]
      %v447 = vld [vmem:[%s393 + $0x5c] sm:$0x1]
      %vm448 = vcmask 27648
      %449 = vst.msk [vmem:[#allocation2] sm:$0xf] %vm448, %v424
      %450 = vst.msk [vmem:[#allocation2 + $0x4] sm:$0xf] %vm448, %v425
      %vm451 = vcmask 24576
      %452 = vst.msk [vmem:[#allocation2 + $0x8] sm:$0x1] %vm451, %v426
      %453 = vst.msk [vmem:[#allocation2 + $0xc] sm:$0xf] %vm448, %v427
      %454 = vst.msk [vmem:[#allocation2 + $0x10] sm:$0xf] %vm448, %v428
      %455 = vst.msk [vmem:[#allocation2 + $0x14] sm:$0x1] %vm451, %v429
      %456 = vst.msk [vmem:[#allocation2 + $0x18] sm:$0xf] %vm448, %v430
      %457 = vst.msk [vmem:[#allocation2 + $0x1c] sm:$0xf] %vm448, %v431
      %458 = vst.msk [vmem:[#allocation2 + $0x20] sm:$0x1] %vm451, %v432
      %459 = vst.msk [vmem:[#allocation2 + $0x24] sm:$0xf] %vm448, %v433
      %460 = vst.msk [vmem:[#allocation2 + $0x28] sm:$0xf] %vm448, %v434
      %461 = vst.msk [vmem:[#allocation2 + $0x2c] sm:$0x1] %vm451, %v435
      %462 = vst.msk [vmem:[#allocation2 + $0x30] sm:$0xf] %vm448, %v436
      %463 = vst.msk [vmem:[#allocation2 + $0x34] sm:$0xf] %vm448, %v437
      %464 = vst.msk [vmem:[#allocation2 + $0x38] sm:$0x1] %vm451, %v438
      %465 = vst.msk [vmem:[#allocation2 + $0x3c] sm:$0xf] %vm448, %v439
      %466 = vst.msk [vmem:[#allocation2 + $0x40] sm:$0xf] %vm448, %v440
      %467 = vst.msk [vmem:[#allocation2 + $0x44] sm:$0x1] %vm451, %v441
      %468 = vst.msk [vmem:[#allocation2 + $0x48] sm:$0xf] %vm448, %v442
      %469 = vst.msk [vmem:[#allocation2 + $0x4c] sm:$0xf] %vm448, %v443
      %470 = vst.msk [vmem:[#allocation2 + $0x50] sm:$0x1] %vm451, %v444
      %471 = vst.msk [vmem:[#allocation2 + $0x54] sm:$0xf] %vm448, %v445
      %472 = vst.msk [vmem:[#allocation2 + $0x58] sm:$0xf] %vm448, %v446
      %473 = vst.msk [vmem:[#allocation2 + $0x5c] sm:$0x1] %vm451, %v447
      %v474 = vld [vmem:[%s411] sm:$0xf]
      %v475 = vld [vmem:[%s411 + $0x4] sm:$0xf]
      %v476 = vld [vmem:[%s411 + $0x8] sm:$0x1]
      %v477 = vld [vmem:[%s411 + $0xc] sm:$0xf]
      %v478 = vld [vmem:[%s411 + $0x10] sm:$0xf]
      %v479 = vld [vmem:[%s411 + $0x14] sm:$0x1]
      %v480 = vld [vmem:[%s411 + $0x18] sm:$0xf]
      %v481 = vld [vmem:[%s411 + $0x1c] sm:$0xf]
      %v482 = vld [vmem:[%s411 + $0x20] sm:$0x1]
      %v483 = vld [vmem:[%s411 + $0x24] sm:$0xf]
      %v484 = vld [vmem:[%s411 + $0x28] sm:$0xf]
      %v485 = vld [vmem:[%s411 + $0x2c] sm:$0x1]
      %s486 = scalar_lea.vmem [#allocation2], 96
      %487 = vst.msk [vmem:[%s486] sm:$0xf] %vm448, %v474
      %488 = vst.msk [vmem:[%s486 + $0x4] sm:$0xf] %vm448, %v475
      %489 = vst.msk [vmem:[%s486 + $0x8] sm:$0x1] %vm451, %v476
      %490 = vst.msk [vmem:[%s486 + $0xc] sm:$0xf] %vm448, %v477
      %491 = vst.msk [vmem:[%s486 + $0x10] sm:$0xf] %vm448, %v478
      %492 = vst.msk [vmem:[%s486 + $0x14] sm:$0x1] %vm451, %v479
      %493 = vst.msk [vmem:[%s486 + $0x18] sm:$0xf] %vm448, %v480
      %494 = vst.msk [vmem:[%s486 + $0x1c] sm:$0xf] %vm448, %v481
      %495 = vst.msk [vmem:[%s486 + $0x20] sm:$0x1] %vm451, %v482
      %496 = vst.msk [vmem:[%s486 + $0x24] sm:$0xf] %vm448, %v483
      %497 = vst.msk [vmem:[%s486 + $0x28] sm:$0xf] %vm448, %v484
      %498 = vst.msk [vmem:[%s486 + $0x2c] sm:$0x1] %vm451, %v485
      %v499 = vld [vmem:[#allocation2] sm:$0xf]
      %v500 = vld [vmem:[#allocation2 + $0x4] sm:$0xf]
      %v501 = vld [vmem:[#allocation2 + $0xc] sm:$0xf]
      %v502 = vld [vmem:[#allocation2 + $0x10] sm:$0xf]
      %v503 = vld [vmem:[#allocation2 + $0x18] sm:$0xf]
      %v504 = vld [vmem:[#allocation2 + $0x1c] sm:$0xf]
      %v505 = vld [vmem:[#allocation2 + $0x24] sm:$0xf]
      %v506 = vld [vmem:[#allocation2 + $0x28] sm:$0xf]
      %v507 = vld [vmem:[#allocation2 + $0x30] sm:$0xf]
      %v508 = vld [vmem:[#allocation2 + $0x34] sm:$0xf]
      %v509 = vld [vmem:[#allocation2 + $0x3c] sm:$0xf]
      %v510 = vld [vmem:[#allocation2 + $0x40] sm:$0xf]
      %v511 = vld [vmem:[#allocation2 + $0x48] sm:$0xf]
      %v512 = vld [vmem:[#allocation2 + $0x4c] sm:$0xf]
      %v513 = vld [vmem:[#allocation2 + $0x54] sm:$0xf]
      %v514 = vld [vmem:[#allocation2 + $0x58] sm:$0xf]
      %v515 = vld [vmem:[#allocation2 + $0x60] sm:$0xf]
      %v516 = vld [vmem:[#allocation2 + $0x64] sm:$0xf]
      %v517 = vld [vmem:[#allocation2 + $0x6c] sm:$0xf]
      %v518 = vld [vmem:[#allocation2 + $0x70] sm:$0xf]
      %v519 = vld [vmem:[%s2] sm:$0x3]
      %v520 = vld [vmem:[#allocation2 + $0x8] sm:$0x1]
      %v521 = vld [vmem:[#allocation2 + $0x14] sm:$0x1]
      %v522 = vld [vmem:[#allocation2 + $0x20] sm:$0x1]
      %v523 = vld [vmem:[#allocation2 + $0x2c] sm:$0x1]
      %v524 = vld [vmem:[#allocation2 + $0x38] sm:$0x1]
      %v525 = vld [vmem:[#allocation2 + $0x44] sm:$0x1]
      %v526 = vld [vmem:[#allocation2 + $0x50] sm:$0x1]
      %v527 = vld [vmem:[#allocation2 + $0x5c] sm:$0x1]
      %v528 = vld [vmem:[#allocation2 + $0x68] sm:$0x1]
      %v529 = vld [vmem:[#allocation2 + $0x74] sm:$0x1]
      %vm530 = vsmask.f32 3328
      %vm531 = vsmask.f32 7440
      %vm532 = vmor %vm530, %vm531
      %v534 = vshrl.u32 %v499, 16
      %v536 = vrot.slane %v534, 4
      %v537 = vshll.u32 %v499, 16
      %v539 = vrot.slane %v537, 5
      %v540 = vor.u32 %v536, %v539
      %v541 = vrot.slane %v540, 4
      %v543 = vshll.u32 %v500, 16
      %v545 = vrot.slane %v543, 5
      %v546 = vsel %vm532, %v541, %v545
      %v547 = vshrl.u32 %v500, 16
      %v549 = vrot.slane %v547, 4
      %v550 = vor.u32 %v549, %v545
      %v551 = vrot.slane %v550, 4
      %v553 = vshll.u32 %v520, 16
      %v555 = vrot.slane %v553, 5
      %v556 = vsel %vm532, %v551, %v555
      %v558 = vshrl.u32 %v501, 16
      %v560 = vrot.slane %v558, 4
      %v561 = vshll.u32 %v501, 16
      %v563 = vrot.slane %v561, 5
      %v564 = vor.u32 %v560, %v563
      %v565 = vrot.slane %v564, 4
      %v567 = vshll.u32 %v502, 16
      %v569 = vrot.slane %v567, 5
      %v570 = vsel %vm532, %v565, %v569
      %v571 = vshrl.u32 %v502, 16
      %v573 = vrot.slane %v571, 4
      %v574 = vor.u32 %v573, %v569
      %v575 = vrot.slane %v574, 4
      %v577 = vshll.u32 %v521, 16
      %v579 = vrot.slane %v577, 5
      %v580 = vsel %vm532, %v575, %v579
      %v582 = vshrl.u32 %v503, 16
      %v584 = vrot.slane %v582, 4
      %v585 = vshll.u32 %v503, 16
      %v587 = vrot.slane %v585, 5
      %v588 = vor.u32 %v584, %v587
      %v589 = vrot.slane %v588, 4
      %v591 = vshll.u32 %v504, 16
      %v593 = vrot.slane %v591, 5
      %v594 = vsel %vm532, %v589, %v593
      %v595 = vshrl.u32 %v504, 16
      %v597 = vrot.slane %v595, 4
      %v598 = vor.u32 %v597, %v593
      %v599 = vrot.slane %v598, 4
      %v601 = vshll.u32 %v522, 16
      %v603 = vrot.slane %v601, 5
      %v604 = vsel %vm532, %v599, %v603
      %v606 = vshrl.u32 %v505, 16
      %v608 = vrot.slane %v606, 4
      %v609 = vshll.u32 %v505, 16
      %v611 = vrot.slane %v609, 5
      %v612 = vor.u32 %v608, %v611
      %v613 = vrot.slane %v612, 4
      %v615 = vshll.u32 %v506, 16
      %v617 = vrot.slane %v615, 5
      %v618 = vsel %vm532, %v613, %v617
      %v619 = vshrl.u32 %v506, 16
      %v621 = vrot.slane %v619, 4
      %v622 = vor.u32 %v621, %v617
      %v623 = vrot.slane %v622, 4
      %v625 = vshll.u32 %v523, 16
      %v627 = vrot.slane %v625, 5
      %v628 = vsel %vm532, %v623, %v627
      %v630 = vshrl.u32 %v507, 16
      %v632 = vrot.slane %v630, 4
      %v633 = vshll.u32 %v507, 16
      %v635 = vrot.slane %v633, 5
      %v636 = vor.u32 %v632, %v635
      %v637 = vrot.slane %v636, 4
      %v639 = vshll.u32 %v508, 16
      %v641 = vrot.slane %v639, 5
      %v642 = vsel %vm532, %v637, %v641
      %v643 = vshrl.u32 %v508, 16
      %v645 = vrot.slane %v643, 4
      %v646 = vor.u32 %v645, %v641
      %v647 = vrot.slane %v646, 4
      %v649 = vshll.u32 %v524, 16
      %v651 = vrot.slane %v649, 5
      %v652 = vsel %vm532, %v647, %v651
      %v654 = vshrl.u32 %v509, 16
      %v656 = vrot.slane %v654, 4
      %v657 = vshll.u32 %v509, 16
      %v659 = vrot.slane %v657, 5
      %v660 = vor.u32 %v656, %v659
      %v661 = vrot.slane %v660, 4
      %v663 = vshll.u32 %v510, 16
      %v665 = vrot.slane %v663, 5
      %v666 = vsel %vm532, %v661, %v665
      %v667 = vshrl.u32 %v510, 16
      %v669 = vrot.slane %v667, 4
      %v670 = vor.u32 %v669, %v665
      %v671 = vrot.slane %v670, 4
      %v673 = vshll.u32 %v525, 16
      %v675 = vrot.slane %v673, 5
      %v676 = vsel %vm532, %v671, %v675
      %v678 = vshrl.u32 %v511, 16
      %v680 = vrot.slane %v678, 4
      %v681 = vshll.u32 %v511, 16
      %v683 = vrot.slane %v681, 5
      %v684 = vor.u32 %v680, %v683
      %v685 = vrot.slane %v684, 4
      %v687 = vshll.u32 %v512, 16
      %v689 = vrot.slane %v687, 5
      %v690 = vsel %vm532, %v685, %v689
      %v691 = vshrl.u32 %v512, 16
      %v693 = vrot.slane %v691, 4
      %v694 = vor.u32 %v693, %v689
      %v695 = vrot.slane %v694, 4
      %v697 = vshll.u32 %v526, 16
      %v699 = vrot.slane %v697, 5
      %v700 = vsel %vm532, %v695, %v699
      %v702 = vshrl.u32 %v513, 16
      %v704 = vrot.slane %v702, 4
      %v705 = vshll.u32 %v513, 16
      %v707 = vrot.slane %v705, 5
      %v708 = vor.u32 %v704, %v707
      %v709 = vrot.slane %v708, 4
      %v711 = vshll.u32 %v514, 16
      %v713 = vrot.slane %v711, 5
      %v714 = vsel %vm532, %v709, %v713
      %v715 = vshrl.u32 %v514, 16
      %v717 = vrot.slane %v715, 4
      %v718 = vor.u32 %v717, %v713
      %v719 = vrot.slane %v718, 4
      %v721 = vshll.u32 %v527, 16
      %v723 = vrot.slane %v721, 5
      %v724 = vsel %vm532, %v719, %v723
      %v726 = vshrl.u32 %v515, 16
      %v728 = vrot.slane %v726, 4
      %v729 = vshll.u32 %v515, 16
      %v731 = vrot.slane %v729, 5
      %v732 = vor.u32 %v728, %v731
      %v733 = vrot.slane %v732, 4
      %v735 = vshll.u32 %v516, 16
      %v737 = vrot.slane %v735, 5
      %v738 = vsel %vm532, %v733, %v737
      %v739 = vshrl.u32 %v516, 16
      %v741 = vrot.slane %v739, 4
      %v742 = vor.u32 %v741, %v737
      %v743 = vrot.slane %v742, 4
      %v745 = vshll.u32 %v528, 16
      %v747 = vrot.slane %v745, 5
      %v748 = vsel %vm532, %v743, %v747
      %v750 = vshrl.u32 %v517, 16
      %v752 = vrot.slane %v750, 4
      %v753 = vshll.u32 %v517, 16
      %v755 = vrot.slane %v753, 5
      %v756 = vor.u32 %v752, %v755
      %v757 = vrot.slane %v756, 4
      %v759 = vshll.u32 %v518, 16
      %v761 = vrot.slane %v759, 5
      %v762 = vsel %vm532, %v757, %v761
      %v763 = vshrl.u32 %v518, 16
      %v765 = vrot.slane %v763, 4
      %v766 = vor.u32 %v765, %v761
      %v767 = vrot.slane %v766, 4
      %v769 = vshll.u32 %v529, 16
      %v771 = vrot.slane %v769, 5
      %v772 = vsel %vm532, %v767, %v771
      %s773 = scalar_lea.vmem %s2, 2
      %v774 = vld [vmem:[%s773] sm:$0x3]
      %v775 = vunpack.c.l.b16 %v546
      %v776 = vunpack.c.l.b16 %v556
      %v777 = vunpack.c.l.b16 %v570
      %v778 = vunpack.c.l.b16 %v580
      %v779 = vunpack.c.l.b16 %v594
      %v780 = vunpack.c.l.b16 %v604
      %v781 = vunpack.c.l.b16 %v618
      %v782 = vunpack.c.l.b16 %v628
      %v783 = vunpack.c.l.b16 %v642
      %v784 = vunpack.c.l.b16 %v652
      %v785 = vunpack.c.l.b16 %v666
      %v786 = vunpack.c.l.b16 %v676
      %v787 = vunpack.c.l.b16 %v690
      %v788 = vunpack.c.l.b16 %v700
      %v789 = vunpack.c.l.b16 %v714
      %v790 = vunpack.c.l.b16 %v724
      %v791 = vunpack.c.l.b16 %v738
      %v792 = vunpack.c.l.b16 %v748
      %v793 = vunpack.c.l.b16 %v762
      %v794 = vunpack.c.l.b16 %v772
      %v795 = vpack.c.b16 %v776, %v775
      %v796 = vpack.c.b16 %v778, %v777
      %v797 = vpack.c.b16 %v780, %v779
      %v798 = vpack.c.b16 %v782, %v781
      %v799 = vpack.c.b16 %v784, %v783
      %v800 = vpack.c.b16 %v786, %v785
      %v801 = vpack.c.b16 %v788, %v787
      %v802 = vpack.c.b16 %v790, %v789
      %v803 = vpack.c.b16 %v792, %v791
      %v804 = vpack.c.b16 %v794, %v793
      %vm805 = vcmask 31744
      %v807 = vsel %vm805, %v795, 0
      %v810 = vsel %vm805, %v796, 0
      %v813 = vsel %vm805, %v797, 0
      %v816 = vsel %vm805, %v798, 0
      %v819 = vsel %vm805, %v799, 0
      %v822 = vsel %vm805, %v800, 0
      %v825 = vsel %vm805, %v801, 0
      %v828 = vsel %vm805, %v802, 0
      %v831 = vsel %vm805, %v803, 0
      %v834 = vsel %vm805, %v804, 0
      %vm836 = vcmask 1041408
      %v838 = vsel %vm836, %v774, 0
      %840 = vmatprep.subr.bf16.mxu0 0
      %841 = vmatpush1.bf16.msra.mxu0 %v838
      %842 = vmatprep.subr.bf16.mxu0 0
      %843 = vmatpush1.bf16.msra.mxu0 0
      %844 = vmatprep.subr.bf16.mxu0 0
      %845 = vmatpush1.bf16.msra.mxu0 0
      %846 = vmatprep.subr.bf16.mxu0 0
      %847 = vmatpush1.bf16.msra.mxu0 0
      %848 = vmatprep.subr.bf16.mxu0 0
      %849 = vmatpush1.bf16.msra.mxu0 0
      %850 = vmatprep.subr.bf16.mxu0 0
      %851 = vmatpush1.bf16.msra.mxu0 0
      %852 = vmatprep.subr.bf16.mxu0 0
      %853 = vmatpush1.bf16.msra.mxu0 0
      %854 = vmatprep.subr.bf16.mxu0 0
      %855 = vmatpush1.bf16.msra.mxu0 0
      %856 = vmatprep.subr.bf16.mxu0 0
      %857 = vmatpush1.bf16.msra.mxu0 0
      %858 = vmatprep.subr.bf16.mxu0 0
      %859 = vmatpush1.bf16.msra.mxu0 0
      %860 = vmatprep.subr.bf16.mxu0 0
      %861 = vmatpush1.bf16.msra.mxu0 0
      %862 = vmatprep.subr.bf16.mxu0 0
      %863 = vmatpush1.bf16.msra.mxu0 0
      %864 = vmatprep.subr.bf16.mxu0 0
      %865 = vmatpush1.bf16.msra.mxu0 0
      %866 = vmatprep.subr.bf16.mxu0 0
      %867 = vmatpush1.bf16.msra.mxu0 0
      %868 = vmatprep.subr.bf16.mxu0 0
      %869 = vmatpush1.bf16.msra.mxu0 0
      %870 = vmatprep.subr.bf16.mxu0 0
      %871 = vmatpush1.bf16.msra.mxu0 0
      %872 = vmatprep.mubr.bf16.mxu0 0
      %873 = vmatmul.mubr.bf16.gmra.mrb[0].mxu0 %v807
      %v874 = vpop.f32.mrb[0].mxu0
      %v875 = vadd.f32 0.0, %v874
      %v876 = vpop.f32.mrb[0].mxu0
      %v877 = vpop.f32.mrb[0].mxu0
      %v878 = vadd.f32 0.0, %v877
      %v879 = vpop.f32.mrb[0].mxu0
      %880 = vmatprep.mubr.bf16.mxu0 0
      %881 = vmatmul.mubr.bf16.gmra.mrb[0].mxu0 %v810
      %v882 = vpop.f32.mrb[0].mxu0
      %v883 = vadd.f32 0.0, %v882
      %v884 = vpop.f32.mrb[0].mxu0
      %v885 = vpop.f32.mrb[0].mxu0
      %v886 = vadd.f32 0.0, %v885
      %v887 = vpop.f32.mrb[0].mxu0
      %888 = vmatprep.mubr.bf16.mxu0 0
      %889 = vmatmul.mubr.bf16.gmra.mrb[0].mxu0 %v813
      %v890 = vpop.f32.mrb[0].mxu0
      %v891 = vadd.f32 0.0, %v890
      %v892 = vpop.f32.mrb[0].mxu0
      %v893 = vpop.f32.mrb[0].mxu0
      %v894 = vadd.f32 0.0, %v893
      %v895 = vpop.f32.mrb[0].mxu0
      %896 = vmatprep.mubr.bf16.mxu0 0
      %897 = vmatmul.mubr.bf16.gmra.mrb[0].mxu0 %v816
      %v898 = vpop.f32.mrb[0].mxu0
      %v899 = vadd.f32 0.0, %v898
      %v900 = vpop.f32.mrb[0].mxu0
      %v901 = vpop.f32.mrb[0].mxu0
      %v902 = vadd.f32 0.0, %v901
      %v903 = vpop.f32.mrb[0].mxu0
      %904 = vmatprep.mubr.bf16.mxu0 0
      %905 = vmatmul.mubr.bf16.gmra.mrb[0].mxu0 %v819
      %v906 = vpop.f32.mrb[0].mxu0
      %v907 = vadd.f32 0.0, %v906
      %v908 = vpop.f32.mrb[0].mxu0
      %v909 = vpop.f32.mrb[0].mxu0
      %v910 = vadd.f32 0.0, %v909
      %v911 = vpop.f32.mrb[0].mxu0
      %912 = vmatprep.mubr.bf16.mxu0 0
      %913 = vmatmul.mubr.bf16.gmra.mrb[0].mxu0 %v822
      %v914 = vpop.f32.mrb[0].mxu0
      %v915 = vadd.f32 0.0, %v914
      %v916 = vpop.f32.mrb[0].mxu0
      %v917 = vpop.f32.mrb[0].mxu0
      %v918 = vadd.f32 0.0, %v917
      %v919 = vpop.f32.mrb[0].mxu0
      %920 = vmatprep.mubr.bf16.mxu0 0
      %921 = vmatmul.mubr.bf16.gmra.mrb[0].mxu0 %v825
      %v922 = vpop.f32.mrb[0].mxu0
      %v923 = vadd.f32 0.0, %v922
      %v924 = vpop.f32.mrb[0].mxu0
      %v925 = vpop.f32.mrb[0].mxu0
      %v926 = vadd.f32 0.0, %v925
      %v927 = vpop.f32.mrb[0].mxu0
      %928 = vmatprep.mubr.bf16.mxu0 0
      %929 = vmatmul.mubr.bf16.gmra.mrb[0].mxu0 %v828
      %v930 = vpop.f32.mrb[0].mxu0
      %v931 = vadd.f32 0.0, %v930
      %v932 = vpop.f32.mrb[0].mxu0
      %v933 = vpop.f32.mrb[0].mxu0
      %v934 = vadd.f32 0.0, %v933
      %v935 = vpop.f32.mrb[0].mxu0
      %936 = vmatprep.mubr.bf16.mxu0 0
      %937 = vmatmul.mubr.bf16.gmra.mrb[0].mxu0 %v831
      %v938 = vpop.f32.mrb[0].mxu0
      %v939 = vadd.f32 0.0, %v938
      %v940 = vpop.f32.mrb[0].mxu0
      %v941 = vpop.f32.mrb[0].mxu0
      %v942 = vadd.f32 0.0, %v941
      %v943 = vpop.f32.mrb[0].mxu0
      %944 = vmatprep.mubr.bf16.mxu0 0
      %945 = vmatmul.mubr.bf16.gmra.mrb[0].mxu0 %v834
      %v946 = vpop.f32.mrb[0].mxu0
      %v947 = vadd.f32 0.0, %v946
      %v948 = vpop.f32.mrb[0].mxu0
      %v949 = vpop.f32.mrb[0].mxu0
      %v950 = vadd.f32 0.0, %v949
      %v951 = vpop.f32.mrb[0].mxu0
      %952 = vdwg.mxu0
      %v973 = vunpack.c.l.b16 %v499
      %v974 = vunpack.c.l.b16 %v500
      %v975 = vunpack.c.l.b16 %v501
      %v976 = vunpack.c.l.b16 %v502
      %v977 = vunpack.c.l.b16 %v503
      %v978 = vunpack.c.l.b16 %v504
      %v979 = vunpack.c.l.b16 %v505
      %v980 = vunpack.c.l.b16 %v506
      %v981 = vunpack.c.l.b16 %v507
      %v982 = vunpack.c.l.b16 %v508
      %v983 = vunpack.c.l.b16 %v509
      %v984 = vunpack.c.l.b16 %v510
      %v985 = vunpack.c.l.b16 %v511
      %v986 = vunpack.c.l.b16 %v512
      %v987 = vunpack.c.l.b16 %v513
      %v988 = vunpack.c.l.b16 %v514
      %v989 = vunpack.c.l.b16 %v515
      %v990 = vunpack.c.l.b16 %v516
      %v991 = vunpack.c.l.b16 %v517
      %v992 = vunpack.c.l.b16 %v518
      %v993 = vpack.c.b16 %v974, %v973
      %v994 = vpack.c.b16 %v976, %v975
      %v995 = vpack.c.b16 %v978, %v977
      %v996 = vpack.c.b16 %v980, %v979
      %v997 = vpack.c.b16 %v982, %v981
      %v998 = vpack.c.b16 %v984, %v983
      %v999 = vpack.c.b16 %v986, %v985
      %v1000 = vpack.c.b16 %v988, %v987
      %v1001 = vpack.c.b16 %v990, %v989
      %v1002 = vpack.c.b16 %v992, %v991
      %v1004 = vsel %vm805, %v993, 0
      %v1007 = vsel %vm805, %v994, 0
      %v1010 = vsel %vm805, %v995, 0
      %v1013 = vsel %vm805, %v996, 0
      %v1016 = vsel %vm805, %v997, 0
      %v1019 = vsel %vm805, %v998, 0
      %v1022 = vsel %vm805, %v999, 0
      %v1025 = vsel %vm805, %v1000, 0
      %v1028 = vsel %vm805, %v1001, 0
      %v1031 = vsel %vm805, %v1002, 0
      %v1034 = vsel %vm836, %v519, 0
      %1036 = vmatprep.subr.bf16.mxu0 0
      %1037 = vmatpush1.bf16.msra.mxu0 %v1034
      %1038 = vmatprep.subr.bf16.mxu0 0
      %1039 = vmatpush1.bf16.msra.mxu0 0
      %1040 = vmatprep.subr.bf16.mxu0 0
      %1041 = vmatpush1.bf16.msra.mxu0 0
      %1042 = vmatprep.subr.bf16.mxu0 0
      %1043 = vmatpush1.bf16.msra.mxu0 0
      %1044 = vmatprep.subr.bf16.mxu0 0
      %1045 = vmatpush1.bf16.msra.mxu0 0
      %1046 = vmatprep.subr.bf16.mxu0 0
      %1047 = vmatpush1.bf16.msra.mxu0 0
      %1048 = vmatprep.subr.bf16.mxu0 0
      %1049 = vmatpush1.bf16.msra.mxu0 0
      %1050 = vmatprep.subr.bf16.mxu0 0
      %1051 = vmatpush1.bf16.msra.mxu0 0
      %1052 = vmatprep.subr.bf16.mxu0 0
      %1053 = vmatpush1.bf16.msra.mxu0 0
      %1054 = vmatprep.subr.bf16.mxu0 0
      %1055 = vmatpush1.bf16.msra.mxu0 0
      %1056 = vmatprep.subr.bf16.mxu0 0
      %1057 = vmatpush1.bf16.msra.mxu0 0
      %1058 = vmatprep.subr.bf16.mxu0 0
      %1059 = vmatpush1.bf16.msra.mxu0 0
      %1060 = vmatprep.subr.bf16.mxu0 0
      %1061 = vmatpush1.bf16.msra.mxu0 0
      %1062 = vmatprep.subr.bf16.mxu0 0
      %1063 = vmatpush1.bf16.msra.mxu0 0
      %1064 = vmatprep.subr.bf16.mxu0 0
      %1065 = vmatpush1.bf16.msra.mxu0 0
      %1066 = vmatprep.subr.bf16.mxu0 0
      %1067 = vmatpush1.bf16.msra.mxu0 0
      %1068 = vmatprep.mubr.bf16.mxu0 0
      %1069 = vmatmul.mubr.bf16.gmra.mrb[0].mxu0 %v1004
      %v1070 = vpop.f32.mrb[0].mxu0
      %v1071 = vadd.f32 %v875, %v1070
      %v1072 = vpop.f32.mrb[0].mxu0
      %v1073 = vpop.f32.mrb[0].mxu0
      %v1074 = vadd.f32 %v878, %v1073
      %v1075 = vpop.f32.mrb[0].mxu0
      %1076 = vmatprep.mubr.bf16.mxu0 0
      %1077 = vmatmul.mubr.bf16.gmra.mrb[0].mxu0 %v1007
      %v1078 = vpop.f32.mrb[0].mxu0
      %v1079 = vadd.f32 %v883, %v1078
      %v1080 = vpop.f32.mrb[0].mxu0
      %v1081 = vpop.f32.mrb[0].mxu0
      %v1082 = vadd.f32 %v886, %v1081
      %v1083 = vpop.f32.mrb[0].mxu0
      %1084 = vmatprep.mubr.bf16.mxu0 0
      %1085 = vmatmul.mubr.bf16.gmra.mrb[0].mxu0 %v1010
      %v1086 = vpop.f32.mrb[0].mxu0
      %v1087 = vadd.f32 %v891, %v1086
      %v1088 = vpop.f32.mrb[0].mxu0
      %v1089 = vpop.f32.mrb[0].mxu0
      %v1090 = vadd.f32 %v894, %v1089
      %v1091 = vpop.f32.mrb[0].mxu0
      %1092 = vmatprep.mubr.bf16.mxu0 0
      %1093 = vmatmul.mubr.bf16.gmra.mrb[0].mxu0 %v1013
      %v1094 = vpop.f32.mrb[0].mxu0
      %v1095 = vadd.f32 %v899, %v1094
      %v1096 = vpop.f32.mrb[0].mxu0
      %v1097 = vpop.f32.mrb[0].mxu0
      %v1098 = vadd.f32 %v902, %v1097
      %v1099 = vpop.f32.mrb[0].mxu0
      %1100 = vmatprep.mubr.bf16.mxu0 0
      %1101 = vmatmul.mubr.bf16.gmra.mrb[0].mxu0 %v1016
      %v1102 = vpop.f32.mrb[0].mxu0
      %v1103 = vadd.f32 %v907, %v1102
      %v1104 = vpop.f32.mrb[0].mxu0
      %v1105 = vpop.f32.mrb[0].mxu0
      %v1106 = vadd.f32 %v910, %v1105
      %v1107 = vpop.f32.mrb[0].mxu0
      %1108 = vmatprep.mubr.bf16.mxu0 0
      %1109 = vmatmul.mubr.bf16.gmra.mrb[0].mxu0 %v1019
      %v1110 = vpop.f32.mrb[0].mxu0
      %v1111 = vadd.f32 %v915, %v1110
      %v1112 = vpop.f32.mrb[0].mxu0
      %v1113 = vpop.f32.mrb[0].mxu0
      %v1114 = vadd.f32 %v918, %v1113
      %v1115 = vpop.f32.mrb[0].mxu0
      %1116 = vmatprep.mubr.bf16.mxu0 0
      %1117 = vmatmul.mubr.bf16.gmra.mrb[0].mxu0 %v1022
      %v1118 = vpop.f32.mrb[0].mxu0
      %v1119 = vadd.f32 %v923, %v1118
      %v1120 = vpop.f32.mrb[0].mxu0
      %v1121 = vpop.f32.mrb[0].mxu0
      %v1122 = vadd.f32 %v926, %v1121
      %v1123 = vpop.f32.mrb[0].mxu0
      %1124 = vmatprep.mubr.bf16.mxu0 0
      %1125 = vmatmul.mubr.bf16.gmra.mrb[0].mxu0 %v1025
      %v1126 = vpop.f32.mrb[0].mxu0
      %v1127 = vadd.f32 %v931, %v1126
      %v1128 = vpop.f32.mrb[0].mxu0
      %v1129 = vpop.f32.mrb[0].mxu0
      %v1130 = vadd.f32 %v934, %v1129
      %v1131 = vpop.f32.mrb[0].mxu0
      %1132 = vmatprep.mubr.bf16.mxu0 0
      %1133 = vmatmul.mubr.bf16.gmra.mrb[0].mxu0 %v1028
      %v1134 = vpop.f32.mrb[0].mxu0
      %v1135 = vadd.f32 %v939, %v1134
      %v1136 = vpop.f32.mrb[0].mxu0
      %v1137 = vpop.f32.mrb[0].mxu0
      %v1138 = vadd.f32 %v942, %v1137
      %v1139 = vpop.f32.mrb[0].mxu0
      %1140 = vmatprep.mubr.bf16.mxu0 0
      %1141 = vmatmul.mubr.bf16.gmra.mrb[0].mxu0 %v1031
      %v1142 = vpop.f32.mrb[0].mxu0
      %v1143 = vadd.f32 %v947, %v1142
      %v1144 = vpop.f32.mrb[0].mxu0
      %v1145 = vpop.f32.mrb[0].mxu0
      %v1146 = vadd.f32 %v950, %v1145
      %v1147 = vpop.f32.mrb[0].mxu0
      %1148 = vdwg.mxu0
      %v1149 = vld [vmem:[#allocation2] sm:$0xe]
      %v1150 = vld [vmem:[#allocation2 + $0xc] sm:$0xe]
      %v1151 = vld [vmem:[#allocation2 + $0x18] sm:$0xe]
      %v1152 = vld [vmem:[#allocation2 + $0x24] sm:$0xe]
      %v1153 = vld [vmem:[#allocation2 + $0x30] sm:$0xe]
      %v1154 = vld [vmem:[#allocation2 + $0x3c] sm:$0xe]
      %v1155 = vld [vmem:[#allocation2 + $0x48] sm:$0xe]
      %v1156 = vld [vmem:[#allocation2 + $0x54] sm:$0xe]
      %v1157 = vld [vmem:[#allocation2 + $0x60] sm:$0xe]
      %v1158 = vld [vmem:[#allocation2 + $0x6c] sm:$0xe]
      %vm1179 = vcmask 1042432
      %vm1180 = vcmask 1046532
      %vm1181 = vmor %vm1179, %vm1180
      %v1182 = vrot.slane %v1149, 5
      %v1183 = vrot.slane %v1182, 4
      %v1184 = vrot.slane %v500, 5
      %v1185 = vsel %vm1181, %v1183, %v1184
      %v1186 = vrot.slane %v1184, 4
      %v1187 = vrot.slane %v520, 5
      %v1188 = vsel %vm1181, %v1186, %v1187
      %v1189 = vrot.slane %v1150, 5
      %v1190 = vrot.slane %v1189, 4
      %v1191 = vrot.slane %v502, 5
      %v1192 = vsel %vm1181, %v1190, %v1191
      %v1193 = vrot.slane %v1191, 4
      %v1194 = vrot.slane %v521, 5
      %v1195 = vsel %vm1181, %v1193, %v1194
      %v1196 = vrot.slane %v1151, 5
      %v1197 = vrot.slane %v1196, 4
      %v1198 = vrot.slane %v504, 5
      %v1199 = vsel %vm1181, %v1197, %v1198
      %v1200 = vrot.slane %v1198, 4
      %v1201 = vrot.slane %v522, 5
      %v1202 = vsel %vm1181, %v1200, %v1201
      %v1203 = vrot.slane %v1152, 5
      %v1204 = vrot.slane %v1203, 4
      %v1205 = vrot.slane %v506, 5
      %v1206 = vsel %vm1181, %v1204, %v1205
      %v1207 = vrot.slane %v1205, 4
      %v1208 = vrot.slane %v523, 5
      %v1209 = vsel %vm1181, %v1207, %v1208
      %v1210 = vrot.slane %v1153, 5
      %v1211 = vrot.slane %v1210, 4
      %v1212 = vrot.slane %v508, 5
      %v1213 = vsel %vm1181, %v1211, %v1212
      %v1214 = vrot.slane %v1212, 4
      %v1215 = vrot.slane %v524, 5
      %v1216 = vsel %vm1181, %v1214, %v1215
      %v1217 = vrot.slane %v1154, 5
      %v1218 = vrot.slane %v1217, 4
      %v1219 = vrot.slane %v510, 5
      %v1220 = vsel %vm1181, %v1218, %v1219
      %v1221 = vrot.slane %v1219, 4
      %v1222 = vrot.slane %v525, 5
      %v1223 = vsel %vm1181, %v1221, %v1222
      %v1224 = vrot.slane %v1155, 5
      %v1225 = vrot.slane %v1224, 4
      %v1226 = vrot.slane %v512, 5
      %v1227 = vsel %vm1181, %v1225, %v1226
      %v1228 = vrot.slane %v1226, 4
      %v1229 = vrot.slane %v526, 5
      %v1230 = vsel %vm1181, %v1228, %v1229
      %v1231 = vrot.slane %v1156, 5
      %v1232 = vrot.slane %v1231, 4
      %v1233 = vrot.slane %v514, 5
      %v1234 = vsel %vm1181, %v1232, %v1233
      %v1235 = vrot.slane %v1233, 4
      %v1236 = vrot.slane %v527, 5
      %v1237 = vsel %vm1181, %v1235, %v1236
      %v1238 = vrot.slane %v1157, 5
      %v1239 = vrot.slane %v1238, 4
      %v1240 = vrot.slane %v516, 5
      %v1241 = vsel %vm1181, %v1239, %v1240
      %v1242 = vrot.slane %v1240, 4
      %v1243 = vrot.slane %v528, 5
      %v1244 = vsel %vm1181, %v1242, %v1243
      %v1245 = vrot.slane %v1158, 5
      %v1246 = vrot.slane %v1245, 4
      %v1247 = vrot.slane %v518, 5
      %v1248 = vsel %vm1181, %v1246, %v1247
      %v1249 = vrot.slane %v1247, 4
      %v1250 = vrot.slane %v529, 5
      %v1251 = vsel %vm1181, %v1249, %v1250
      %s1252 = scalar_lea.vmem %s2, 4
      %v1253 = vld [vmem:[%s1252] sm:$0x3]
      %v1254 = vunpack.c.l.b16 %v1185
      %v1255 = vunpack.c.l.b16 %v1188
      %v1256 = vunpack.c.l.b16 %v1192
      %v1257 = vunpack.c.l.b16 %v1195
      %v1258 = vunpack.c.l.b16 %v1199
      %v1259 = vunpack.c.l.b16 %v1202
      %v1260 = vunpack.c.l.b16 %v1206
      %v1261 = vunpack.c.l.b16 %v1209
      %v1262 = vunpack.c.l.b16 %v1213
      %v1263 = vunpack.c.l.b16 %v1216
      %v1264 = vunpack.c.l.b16 %v1220
      %v1265 = vunpack.c.l.b16 %v1223
      %v1266 = vunpack.c.l.b16 %v1227
      %v1267 = vunpack.c.l.b16 %v1230
      %v1268 = vunpack.c.l.b16 %v1234
      %v1269 = vunpack.c.l.b16 %v1237
      %v1270 = vunpack.c.l.b16 %v1241
      %v1271 = vunpack.c.l.b16 %v1244
      %v1272 = vunpack.c.l.b16 %v1248
      %v1273 = vunpack.c.l.b16 %v1251
      %v1274 = vpack.c.b16 %v1255, %v1254
      %v1275 = vpack.c.b16 %v1257, %v1256
      %v1276 = vpack.c.b16 %v1259, %v1258
      %v1277 = vpack.c.b16 %v1261, %v1260
      %v1278 = vpack.c.b16 %v1263, %v1262
      %v1279 = vpack.c.b16 %v1265, %v1264
      %v1280 = vpack.c.b16 %v1267, %v1266
      %v1281 = vpack.c.b16 %v1269, %v1268
      %v1282 = vpack.c.b16 %v1271, %v1270
      %v1283 = vpack.c.b16 %v1273, %v1272
      %v1285 = vsel %vm805, %v1274, 0
      %v1288 = vsel %vm805, %v1275, 0
      %v1291 = vsel %vm805, %v1276, 0
      %v1294 = vsel %vm805, %v1277, 0
      %v1297 = vsel %vm805, %v1278, 0
      %v1300 = vsel %vm805, %v1279, 0
      %v1303 = vsel %vm805, %v1280, 0
      %v1306 = vsel %vm805, %v1281, 0
      %v1309 = vsel %vm805, %v1282, 0
      %v1312 = vsel %vm805, %v1283, 0
      %v1315 = vsel %vm836, %v1253, 0
      %1317 = vmatprep.subr.bf16.mxu0 0
      %1318 = vmatpush1.bf16.msra.mxu0 %v1315
      %1319 = vmatprep.subr.bf16.mxu0 0
      %1320 = vmatpush1.bf16.msra.mxu0 0
      %1321 = vmatprep.subr.bf16.mxu0 0
      %1322 = vmatpush1.bf16.msra.mxu0 0
      %1323 = vmatprep.subr.bf16.mxu0 0
      %1324 = vmatpush1.bf16.msra.mxu0 0
      %1325 = vmatprep.subr.bf16.mxu0 0
      %1326 = vmatpush1.bf16.msra.mxu0 0
      %1327 = vmatprep.subr.bf16.mxu0 0
      %1328 = vmatpush1.bf16.msra.mxu0 0
      %1329 = vmatprep.subr.bf16.mxu0 0
      %1330 = vmatpush1.bf16.msra.mxu0 0
      %1331 = vmatprep.subr.bf16.mxu0 0
      %1332 = vmatpush1.bf16.msra.mxu0 0
      %1333 = vmatprep.subr.bf16.mxu0 0
      %1334 = vmatpush1.bf16.msra.mxu0 0
      %1335 = vmatprep.subr.bf16.mxu0 0
      %1336 = vmatpush1.bf16.msra.mxu0 0
      %1337 = vmatprep.subr.bf16.mxu0 0
      %1338 = vmatpush1.bf16.msra.mxu0 0
      %1339 = vmatprep.subr.bf16.mxu0 0
      %1340 = vmatpush1.bf16.msra.mxu0 0
      %1341 = vmatprep.subr.bf16.mxu0 0
      %1342 = vmatpush1.bf16.msra.mxu0 0
      %1343 = vmatprep.subr.bf16.mxu0 0
      %1344 = vmatpush1.bf16.msra.mxu0 0
      %1345 = vmatprep.subr.bf16.mxu0 0
      %1346 = vmatpush1.bf16.msra.mxu0 0
      %1347 = vmatprep.subr.bf16.mxu0 0
      %1348 = vmatpush1.bf16.msra.mxu0 0
      %1349 = vmatprep.mubr.bf16.mxu0 0
      %1350 = vmatmul.mubr.bf16.gmra.mrb[0].mxu0 %v1285
      %v1351 = vpop.f32.mrb[0].mxu0
      %v1352 = vadd.f32 0.0, %v1351
      %v1353 = vpop.f32.mrb[0].mxu0
      %v1354 = vpop.f32.mrb[0].mxu0
      %v1355 = vadd.f32 0.0, %v1354
      %v1356 = vpop.f32.mrb[0].mxu0
      %1357 = vmatprep.mubr.bf16.mxu0 0
      %1358 = vmatmul.mubr.bf16.gmra.mrb[0].mxu0 %v1288
      %v1359 = vpop.f32.mrb[0].mxu0
      %v1360 = vadd.f32 0.0, %v1359
      %v1361 = vpop.f32.mrb[0].mxu0
      %v1362 = vpop.f32.mrb[0].mxu0
      %v1363 = vadd.f32 0.0, %v1362
      %v1364 = vpop.f32.mrb[0].mxu0
      %1365 = vmatprep.mubr.bf16.mxu0 0
      %1366 = vmatmul.mubr.bf16.gmra.mrb[0].mxu0 %v1291
      %v1367 = vpop.f32.mrb[0].mxu0
      %v1368 = vadd.f32 0.0, %v1367
      %v1369 = vpop.f32.mrb[0].mxu0
      %v1370 = vpop.f32.mrb[0].mxu0
      %v1371 = vadd.f32 0.0, %v1370
      %v1372 = vpop.f32.mrb[0].mxu0
      %1373 = vmatprep.mubr.bf16.mxu0 0
      %1374 = vmatmul.mubr.bf16.gmra.mrb[0].mxu0 %v1294
      %v1375 = vpop.f32.mrb[0].mxu0
      %v1376 = vadd.f32 0.0, %v1375
      %v1377 = vpop.f32.mrb[0].mxu0
      %v1378 = vpop.f32.mrb[0].mxu0
      %v1379 = vadd.f32 0.0, %v1378
      %v1380 = vpop.f32.mrb[0].mxu0
      %1381 = vmatprep.mubr.bf16.mxu0 0
      %1382 = vmatmul.mubr.bf16.gmra.mrb[0].mxu0 %v1297
      %v1383 = vpop.f32.mrb[0].mxu0
      %v1384 = vadd.f32 0.0, %v1383
      %v1385 = vpop.f32.mrb[0].mxu0
      %v1386 = vpop.f32.mrb[0].mxu0
      %v1387 = vadd.f32 0.0, %v1386
      %v1388 = vpop.f32.mrb[0].mxu0
      %1389 = vmatprep.mubr.bf16.mxu0 0
      %1390 = vmatmul.mubr.bf16.gmra.mrb[0].mxu0 %v1300
      %v1391 = vpop.f32.mrb[0].mxu0
      %v1392 = vadd.f32 0.0, %v1391
      %v1393 = vpop.f32.mrb[0].mxu0
      %v1394 = vpop.f32.mrb[0].mxu0
      %v1395 = vadd.f32 0.0, %v1394
      %v1396 = vpop.f32.mrb[0].mxu0
      %1397 = vmatprep.mubr.bf16.mxu0 0
      %1398 = vmatmul.mubr.bf16.gmra.mrb[0].mxu0 %v1303
      %v1399 = vpop.f32.mrb[0].mxu0
      %v1400 = vadd.f32 0.0, %v1399
      %v1401 = vpop.f32.mrb[0].mxu0
      %v1402 = vpop.f32.mrb[0].mxu0
      %v1403 = vadd.f32 0.0, %v1402
      %v1404 = vpop.f32.mrb[0].mxu0
      %1405 = vmatprep.mubr.bf16.mxu0 0
      %1406 = vmatmul.mubr.bf16.gmra.mrb[0].mxu0 %v1306
      %v1407 = vpop.f32.mrb[0].mxu0
      %v1408 = vadd.f32 0.0, %v1407
      %v1409 = vpop.f32.mrb[0].mxu0
      %v1410 = vpop.f32.mrb[0].mxu0
      %v1411 = vadd.f32 0.0, %v1410
      %v1412 = vpop.f32.mrb[0].mxu0
      %1413 = vmatprep.mubr.bf16.mxu0 0
      %1414 = vmatmul.mubr.bf16.gmra.mrb[0].mxu0 %v1309
      %v1415 = vpop.f32.mrb[0].mxu0
      %v1416 = vadd.f32 0.0, %v1415
      %v1417 = vpop.f32.mrb[0].mxu0
      %v1418 = vpop.f32.mrb[0].mxu0
      %v1419 = vadd.f32 0.0, %v1418
      %v1420 = vpop.f32.mrb[0].mxu0
      %1421 = vmatprep.mubr.bf16.mxu0 0
      %1422 = vmatmul.mubr.bf16.gmra.mrb[0].mxu0 %v1312
      %v1423 = vpop.f32.mrb[0].mxu0
      %v1424 = vadd.f32 0.0, %v1423
      %v1425 = vpop.f32.mrb[0].mxu0
      %v1426 = vpop.f32.mrb[0].mxu0
      %v1427 = vadd.f32 0.0, %v1426
      %v1428 = vpop.f32.mrb[0].mxu0
      %1429 = vdwg.mxu0
      %v1430 = vadd.f32 %v1071, %v1352
      %v1431 = vadd.f32 %v1074, %v1355
      %v1432 = vadd.f32 %v1079, %v1360
      %v1433 = vadd.f32 %v1082, %v1363
      %v1434 = vadd.f32 %v1087, %v1368
      %v1435 = vadd.f32 %v1090, %v1371
      %v1436 = vadd.f32 %v1095, %v1376
      %v1437 = vadd.f32 %v1098, %v1379
      %v1438 = vadd.f32 %v1103, %v1384
      %v1439 = vadd.f32 %v1106, %v1387
      %v1440 = vadd.f32 %v1111, %v1392
      %v1441 = vadd.f32 %v1114, %v1395
      %v1442 = vadd.f32 %v1119, %v1400
      %v1443 = vadd.f32 %v1122, %v1403
      %v1444 = vadd.f32 %v1127, %v1408
      %v1445 = vadd.f32 %v1130, %v1411
      %v1446 = vadd.f32 %v1135, %v1416
      %v1447 = vadd.f32 %v1138, %v1419
      %v1448 = vadd.f32 %v1143, %v1424
      %v1449 = vadd.f32 %v1146, %v1427
      %s1450 = scalar_lea.vmem [#allocation2], 12
      %v1451 = vld [vmem:[%s1450] sm:$0xf]
      %v1452 = vld [vmem:[%s1450 + $0x4] sm:$0xf]
      %v1453 = vld [vmem:[%s1450 + $0xc] sm:$0xf]
      %v1454 = vld [vmem:[%s1450 + $0x10] sm:$0xf]
      %v1455 = vld [vmem:[%s1450 + $0x18] sm:$0xf]
      %v1456 = vld [vmem:[%s1450 + $0x1c] sm:$0xf]
      %v1457 = vld [vmem:[%s1450 + $0x24] sm:$0xf]
      %v1458 = vld [vmem:[%s1450 + $0x28] sm:$0xf]
      %v1459 = vld [vmem:[%s1450 + $0x30] sm:$0xf]
      %v1460 = vld [vmem:[%s1450 + $0x34] sm:$0xf]
      %v1461 = vld [vmem:[%s1450 + $0x3c] sm:$0xf]
      %v1462 = vld [vmem:[%s1450 + $0x40] sm:$0xf]
      %v1463 = vld [vmem:[%s1450 + $0x48] sm:$0xf]
      %v1464 = vld [vmem:[%s1450 + $0x4c] sm:$0xf]
      %v1465 = vld [vmem:[%s1450 + $0x54] sm:$0xf]
      %v1466 = vld [vmem:[%s1450 + $0x58] sm:$0xf]
      %v1467 = vld [vmem:[%s1450 + $0x60] sm:$0xf]
      %v1468 = vld [vmem:[%s1450 + $0x64] sm:$0xf]
      %v1469 = vld [vmem:[%s1450 + $0x6c] sm:$0xf]
      %v1470 = vld [vmem:[%s1450 + $0x70] sm:$0xf]
      %s1471 = scalar_lea.vmem %s2, 6
      %v1472 = vld [vmem:[%s1471] sm:$0x3]
      %v1493 = vunpack.c.l.b16 %v1451
      %v1494 = vunpack.c.l.b16 %v1452
      %v1495 = vunpack.c.l.b16 %v1453
      %v1496 = vunpack.c.l.b16 %v1454
      %v1497 = vunpack.c.l.b16 %v1455
      %v1498 = vunpack.c.l.b16 %v1456
      %v1499 = vunpack.c.l.b16 %v1457
      %v1500 = vunpack.c.l.b16 %v1458
      %v1501 = vunpack.c.l.b16 %v1459
      %v1502 = vunpack.c.l.b16 %v1460
      %v1503 = vunpack.c.l.b16 %v1461
      %v1504 = vunpack.c.l.b16 %v1462
      %v1505 = vunpack.c.l.b16 %v1463
      %v1506 = vunpack.c.l.b16 %v1464
      %v1507 = vunpack.c.l.b16 %v1465
      %v1508 = vunpack.c.l.b16 %v1466
      %v1509 = vunpack.c.l.b16 %v1467
      %v1510 = vunpack.c.l.b16 %v1468
      %v1511 = vunpack.c.l.b16 %v1469
      %v1512 = vunpack.c.l.b16 %v1470
      %v1513 = vpack.c.b16 %v1494, %v1493
      %v1514 = vpack.c.b16 %v1496, %v1495
      %v1515 = vpack.c.b16 %v1498, %v1497
      %v1516 = vpack.c.b16 %v1500, %v1499
      %v1517 = vpack.c.b16 %v1502, %v1501
      %v1518 = vpack.c.b16 %v1504, %v1503
      %v1519 = vpack.c.b16 %v1506, %v1505
      %v1520 = vpack.c.b16 %v1508, %v1507
      %v1521 = vpack.c.b16 %v1510, %v1509
      %v1522 = vpack.c.b16 %v1512, %v1511
      %v1524 = vsel %vm805, %v1513, 0
      %v1527 = vsel %vm805, %v1514, 0
      %v1530 = vsel %vm805, %v1515, 0
      %v1533 = vsel %vm805, %v1516, 0
      %v1536 = vsel %vm805, %v1517, 0
      %v1539 = vsel %vm805, %v1518, 0
      %v1542 = vsel %vm805, %v1519, 0
      %v1545 = vsel %vm805, %v1520, 0
      %v1548 = vsel %vm805, %v1521, 0
      %v1551 = vsel %vm805, %v1522, 0
      %v1554 = vsel %vm836, %v1472, 0
      %1556 = vmatprep.subr.bf16.mxu0 0
      %1557 = vmatpush1.bf16.msra.mxu0 %v1554
      %1558 = vmatprep.subr.bf16.mxu0 0
      %1559 = vmatpush1.bf16.msra.mxu0 0
      %1560 = vmatprep.subr.bf16.mxu0 0
      %1561 = vmatpush1.bf16.msra.mxu0 0
      %1562 = vmatprep.subr.bf16.mxu0 0
      %1563 = vmatpush1.bf16.msra.mxu0 0
      %1564 = vmatprep.subr.bf16.mxu0 0
      %1565 = vmatpush1.bf16.msra.mxu0 0
      %1566 = vmatprep.subr.bf16.mxu0 0
      %1567 = vmatpush1.bf16.msra.mxu0 0
      %1568 = vmatprep.subr.bf16.mxu0 0
      %1569 = vmatpush1.bf16.msra.mxu0 0
      %1570 = vmatprep.subr.bf16.mxu0 0
      %1571 = vmatpush1.bf16.msra.mxu0 0
      %1572 = vmatprep.subr.bf16.mxu0 0
      %1573 = vmatpush1.bf16.msra.mxu0 0
      %1574 = vmatprep.subr.bf16.mxu0 0
      %1575 = vmatpush1.bf16.msra.mxu0 0
      %1576 = vmatprep.subr.bf16.mxu0 0
      %1577 = vmatpush1.bf16.msra.mxu0 0
      %1578 = vmatprep.subr.bf16.mxu0 0
      %1579 = vmatpush1.bf16.msra.mxu0 0
      %1580 = vmatprep.subr.bf16.mxu0 0
      %1581 = vmatpush1.bf16.msra.mxu0 0
      %1582 = vmatprep.subr.bf16.mxu0 0
      %1583 = vmatpush1.bf16.msra.mxu0 0
      %1584 = vmatprep.subr.bf16.mxu0 0
      %1585 = vmatpush1.bf16.msra.mxu0 0
      %1586 = vmatprep.subr.bf16.mxu0 0
      %1587 = vmatpush1.bf16.msra.mxu0 0
      %1588 = vmatprep.mubr.bf16.mxu0 0
      %1589 = vmatmul.mubr.bf16.gmra.mrb[0].mxu0 %v1524
      %v1590 = vpop.f32.mrb[0].mxu0
      %v1591 = vadd.f32 0.0, %v1590
      %v1592 = vpop.f32.mrb[0].mxu0
      %v1593 = vpop.f32.mrb[0].mxu0
      %v1594 = vadd.f32 0.0, %v1593
      %v1595 = vpop.f32.mrb[0].mxu0
      %1596 = vmatprep.mubr.bf16.mxu0 0
      %1597 = vmatmul.mubr.bf16.gmra.mrb[0].mxu0 %v1527
      %v1598 = vpop.f32.mrb[0].mxu0
      %v1599 = vadd.f32 0.0, %v1598
      %v1600 = vpop.f32.mrb[0].mxu0
      %v1601 = vpop.f32.mrb[0].mxu0
      %v1602 = vadd.f32 0.0, %v1601
      %v1603 = vpop.f32.mrb[0].mxu0
      %1604 = vmatprep.mubr.bf16.mxu0 0
      %1605 = vmatmul.mubr.bf16.gmra.mrb[0].mxu0 %v1530
      %v1606 = vpop.f32.mrb[0].mxu0
      %v1607 = vadd.f32 0.0, %v1606
      %v1608 = vpop.f32.mrb[0].mxu0
      %v1609 = vpop.f32.mrb[0].mxu0
      %v1610 = vadd.f32 0.0, %v1609
      %v1611 = vpop.f32.mrb[0].mxu0
      %1612 = vmatprep.mubr.bf16.mxu0 0
      %1613 = vmatmul.mubr.bf16.gmra.mrb[0].mxu0 %v1533
      %v1614 = vpop.f32.mrb[0].mxu0
      %v1615 = vadd.f32 0.0, %v1614
      %v1616 = vpop.f32.mrb[0].mxu0
      %v1617 = vpop.f32.mrb[0].mxu0
      %v1618 = vadd.f32 0.0, %v1617
      %v1619 = vpop.f32.mrb[0].mxu0
      %1620 = vmatprep.mubr.bf16.mxu0 0
      %1621 = vmatmul.mubr.bf16.gmra.mrb[0].mxu0 %v1536
      %v1622 = vpop.f32.mrb[0].mxu0
      %v1623 = vadd.f32 0.0, %v1622
      %v1624 = vpop.f32.mrb[0].mxu0
      %v1625 = vpop.f32.mrb[0].mxu0
      %v1626 = vadd.f32 0.0, %v1625
      %v1627 = vpop.f32.mrb[0].mxu0
      %1628 = vmatprep.mubr.bf16.mxu0 0
      %1629 = vmatmul.mubr.bf16.gmra.mrb[0].mxu0 %v1539
      %v1630 = vpop.f32.mrb[0].mxu0
      %v1631 = vadd.f32 0.0, %v1630
      %v1632 = vpop.f32.mrb[0].mxu0
      %v1633 = vpop.f32.mrb[0].mxu0
      %v1634 = vadd.f32 0.0, %v1633
      %v1635 = vpop.f32.mrb[0].mxu0
      %1636 = vmatprep.mubr.bf16.mxu0 0
      %1637 = vmatmul.mubr.bf16.gmra.mrb[0].mxu0 %v1542
      %v1638 = vpop.f32.mrb[0].mxu0
      %v1639 = vadd.f32 0.0, %v1638
      %v1640 = vpop.f32.mrb[0].mxu0
      %v1641 = vpop.f32.mrb[0].mxu0
      %v1642 = vadd.f32 0.0, %v1641
      %v1643 = vpop.f32.mrb[0].mxu0
      %1644 = vmatprep.mubr.bf16.mxu0 0
      %1645 = vmatmul.mubr.bf16.gmra.mrb[0].mxu0 %v1545
      %v1646 = vpop.f32.mrb[0].mxu0
      %v1647 = vadd.f32 0.0, %v1646
      %v1648 = vpop.f32.mrb[0].mxu0
      %v1649 = vpop.f32.mrb[0].mxu0
      %v1650 = vadd.f32 0.0, %v1649
      %v1651 = vpop.f32.mrb[0].mxu0
      %1652 = vmatprep.mubr.bf16.mxu0 0
      %1653 = vmatmul.mubr.bf16.gmra.mrb[0].mxu0 %v1548
      %v1654 = vpop.f32.mrb[0].mxu0
      %v1655 = vadd.f32 0.0, %v1654
      %v1656 = vpop.f32.mrb[0].mxu0
      %v1657 = vpop.f32.mrb[0].mxu0
      %v1658 = vadd.f32 0.0, %v1657
      %v1659 = vpop.f32.mrb[0].mxu0
      %1660 = vmatprep.mubr.bf16.mxu0 0
      %1661 = vmatmul.mubr.bf16.gmra.mrb[0].mxu0 %v1551
      %v1662 = vpop.f32.mrb[0].mxu0
      %v1663 = vadd.f32 0.0, %v1662
      %v1664 = vpop.f32.mrb[0].mxu0
      %v1665 = vpop.f32.mrb[0].mxu0
      %v1666 = vadd.f32 0.0, %v1665
      %v1667 = vpop.f32.mrb[0].mxu0
      %1668 = vdwg.mxu0
      %v1669 = vadd.f32 %v1430, %v1591
      %v1670 = vadd.f32 %v1431, %v1594
      %v1671 = vadd.f32 %v1432, %v1599
      %v1672 = vadd.f32 %v1433, %v1602
      %v1673 = vadd.f32 %v1434, %v1607
      %v1674 = vadd.f32 %v1435, %v1610
      %v1675 = vadd.f32 %v1436, %v1615
      %v1676 = vadd.f32 %v1437, %v1618
      %v1677 = vadd.f32 %v1438, %v1623
      %v1678 = vadd.f32 %v1439, %v1626
      %v1679 = vadd.f32 %v1440, %v1631
      %v1680 = vadd.f32 %v1441, %v1634
      %v1681 = vadd.f32 %v1442, %v1639
      %v1682 = vadd.f32 %v1443, %v1642
      %v1683 = vadd.f32 %v1444, %v1647
      %v1684 = vadd.f32 %v1445, %v1650
      %v1685 = vadd.f32 %v1446, %v1655
      %v1686 = vadd.f32 %v1447, %v1658
      %v1687 = vadd.f32 %v1448, %v1663
      %v1688 = vadd.f32 %v1449, %v1666
      %v1689 = vld [vmem:[%s1450] sm:$0xf]
      %v1690 = vld [vmem:[%s1450 + $0x4] sm:$0xf]
      %v1691 = vld [vmem:[%s1450 + $0x8] sm:$0x1]
      %v1692 = vld [vmem:[%s1450 + $0xc] sm:$0xf]
      %v1693 = vld [vmem:[%s1450 + $0x10] sm:$0xf]
      %v1694 = vld [vmem:[%s1450 + $0x14] sm:$0x1]
      %v1695 = vld [vmem:[%s1450 + $0x18] sm:$0xf]
      %v1696 = vld [vmem:[%s1450 + $0x1c] sm:$0xf]
      %v1697 = vld [vmem:[%s1450 + $0x20] sm:$0x1]
      %v1698 = vld [vmem:[%s1450 + $0x24] sm:$0xf]
      %v1699 = vld [vmem:[%s1450 + $0x28] sm:$0xf]
      %v1700 = vld [vmem:[%s1450 + $0x2c] sm:$0x1]
      %v1701 = vld [vmem:[%s1450 + $0x30] sm:$0xf]
      %v1702 = vld [vmem:[%s1450 + $0x34] sm:$0xf]
      %v1703 = vld [vmem:[%s1450 + $0x38] sm:$0x1]
      %v1704 = vld [vmem:[%s1450 + $0x3c] sm:$0xf]
      %v1705 = vld [vmem:[%s1450 + $0x40] sm:$0xf]
      %v1706 = vld [vmem:[%s1450 + $0x44] sm:$0x1]
      %v1707 = vld [vmem:[%s1450 + $0x48] sm:$0xf]
      %v1708 = vld [vmem:[%s1450 + $0x4c] sm:$0xf]
      %v1709 = vld [vmem:[%s1450 + $0x50] sm:$0x1]
      %v1710 = vld [vmem:[%s1450 + $0x54] sm:$0xf]
      %v1711 = vld [vmem:[%s1450 + $0x58] sm:$0xf]
      %v1712 = vld [vmem:[%s1450 + $0x5c] sm:$0x1]
      %v1713 = vld [vmem:[%s1450 + $0x60] sm:$0xf]
      %v1714 = vld [vmem:[%s1450 + $0x64] sm:$0xf]
      %v1715 = vld [vmem:[%s1450 + $0x68] sm:$0x1]
      %v1716 = vld [vmem:[%s1450 + $0x6c] sm:$0xf]
      %v1717 = vld [vmem:[%s1450 + $0x70] sm:$0xf]
      %v1718 = vld [vmem:[%s1450 + $0x74] sm:$0x1]
      %v1720 = vshrl.u32 %v1689, 16
      %v1722 = vrot.slane %v1720, 4
      %v1723 = vshll.u32 %v1689, 16
      %v1725 = vrot.slane %v1723, 5
      %v1726 = vor.u32 %v1722, %v1725
      %v1727 = vrot.slane %v1726, 4
      %v1729 = vshll.u32 %v1690, 16
      %v1731 = vrot.slane %v1729, 5
      %v1732 = vsel %vm532, %v1727, %v1731
      %v1733 = vshrl.u32 %v1690, 16
      %v1735 = vrot.slane %v1733, 4
      %v1736 = vor.u32 %v1735, %v1731
      %v1737 = vrot.slane %v1736, 4
      %v1739 = vshll.u32 %v1691, 16
      %v1741 = vrot.slane %v1739, 5
      %v1742 = vsel %vm532, %v1737, %v1741
      %v1744 = vshrl.u32 %v1692, 16
      %v1746 = vrot.slane %v1744, 4
      %v1747 = vshll.u32 %v1692, 16
      %v1749 = vrot.slane %v1747, 5
      %v1750 = vor.u32 %v1746, %v1749
      %v1751 = vrot.slane %v1750, 4
      %v1753 = vshll.u32 %v1693, 16
      %v1755 = vrot.slane %v1753, 5
      %v1756 = vsel %vm532, %v1751, %v1755
      %v1757 = vshrl.u32 %v1693, 16
      %v1759 = vrot.slane %v1757, 4
      %v1760 = vor.u32 %v1759, %v1755
      %v1761 = vrot.slane %v1760, 4
      %v1763 = vshll.u32 %v1694, 16
      %v1765 = vrot.slane %v1763, 5
      %v1766 = vsel %vm532, %v1761, %v1765
      %v1768 = vshrl.u32 %v1695, 16
      %v1770 = vrot.slane %v1768, 4
      %v1771 = vshll.u32 %v1695, 16
      %v1773 = vrot.slane %v1771, 5
      %v1774 = vor.u32 %v1770, %v1773
      %v1775 = vrot.slane %v1774, 4
      %v1777 = vshll.u32 %v1696, 16
      %v1779 = vrot.slane %v1777, 5
      %v1780 = vsel %vm532, %v1775, %v1779
      %v1781 = vshrl.u32 %v1696, 16
      %v1783 = vrot.slane %v1781, 4
      %v1784 = vor.u32 %v1783, %v1779
      %v1785 = vrot.slane %v1784, 4
      %v1787 = vshll.u32 %v1697, 16
      %v1789 = vrot.slane %v1787, 5
      %v1790 = vsel %vm532, %v1785, %v1789
      %v1792 = vshrl.u32 %v1698, 16
      %v1794 = vrot.slane %v1792, 4
      %v1795 = vshll.u32 %v1698, 16
      %v1797 = vrot.slane %v1795, 5
      %v1798 = vor.u32 %v1794, %v1797
      %v1799 = vrot.slane %v1798, 4
      %v1801 = vshll.u32 %v1699, 16
      %v1803 = vrot.slane %v1801, 5
      %v1804 = vsel %vm532, %v1799, %v1803
      %v1805 = vshrl.u32 %v1699, 16
      %v1807 = vrot.slane %v1805, 4
      %v1808 = vor.u32 %v1807, %v1803
      %v1809 = vrot.slane %v1808, 4
      %v1811 = vshll.u32 %v1700, 16
      %v1813 = vrot.slane %v1811, 5
      %v1814 = vsel %vm532, %v1809, %v1813
      %v1816 = vshrl.u32 %v1701, 16
      %v1818 = vrot.slane %v1816, 4
      %v1819 = vshll.u32 %v1701, 16
      %v1821 = vrot.slane %v1819, 5
      %v1822 = vor.u32 %v1818, %v1821
      %v1823 = vrot.slane %v1822, 4
      %v1825 = vshll.u32 %v1702, 16
      %v1827 = vrot.slane %v1825, 5
      %v1828 = vsel %vm532, %v1823, %v1827
      %v1829 = vshrl.u32 %v1702, 16
      %v1831 = vrot.slane %v1829, 4
      %v1832 = vor.u32 %v1831, %v1827
      %v1833 = vrot.slane %v1832, 4
      %v1835 = vshll.u32 %v1703, 16
      %v1837 = vrot.slane %v1835, 5
      %v1838 = vsel %vm532, %v1833, %v1837
      %v1840 = vshrl.u32 %v1704, 16
      %v1842 = vrot.slane %v1840, 4
      %v1843 = vshll.u32 %v1704, 16
      %v1845 = vrot.slane %v1843, 5
      %v1846 = vor.u32 %v1842, %v1845
      %v1847 = vrot.slane %v1846, 4
      %v1849 = vshll.u32 %v1705, 16
      %v1851 = vrot.slane %v1849, 5
      %v1852 = vsel %vm532, %v1847, %v1851
      %v1853 = vshrl.u32 %v1705, 16
      %v1855 = vrot.slane %v1853, 4
      %v1856 = vor.u32 %v1855, %v1851
      %v1857 = vrot.slane %v1856, 4
      %v1859 = vshll.u32 %v1706, 16
      %v1861 = vrot.slane %v1859, 5
      %v1862 = vsel %vm532, %v1857, %v1861
      %v1864 = vshrl.u32 %v1707, 16
      %v1866 = vrot.slane %v1864, 4
      %v1867 = vshll.u32 %v1707, 16
      %v1869 = vrot.slane %v1867, 5
      %v1870 = vor.u32 %v1866, %v1869
      %v1871 = vrot.slane %v1870, 4
      %v1873 = vshll.u32 %v1708, 16
      %v1875 = vrot.slane %v1873, 5
      %v1876 = vsel %vm532, %v1871, %v1875
      %v1877 = vshrl.u32 %v1708, 16
      %v1879 = vrot.slane %v1877, 4
      %v1880 = vor.u32 %v1879, %v1875
      %v1881 = vrot.slane %v1880, 4
      %v1883 = vshll.u32 %v1709, 16
      %v1885 = vrot.slane %v1883, 5
      %v1886 = vsel %vm532, %v1881, %v1885
      %v1888 = vshrl.u32 %v1710, 16
      %v1890 = vrot.slane %v1888, 4
      %v1891 = vshll.u32 %v1710, 16
      %v1893 = vrot.slane %v1891, 5
      %v1894 = vor.u32 %v1890, %v1893
      %v1895 = vrot.slane %v1894, 4
      %v1897 = vshll.u32 %v1711, 16
      %v1899 = vrot.slane %v1897, 5
      %v1900 = vsel %vm532, %v1895, %v1899
      %v1901 = vshrl.u32 %v1711, 16
      %v1903 = vrot.slane %v1901, 4
      %v1904 = vor.u32 %v1903, %v1899
      %v1905 = vrot.slane %v1904, 4
      %v1907 = vshll.u32 %v1712, 16
      %v1909 = vrot.slane %v1907, 5
      %v1910 = vsel %vm532, %v1905, %v1909
      %v1912 = vshrl.u32 %v1713, 16
      %v1914 = vrot.slane %v1912, 4
      %v1915 = vshll.u32 %v1713, 16
      %v1917 = vrot.slane %v1915, 5
      %v1918 = vor.u32 %v1914, %v1917
      %v1919 = vrot.slane %v1918, 4
      %v1921 = vshll.u32 %v1714, 16
      %v1923 = vrot.slane %v1921, 5
      %v1924 = vsel %vm532, %v1919, %v1923
      %v1925 = vshrl.u32 %v1714, 16
      %v1927 = vrot.slane %v1925, 4
      %v1928 = vor.u32 %v1927, %v1923
      %v1929 = vrot.slane %v1928, 4
      %v1931 = vshll.u32 %v1715, 16
      %v1933 = vrot.slane %v1931, 5
      %v1934 = vsel %vm532, %v1929, %v1933
      %v1936 = vshrl.u32 %v1716, 16
      %v1938 = vrot.slane %v1936, 4
      %v1939 = vshll.u32 %v1716, 16
      %v1941 = vrot.slane %v1939, 5
      %v1942 = vor.u32 %v1938, %v1941
      %v1943 = vrot.slane %v1942, 4
      %v1945 = vshll.u32 %v1717, 16
      %v1947 = vrot.slane %v1945, 5
      %v1948 = vsel %vm532, %v1943, %v1947
      %v1949 = vshrl.u32 %v1717, 16
      %v1951 = vrot.slane %v1949, 4
      %v1952 = vor.u32 %v1951, %v1947
      %v1953 = vrot.slane %v1952, 4
      %v1955 = vshll.u32 %v1718, 16
      %v1957 = vrot.slane %v1955, 5
      %v1958 = vsel %vm532, %v1953, %v1957
      %s1959 = scalar_lea.vmem %s2, 8
      %v1960 = vld [vmem:[%s1959] sm:$0x3]
      %v1961 = vunpack.c.l.b16 %v1732
      %v1962 = vunpack.c.l.b16 %v1742
      %v1963 = vunpack.c.l.b16 %v1756
      %v1964 = vunpack.c.l.b16 %v1766
      %v1965 = vunpack.c.l.b16 %v1780
      %v1966 = vunpack.c.l.b16 %v1790
      %v1967 = vunpack.c.l.b16 %v1804
      %v1968 = vunpack.c.l.b16 %v1814
      %v1969 = vunpack.c.l.b16 %v1828
      %v1970 = vunpack.c.l.b16 %v1838
      %v1971 = vunpack.c.l.b16 %v1852
      %v1972 = vunpack.c.l.b16 %v1862
      %v1973 = vunpack.c.l.b16 %v1876
      %v1974 = vunpack.c.l.b16 %v1886
      %v1975 = vunpack.c.l.b16 %v1900
      %v1976 = vunpack.c.l.b16 %v1910
      %v1977 = vunpack.c.l.b16 %v1924
      %v1978 = vunpack.c.l.b16 %v1934
      %v1979 = vunpack.c.l.b16 %v1948
      %v1980 = vunpack.c.l.b16 %v1958
      %v1981 = vpack.c.b16 %v1962, %v1961
      %v1982 = vpack.c.b16 %v1964, %v1963
      %v1983 = vpack.c.b16 %v1966, %v1965
      %v1984 = vpack.c.b16 %v1968, %v1967
      %v1985 = vpack.c.b16 %v1970, %v1969
      %v1986 = vpack.c.b16 %v1972, %v1971
      %v1987 = vpack.c.b16 %v1974, %v1973
      %v1988 = vpack.c.b16 %v1976, %v1975
      %v1989 = vpack.c.b16 %v1978, %v1977
      %v1990 = vpack.c.b16 %v1980, %v1979
      %v1992 = vsel %vm805, %v1981, 0
      %v1995 = vsel %vm805, %v1982, 0
      %v1998 = vsel %vm805, %v1983, 0
      %v2001 = vsel %vm805, %v1984, 0
      %v2004 = vsel %vm805, %v1985, 0
      %v2007 = vsel %vm805, %v1986, 0
      %v2010 = vsel %vm805, %v1987, 0
      %v2013 = vsel %vm805, %v1988, 0
      %v2016 = vsel %vm805, %v1989, 0
      %v2019 = vsel %vm805, %v1990, 0
      %v2022 = vsel %vm836, %v1960, 0
      %2024 = vmatprep.subr.bf16.mxu0 0
      %2025 = vmatpush1.bf16.msra.mxu0 %v2022
      %2026 = vmatprep.subr.bf16.mxu0 0
      %2027 = vmatpush1.bf16.msra.mxu0 0
      %2028 = vmatprep.subr.bf16.mxu0 0
      %2029 = vmatpush1.bf16.msra.mxu0 0
      %2030 = vmatprep.subr.bf16.mxu0 0
      %2031 = vmatpush1.bf16.msra.mxu0 0
      %2032 = vmatprep.subr.bf16.mxu0 0
      %2033 = vmatpush1.bf16.msra.mxu0 0
      %2034 = vmatprep.subr.bf16.mxu0 0
      %2035 = vmatpush1.bf16.msra.mxu0 0
      %2036 = vmatprep.subr.bf16.mxu0 0
      %2037 = vmatpush1.bf16.msra.mxu0 0
      %2038 = vmatprep.subr.bf16.mxu0 0
      %2039 = vmatpush1.bf16.msra.mxu0 0
      %2040 = vmatprep.subr.bf16.mxu0 0
      %2041 = vmatpush1.bf16.msra.mxu0 0
      %2042 = vmatprep.subr.bf16.mxu0 0
      %2043 = vmatpush1.bf16.msra.mxu0 0
      %2044 = vmatprep.subr.bf16.mxu0 0
      %2045 = vmatpush1.bf16.msra.mxu0 0
      %2046 = vmatprep.subr.bf16.mxu0 0
      %2047 = vmatpush1.bf16.msra.mxu0 0
      %2048 = vmatprep.subr.bf16.mxu0 0
      %2049 = vmatpush1.bf16.msra.mxu0 0
      %2050 = vmatprep.subr.bf16.mxu0 0
      %2051 = vmatpush1.bf16.msra.mxu0 0
      %2052 = vmatprep.subr.bf16.mxu0 0
      %2053 = vmatpush1.bf16.msra.mxu0 0
      %2054 = vmatprep.subr.bf16.mxu0 0
      %2055 = vmatpush1.bf16.msra.mxu0 0
      %2056 = vmatprep.mubr.bf16.mxu0 0
      %2057 = vmatmul.mubr.bf16.gmra.mrb[0].mxu0 %v1992
      %v2058 = vpop.f32.mrb[0].mxu0
      %v2059 = vadd.f32 0.0, %v2058
      %v2060 = vpop.f32.mrb[0].mxu0
      %v2061 = vpop.f32.mrb[0].mxu0
      %v2062 = vadd.f32 0.0, %v2061
      %v2063 = vpop.f32.mrb[0].mxu0
      %2064 = vmatprep.mubr.bf16.mxu0 0
      %2065 = vmatmul.mubr.bf16.gmra.mrb[0].mxu0 %v1995
      %v2066 = vpop.f32.mrb[0].mxu0
      %v2067 = vadd.f32 0.0, %v2066
      %v2068 = vpop.f32.mrb[0].mxu0
      %v2069 = vpop.f32.mrb[0].mxu0
      %v2070 = vadd.f32 0.0, %v2069
      %v2071 = vpop.f32.mrb[0].mxu0
      %2072 = vmatprep.mubr.bf16.mxu0 0
      %2073 = vmatmul.mubr.bf16.gmra.mrb[0].mxu0 %v1998
      %v2074 = vpop.f32.mrb[0].mxu0
      %v2075 = vadd.f32 0.0, %v2074
      %v2076 = vpop.f32.mrb[0].mxu0
      %v2077 = vpop.f32.mrb[0].mxu0
      %v2078 = vadd.f32 0.0, %v2077
      %v2079 = vpop.f32.mrb[0].mxu0
      %2080 = vmatprep.mubr.bf16.mxu0 0
      %2081 = vmatmul.mubr.bf16.gmra.mrb[0].mxu0 %v2001
      %v2082 = vpop.f32.mrb[0].mxu0
      %v2083 = vadd.f32 0.0, %v2082
      %v2084 = vpop.f32.mrb[0].mxu0
      %v2085 = vpop.f32.mrb[0].mxu0
      %v2086 = vadd.f32 0.0, %v2085
      %v2087 = vpop.f32.mrb[0].mxu0
      %2088 = vmatprep.mubr.bf16.mxu0 0
      %2089 = vmatmul.mubr.bf16.gmra.mrb[0].mxu0 %v2004
      %v2090 = vpop.f32.mrb[0].mxu0
      %v2091 = vadd.f32 0.0, %v2090
      %v2092 = vpop.f32.mrb[0].mxu0
      %v2093 = vpop.f32.mrb[0].mxu0
      %v2094 = vadd.f32 0.0, %v2093
      %v2095 = vpop.f32.mrb[0].mxu0
      %2096 = vmatprep.mubr.bf16.mxu0 0
      %2097 = vmatmul.mubr.bf16.gmra.mrb[0].mxu0 %v2007
      %v2098 = vpop.f32.mrb[0].mxu0
      %v2099 = vadd.f32 0.0, %v2098
      %v2100 = vpop.f32.mrb[0].mxu0
      %v2101 = vpop.f32.mrb[0].mxu0
      %v2102 = vadd.f32 0.0, %v2101
      %v2103 = vpop.f32.mrb[0].mxu0
      %2104 = vmatprep.mubr.bf16.mxu0 0
      %2105 = vmatmul.mubr.bf16.gmra.mrb[0].mxu0 %v2010
      %v2106 = vpop.f32.mrb[0].mxu0
      %v2107 = vadd.f32 0.0, %v2106
      %v2108 = vpop.f32.mrb[0].mxu0
      %v2109 = vpop.f32.mrb[0].mxu0
      %v2110 = vadd.f32 0.0, %v2109
      %v2111 = vpop.f32.mrb[0].mxu0
      %2112 = vmatprep.mubr.bf16.mxu0 0
      %2113 = vmatmul.mubr.bf16.gmra.mrb[0].mxu0 %v2013
      %v2114 = vpop.f32.mrb[0].mxu0
      %v2115 = vadd.f32 0.0, %v2114
      %v2116 = vpop.f32.mrb[0].mxu0
      %v2117 = vpop.f32.mrb[0].mxu0
      %v2118 = vadd.f32 0.0, %v2117
      %v2119 = vpop.f32.mrb[0].mxu0
      %2120 = vmatprep.mubr.bf16.mxu0 0
      %2121 = vmatmul.mubr.bf16.gmra.mrb[0].mxu0 %v2016
      %v2122 = vpop.f32.mrb[0].mxu0
      %v2123 = vadd.f32 0.0, %v2122
      %v2124 = vpop.f32.mrb[0].mxu0
      %v2125 = vpop.f32.mrb[0].mxu0
      %v2126 = vadd.f32 0.0, %v2125
      %v2127 = vpop.f32.mrb[0].mxu0
      %2128 = vmatprep.mubr.bf16.mxu0 0
      %2129 = vmatmul.mubr.bf16.gmra.mrb[0].mxu0 %v2019
      %v2130 = vpop.f32.mrb[0].mxu0
      %v2131 = vadd.f32 0.0, %v2130
      %v2132 = vpop.f32.mrb[0].mxu0
      %v2133 = vpop.f32.mrb[0].mxu0
      %v2134 = vadd.f32 0.0, %v2133
      %v2135 = vpop.f32.mrb[0].mxu0
      %2136 = vdwg.mxu0
      %v2137 = vadd.f32 %v1669, %v2059
      %v2138 = vadd.f32 %v1670, %v2062
      %v2139 = vadd.f32 %v1671, %v2067
      %v2140 = vadd.f32 %v1672, %v2070
      %v2141 = vadd.f32 %v1673, %v2075
      %v2142 = vadd.f32 %v1674, %v2078
      %v2143 = vadd.f32 %v1675, %v2083
      %v2144 = vadd.f32 %v1676, %v2086
      %v2145 = vadd.f32 %v1677, %v2091
      %v2146 = vadd.f32 %v1678, %v2094
      %v2147 = vadd.f32 %v1679, %v2099
      %v2148 = vadd.f32 %v1680, %v2102
      %v2149 = vadd.f32 %v1681, %v2107
      %v2150 = vadd.f32 %v1682, %v2110
      %v2151 = vadd.f32 %v1683, %v2115
      %v2152 = vadd.f32 %v1684, %v2118
      %v2153 = vadd.f32 %v1685, %v2123
      %v2154 = vadd.f32 %v1686, %v2126
      %v2155 = vadd.f32 %v1687, %v2131
      %v2156 = vadd.f32 %v1688, %v2134
      %v2157 = vld [vmem:[%s1450] sm:$0xe]
      %v2158 = vld [vmem:[%s1450 + $0xc] sm:$0xe]
      %v2159 = vld [vmem:[%s1450 + $0x18] sm:$0xe]
      %v2160 = vld [vmem:[%s1450 + $0x24] sm:$0xe]
      %v2161 = vld [vmem:[%s1450 + $0x30] sm:$0xe]
      %v2162 = vld [vmem:[%s1450 + $0x3c] sm:$0xe]
      %v2163 = vld [vmem:[%s1450 + $0x48] sm:$0xe]
      %v2164 = vld [vmem:[%s1450 + $0x54] sm:$0xe]
      %v2165 = vld [vmem:[%s1450 + $0x60] sm:$0xe]
      %v2166 = vld [vmem:[%s1450 + $0x6c] sm:$0xe]
      %v2197 = vrot.slane %v2157, 5
      %v2198 = vrot.slane %v2197, 4
      %v2199 = vrot.slane %v1690, 5
      %v2200 = vsel %vm1181, %v2198, %v2199
      %v2201 = vrot.slane %v2199, 4
      %v2202 = vrot.slane %v1691, 5
      %v2203 = vsel %vm1181, %v2201, %v2202
      %v2204 = vrot.slane %v2158, 5
      %v2205 = vrot.slane %v2204, 4
      %v2206 = vrot.slane %v1693, 5
      %v2207 = vsel %vm1181, %v2205, %v2206
      %v2208 = vrot.slane %v2206, 4
      %v2209 = vrot.slane %v1694, 5
      %v2210 = vsel %vm1181, %v2208, %v2209
      %v2211 = vrot.slane %v2159, 5
      %v2212 = vrot.slane %v2211, 4
      %v2213 = vrot.slane %v1696, 5
      %v2214 = vsel %vm1181, %v2212, %v2213
      %v2215 = vrot.slane %v2213, 4
      %v2216 = vrot.slane %v1697, 5
      %v2217 = vsel %vm1181, %v2215, %v2216
      %v2218 = vrot.slane %v2160, 5
      %v2219 = vrot.slane %v2218, 4
      %v2220 = vrot.slane %v1699, 5
      %v2221 = vsel %vm1181, %v2219, %v2220
      %v2222 = vrot.slane %v2220, 4
      %v2223 = vrot.slane %v1700, 5
      %v2224 = vsel %vm1181, %v2222, %v2223
      %v2225 = vrot.slane %v2161, 5
      %v2226 = vrot.slane %v2225, 4
      %v2227 = vrot.slane %v1702, 5
      %v2228 = vsel %vm1181, %v2226, %v2227
      %v2229 = vrot.slane %v2227, 4
      %v2230 = vrot.slane %v1703, 5
      %v2231 = vsel %vm1181, %v2229, %v2230
      %v2232 = vrot.slane %v2162, 5
      %v2233 = vrot.slane %v2232, 4
      %v2234 = vrot.slane %v1705, 5
      %v2235 = vsel %vm1181, %v2233, %v2234
      %v2236 = vrot.slane %v2234, 4
      %v2237 = vrot.slane %v1706, 5
      %v2238 = vsel %vm1181, %v2236, %v2237
      %v2239 = vrot.slane %v2163, 5
      %v2240 = vrot.slane %v2239, 4
      %v2241 = vrot.slane %v1708, 5
      %v2242 = vsel %vm1181, %v2240, %v2241
      %v2243 = vrot.slane %v2241, 4
      %v2244 = vrot.slane %v1709, 5
      %v2245 = vsel %vm1181, %v2243, %v2244
      %v2246 = vrot.slane %v2164, 5
      %v2247 = vrot.slane %v2246, 4
      %v2248 = vrot.slane %v1711, 5
      %v2249 = vsel %vm1181, %v2247, %v2248
      %v2250 = vrot.slane %v2248, 4
      %v2251 = vrot.slane %v1712, 5
      %v2252 = vsel %vm1181, %v2250, %v2251
      %v2253 = vrot.slane %v2165, 5
      %v2254 = vrot.slane %v2253, 4
      %v2255 = vrot.slane %v1714, 5
      %v2256 = vsel %vm1181, %v2254, %v2255
      %v2257 = vrot.slane %v2255, 4
      %v2258 = vrot.slane %v1715, 5
      %v2259 = vsel %vm1181, %v2257, %v2258
      %v2260 = vrot.slane %v2166, 5
      %v2261 = vrot.slane %v2260, 4
      %v2262 = vrot.slane %v1717, 5
      %v2263 = vsel %vm1181, %v2261, %v2262
      %v2264 = vrot.slane %v2262, 4
      %v2265 = vrot.slane %v1718, 5
      %v2266 = vsel %vm1181, %v2264, %v2265
      %s2267 = scalar_lea.vmem %s2, 10
      %v2268 = vld [vmem:[%s2267] sm:$0x3]
      %v2269 = vunpack.c.l.b16 %v2200
      %v2270 = vunpack.c.l.b16 %v2203
      %v2271 = vunpack.c.l.b16 %v2207
      %v2272 = vunpack.c.l.b16 %v2210
      %v2273 = vunpack.c.l.b16 %v2214
      %v2274 = vunpack.c.l.b16 %v2217
      %v2275 = vunpack.c.l.b16 %v2221
      %v2276 = vunpack.c.l.b16 %v2224
      %v2277 = vunpack.c.l.b16 %v2228
      %v2278 = vunpack.c.l.b16 %v2231
      %v2279 = vunpack.c.l.b16 %v2235
      %v2280 = vunpack.c.l.b16 %v2238
      %v2281 = vunpack.c.l.b16 %v2242
      %v2282 = vunpack.c.l.b16 %v2245
      %v2283 = vunpack.c.l.b16 %v2249
      %v2284 = vunpack.c.l.b16 %v2252
      %v2285 = vunpack.c.l.b16 %v2256
      %v2286 = vunpack.c.l.b16 %v2259
      %v2287 = vunpack.c.l.b16 %v2263
      %v2288 = vunpack.c.l.b16 %v2266
      %v2289 = vpack.c.b16 %v2270, %v2269
      %v2290 = vpack.c.b16 %v2272, %v2271
      %v2291 = vpack.c.b16 %v2274, %v2273
      %v2292 = vpack.c.b16 %v2276, %v2275
      %v2293 = vpack.c.b16 %v2278, %v2277
      %v2294 = vpack.c.b16 %v2280, %v2279
      %v2295 = vpack.c.b16 %v2282, %v2281
      %v2296 = vpack.c.b16 %v2284, %v2283
      %v2297 = vpack.c.b16 %v2286, %v2285
      %v2298 = vpack.c.b16 %v2288, %v2287
      %v2300 = vsel %vm805, %v2289, 0
      %v2303 = vsel %vm805, %v2290, 0
      %v2306 = vsel %vm805, %v2291, 0
      %v2309 = vsel %vm805, %v2292, 0
      %v2312 = vsel %vm805, %v2293, 0
      %v2315 = vsel %vm805, %v2294, 0
      %v2318 = vsel %vm805, %v2295, 0
      %v2321 = vsel %vm805, %v2296, 0
      %v2324 = vsel %vm805, %v2297, 0
      %v2327 = vsel %vm805, %v2298, 0
      %v2330 = vsel %vm836, %v2268, 0
      %2332 = vmatprep.subr.bf16.mxu0 0
      %2333 = vmatpush1.bf16.msra.mxu0 %v2330
      %2334 = vmatprep.subr.bf16.mxu0 0
      %2335 = vmatpush1.bf16.msra.mxu0 0
      %2336 = vmatprep.subr.bf16.mxu0 0
      %2337 = vmatpush1.bf16.msra.mxu0 0
      %2338 = vmatprep.subr.bf16.mxu0 0
      %2339 = vmatpush1.bf16.msra.mxu0 0
      %2340 = vmatprep.subr.bf16.mxu0 0
      %2341 = vmatpush1.bf16.msra.mxu0 0
      %2342 = vmatprep.subr.bf16.mxu0 0
      %2343 = vmatpush1.bf16.msra.mxu0 0
      %2344 = vmatprep.subr.bf16.mxu0 0
      %2345 = vmatpush1.bf16.msra.mxu0 0
      %2346 = vmatprep.subr.bf16.mxu0 0
      %2347 = vmatpush1.bf16.msra.mxu0 0
      %2348 = vmatprep.subr.bf16.mxu0 0
      %2349 = vmatpush1.bf16.msra.mxu0 0
      %2350 = vmatprep.subr.bf16.mxu0 0
      %2351 = vmatpush1.bf16.msra.mxu0 0
      %2352 = vmatprep.subr.bf16.mxu0 0
      %2353 = vmatpush1.bf16.msra.mxu0 0
      %2354 = vmatprep.subr.bf16.mxu0 0
      %2355 = vmatpush1.bf16.msra.mxu0 0
      %2356 = vmatprep.subr.bf16.mxu0 0
      %2357 = vmatpush1.bf16.msra.mxu0 0
      %2358 = vmatprep.subr.bf16.mxu0 0
      %2359 = vmatpush1.bf16.msra.mxu0 0
      %2360 = vmatprep.subr.bf16.mxu0 0
      %2361 = vmatpush1.bf16.msra.mxu0 0
      %2362 = vmatprep.subr.bf16.mxu0 0
      %2363 = vmatpush1.bf16.msra.mxu0 0
      %2364 = vmatprep.mubr.bf16.mxu0 0
      %2365 = vmatmul.mubr.bf16.gmra.mrb[0].mxu0 %v2300
      %v2366 = vpop.f32.mrb[0].mxu0
      %v2367 = vadd.f32 0.0, %v2366
      %v2368 = vpop.f32.mrb[0].mxu0
      %v2369 = vpop.f32.mrb[0].mxu0
      %v2370 = vadd.f32 0.0, %v2369
      %v2371 = vpop.f32.mrb[0].mxu0
      %2372 = vmatprep.mubr.bf16.mxu0 0
      %2373 = vmatmul.mubr.bf16.gmra.mrb[0].mxu0 %v2303
      %v2374 = vpop.f32.mrb[0].mxu0
      %v2375 = vadd.f32 0.0, %v2374
      %v2376 = vpop.f32.mrb[0].mxu0
      %v2377 = vpop.f32.mrb[0].mxu0
      %v2378 = vadd.f32 0.0, %v2377
      %v2379 = vpop.f32.mrb[0].mxu0
      %2380 = vmatprep.mubr.bf16.mxu0 0
      %2381 = vmatmul.mubr.bf16.gmra.mrb[0].mxu0 %v2306
      %v2382 = vpop.f32.mrb[0].mxu0
      %v2383 = vadd.f32 0.0, %v2382
      %v2384 = vpop.f32.mrb[0].mxu0
      %v2385 = vpop.f32.mrb[0].mxu0
      %v2386 = vadd.f32 0.0, %v2385
      %v2387 = vpop.f32.mrb[0].mxu0
      %2388 = vmatprep.mubr.bf16.mxu0 0
      %2389 = vmatmul.mubr.bf16.gmra.mrb[0].mxu0 %v2309
      %v2390 = vpop.f32.mrb[0].mxu0
      %v2391 = vadd.f32 0.0, %v2390
      %v2392 = vpop.f32.mrb[0].mxu0
      %v2393 = vpop.f32.mrb[0].mxu0
      %v2394 = vadd.f32 0.0, %v2393
      %v2395 = vpop.f32.mrb[0].mxu0
      %2396 = vmatprep.mubr.bf16.mxu0 0
      %2397 = vmatmul.mubr.bf16.gmra.mrb[0].mxu0 %v2312
      %v2398 = vpop.f32.mrb[0].mxu0
      %v2399 = vadd.f32 0.0, %v2398
      %v2400 = vpop.f32.mrb[0].mxu0
      %v2401 = vpop.f32.mrb[0].mxu0
      %v2402 = vadd.f32 0.0, %v2401
      %v2403 = vpop.f32.mrb[0].mxu0
      %2404 = vmatprep.mubr.bf16.mxu0 0
      %2405 = vmatmul.mubr.bf16.gmra.mrb[0].mxu0 %v2315
      %v2406 = vpop.f32.mrb[0].mxu0
      %v2407 = vadd.f32 0.0, %v2406
      %v2408 = vpop.f32.mrb[0].mxu0
      %v2409 = vpop.f32.mrb[0].mxu0
      %v2410 = vadd.f32 0.0, %v2409
      %v2411 = vpop.f32.mrb[0].mxu0
      %2412 = vmatprep.mubr.bf16.mxu0 0
      %2413 = vmatmul.mubr.bf16.gmra.mrb[0].mxu0 %v2318
      %v2414 = vpop.f32.mrb[0].mxu0
      %v2415 = vadd.f32 0.0, %v2414
      %v2416 = vpop.f32.mrb[0].mxu0
      %v2417 = vpop.f32.mrb[0].mxu0
      %v2418 = vadd.f32 0.0, %v2417
      %v2419 = vpop.f32.mrb[0].mxu0
      %2420 = vmatprep.mubr.bf16.mxu0 0
      %2421 = vmatmul.mubr.bf16.gmra.mrb[0].mxu0 %v2321
      %v2422 = vpop.f32.mrb[0].mxu0
      %v2423 = vadd.f32 0.0, %v2422
      %v2424 = vpop.f32.mrb[0].mxu0
      %v2425 = vpop.f32.mrb[0].mxu0
      %v2426 = vadd.f32 0.0, %v2425
      %v2427 = vpop.f32.mrb[0].mxu0
      %2428 = vmatprep.mubr.bf16.mxu0 0
      %2429 = vmatmul.mubr.bf16.gmra.mrb[0].mxu0 %v2324
      %v2430 = vpop.f32.mrb[0].mxu0
      %v2431 = vadd.f32 0.0, %v2430
      %v2432 = vpop.f32.mrb[0].mxu0
      %v2433 = vpop.f32.mrb[0].mxu0
      %v2434 = vadd.f32 0.0, %v2433
      %v2435 = vpop.f32.mrb[0].mxu0
      %2436 = vmatprep.mubr.bf16.mxu0 0
      %2437 = vmatmul.mubr.bf16.gmra.mrb[0].mxu0 %v2327
      %v2438 = vpop.f32.mrb[0].mxu0
      %v2439 = vadd.f32 0.0, %v2438
      %v2440 = vpop.f32.mrb[0].mxu0
      %v2441 = vpop.f32.mrb[0].mxu0
      %v2442 = vadd.f32 0.0, %v2441
      %v2443 = vpop.f32.mrb[0].mxu0
      %2444 = vdwg.mxu0
      %v2445 = vadd.f32 %v2137, %v2367
      %v2446 = vadd.f32 %v2138, %v2370
      %v2447 = vadd.f32 %v2139, %v2375
      %v2448 = vadd.f32 %v2140, %v2378
      %v2449 = vadd.f32 %v2141, %v2383
      %v2450 = vadd.f32 %v2142, %v2386
      %v2451 = vadd.f32 %v2143, %v2391
      %v2452 = vadd.f32 %v2144, %v2394
      %v2453 = vadd.f32 %v2145, %v2399
      %v2454 = vadd.f32 %v2146, %v2402
      %v2455 = vadd.f32 %v2147, %v2407
      %v2456 = vadd.f32 %v2148, %v2410
      %v2457 = vadd.f32 %v2149, %v2415
      %v2458 = vadd.f32 %v2150, %v2418
      %v2459 = vadd.f32 %v2151, %v2423
      %v2460 = vadd.f32 %v2152, %v2426
      %v2461 = vadd.f32 %v2153, %v2431
      %v2462 = vadd.f32 %v2154, %v2434
      %v2463 = vadd.f32 %v2155, %v2439
      %v2464 = vadd.f32 %v2156, %v2442
      %s2465 = scalar_lea.vmem [#allocation2], 24
      %v2466 = vld [vmem:[%s2465] sm:$0xf]
      %v2467 = vld [vmem:[%s2465 + $0x4] sm:$0xf]
      %v2468 = vld [vmem:[%s2465 + $0xc] sm:$0xf]
      %v2469 = vld [vmem:[%s2465 + $0x10] sm:$0xf]
      %v2470 = vld [vmem:[%s2465 + $0x18] sm:$0xf]
      %v2471 = vld [vmem:[%s2465 + $0x1c] sm:$0xf]
      %v2472 = vld [vmem:[%s2465 + $0x24] sm:$0xf]
      %v2473 = vld [vmem:[%s2465 + $0x28] sm:$0xf]
      %v2474 = vld [vmem:[%s2465 + $0x30] sm:$0xf]
      %v2475 = vld [vmem:[%s2465 + $0x34] sm:$0xf]
      %v2476 = vld [vmem:[%s2465 + $0x3c] sm:$0xf]
      %v2477 = vld [vmem:[%s2465 + $0x40] sm:$0xf]
      %v2478 = vld [vmem:[%s2465 + $0x48] sm:$0xf]
      %v2479 = vld [vmem:[%s2465 + $0x4c] sm:$0xf]
      %v2480 = vld [vmem:[%s2465 + $0x54] sm:$0xf]
      %v2481 = vld [vmem:[%s2465 + $0x58] sm:$0xf]
      %v2482 = vld [vmem:[%s2465 + $0x60] sm:$0xf]
      %v2483 = vld [vmem:[%s2465 + $0x64] sm:$0xf]
      %v2484 = vld [vmem:[%s2465 + $0x6c] sm:$0xf]
      %v2485 = vld [vmem:[%s2465 + $0x70] sm:$0xf]
      %s2486 = scalar_lea.vmem %s2, 12
      %v2487 = vld [vmem:[%s2486] sm:$0x3]
      %v2508 = vunpack.c.l.b16 %v2466
      %v2509 = vunpack.c.l.b16 %v2467
      %v2510 = vunpack.c.l.b16 %v2468
      %v2511 = vunpack.c.l.b16 %v2469
      %v2512 = vunpack.c.l.b16 %v2470
      %v2513 = vunpack.c.l.b16 %v2471
      %v2514 = vunpack.c.l.b16 %v2472
      %v2515 = vunpack.c.l.b16 %v2473
      %v2516 = vunpack.c.l.b16 %v2474
      %v2517 = vunpack.c.l.b16 %v2475
      %v2518 = vunpack.c.l.b16 %v2476
      %v2519 = vunpack.c.l.b16 %v2477
      %v2520 = vunpack.c.l.b16 %v2478
      %v2521 = vunpack.c.l.b16 %v2479
      %v2522 = vunpack.c.l.b16 %v2480
      %v2523 = vunpack.c.l.b16 %v2481
      %v2524 = vunpack.c.l.b16 %v2482
      %v2525 = vunpack.c.l.b16 %v2483
      %v2526 = vunpack.c.l.b16 %v2484
      %v2527 = vunpack.c.l.b16 %v2485
      %v2528 = vpack.c.b16 %v2509, %v2508
      %v2529 = vpack.c.b16 %v2511, %v2510
      %v2530 = vpack.c.b16 %v2513, %v2512
      %v2531 = vpack.c.b16 %v2515, %v2514
      %v2532 = vpack.c.b16 %v2517, %v2516
      %v2533 = vpack.c.b16 %v2519, %v2518
      %v2534 = vpack.c.b16 %v2521, %v2520
      %v2535 = vpack.c.b16 %v2523, %v2522
      %v2536 = vpack.c.b16 %v2525, %v2524
      %v2537 = vpack.c.b16 %v2527, %v2526
      %v2539 = vsel %vm805, %v2528, 0
      %v2542 = vsel %vm805, %v2529, 0
      %v2545 = vsel %vm805, %v2530, 0
      %v2548 = vsel %vm805, %v2531, 0
      %v2551 = vsel %vm805, %v2532, 0
      %v2554 = vsel %vm805, %v2533, 0
      %v2557 = vsel %vm805, %v2534, 0
      %v2560 = vsel %vm805, %v2535, 0
      %v2563 = vsel %vm805, %v2536, 0
      %v2566 = vsel %vm805, %v2537, 0
      %v2569 = vsel %vm836, %v2487, 0
      %2571 = vmatprep.subr.bf16.mxu0 0
      %2572 = vmatpush1.bf16.msra.mxu0 %v2569
      %2573 = vmatprep.subr.bf16.mxu0 0
      %2574 = vmatpush1.bf16.msra.mxu0 0
      %2575 = vmatprep.subr.bf16.mxu0 0
      %2576 = vmatpush1.bf16.msra.mxu0 0
      %2577 = vmatprep.subr.bf16.mxu0 0
      %2578 = vmatpush1.bf16.msra.mxu0 0
      %2579 = vmatprep.subr.bf16.mxu0 0
      %2580 = vmatpush1.bf16.msra.mxu0 0
      %2581 = vmatprep.subr.bf16.mxu0 0
      %2582 = vmatpush1.bf16.msra.mxu0 0
      %2583 = vmatprep.subr.bf16.mxu0 0
      %2584 = vmatpush1.bf16.msra.mxu0 0
      %2585 = vmatprep.subr.bf16.mxu0 0
      %2586 = vmatpush1.bf16.msra.mxu0 0
      %2587 = vmatprep.subr.bf16.mxu0 0
      %2588 = vmatpush1.bf16.msra.mxu0 0
      %2589 = vmatprep.subr.bf16.mxu0 0
      %2590 = vmatpush1.bf16.msra.mxu0 0
      %2591 = vmatprep.subr.bf16.mxu0 0
      %2592 = vmatpush1.bf16.msra.mxu0 0
      %2593 = vmatprep.subr.bf16.mxu0 0
      %2594 = vmatpush1.bf16.msra.mxu0 0
      %2595 = vmatprep.subr.bf16.mxu0 0
      %2596 = vmatpush1.bf16.msra.mxu0 0
      %2597 = vmatprep.subr.bf16.mxu0 0
      %2598 = vmatpush1.bf16.msra.mxu0 0
      %2599 = vmatprep.subr.bf16.mxu0 0
      %2600 = vmatpush1.bf16.msra.mxu0 0
      %2601 = vmatprep.subr.bf16.mxu0 0
      %2602 = vmatpush1.bf16.msra.mxu0 0
      %2603 = vmatprep.mubr.bf16.mxu0 0
      %2604 = vmatmul.mubr.bf16.gmra.mrb[0].mxu0 %v2539
      %v2605 = vpop.f32.mrb[0].mxu0
      %v2606 = vadd.f32 0.0, %v2605
      %v2607 = vpop.f32.mrb[0].mxu0
      %v2608 = vpop.f32.mrb[0].mxu0
      %v2609 = vadd.f32 0.0, %v2608
      %v2610 = vpop.f32.mrb[0].mxu0
      %2611 = vmatprep.mubr.bf16.mxu0 0
      %2612 = vmatmul.mubr.bf16.gmra.mrb[0].mxu0 %v2542
      %v2613 = vpop.f32.mrb[0].mxu0
      %v2614 = vadd.f32 0.0, %v2613
      %v2615 = vpop.f32.mrb[0].mxu0
      %v2616 = vpop.f32.mrb[0].mxu0
      %v2617 = vadd.f32 0.0, %v2616
      %v2618 = vpop.f32.mrb[0].mxu0
      %2619 = vmatprep.mubr.bf16.mxu0 0
      %2620 = vmatmul.mubr.bf16.gmra.mrb[0].mxu0 %v2545
      %v2621 = vpop.f32.mrb[0].mxu0
      %v2622 = vadd.f32 0.0, %v2621
      %v2623 = vpop.f32.mrb[0].mxu0
      %v2624 = vpop.f32.mrb[0].mxu0
      %v2625 = vadd.f32 0.0, %v2624
      %v2626 = vpop.f32.mrb[0].mxu0
      %2627 = vmatprep.mubr.bf16.mxu0 0
      %2628 = vmatmul.mubr.bf16.gmra.mrb[0].mxu0 %v2548
      %v2629 = vpop.f32.mrb[0].mxu0
      %v2630 = vadd.f32 0.0, %v2629
      %v2631 = vpop.f32.mrb[0].mxu0
      %v2632 = vpop.f32.mrb[0].mxu0
      %v2633 = vadd.f32 0.0, %v2632
      %v2634 = vpop.f32.mrb[0].mxu0
      %2635 = vmatprep.mubr.bf16.mxu0 0
      %2636 = vmatmul.mubr.bf16.gmra.mrb[0].mxu0 %v2551
      %v2637 = vpop.f32.mrb[0].mxu0
      %v2638 = vadd.f32 0.0, %v2637
      %v2639 = vpop.f32.mrb[0].mxu0
      %v2640 = vpop.f32.mrb[0].mxu0
      %v2641 = vadd.f32 0.0, %v2640
      %v2642 = vpop.f32.mrb[0].mxu0
      %2643 = vmatprep.mubr.bf16.mxu0 0
      %2644 = vmatmul.mubr.bf16.gmra.mrb[0].mxu0 %v2554
      %v2645 = vpop.f32.mrb[0].mxu0
      %v2646 = vadd.f32 0.0, %v2645
      %v2647 = vpop.f32.mrb[0].mxu0
      %v2648 = vpop.f32.mrb[0].mxu0
      %v2649 = vadd.f32 0.0, %v2648
      %v2650 = vpop.f32.mrb[0].mxu0
      %2651 = vmatprep.mubr.bf16.mxu0 0
      %2652 = vmatmul.mubr.bf16.gmra.mrb[0].mxu0 %v2557
      %v2653 = vpop.f32.mrb[0].mxu0
      %v2654 = vadd.f32 0.0, %v2653
      %v2655 = vpop.f32.mrb[0].mxu0
      %v2656 = vpop.f32.mrb[0].mxu0
      %v2657 = vadd.f32 0.0, %v2656
      %v2658 = vpop.f32.mrb[0].mxu0
      %2659 = vmatprep.mubr.bf16.mxu0 0
      %2660 = vmatmul.mubr.bf16.gmra.mrb[0].mxu0 %v2560
      %v2661 = vpop.f32.mrb[0].mxu0
      %v2662 = vadd.f32 0.0, %v2661
      %v2663 = vpop.f32.mrb[0].mxu0
      %v2664 = vpop.f32.mrb[0].mxu0
      %v2665 = vadd.f32 0.0, %v2664
      %v2666 = vpop.f32.mrb[0].mxu0
      %2667 = vmatprep.mubr.bf16.mxu0 0
      %2668 = vmatmul.mubr.bf16.gmra.mrb[0].mxu0 %v2563
      %v2669 = vpop.f32.mrb[0].mxu0
      %v2670 = vadd.f32 0.0, %v2669
      %v2671 = vpop.f32.mrb[0].mxu0
      %v2672 = vpop.f32.mrb[0].mxu0
      %v2673 = vadd.f32 0.0, %v2672
      %v2674 = vpop.f32.mrb[0].mxu0
      %2675 = vmatprep.mubr.bf16.mxu0 0
      %2676 = vmatmul.mubr.bf16.gmra.mrb[0].mxu0 %v2566
      %v2677 = vpop.f32.mrb[0].mxu0
      %v2678 = vadd.f32 0.0, %v2677
      %v2679 = vpop.f32.mrb[0].mxu0
      %v2680 = vpop.f32.mrb[0].mxu0
      %v2681 = vadd.f32 0.0, %v2680
      %v2682 = vpop.f32.mrb[0].mxu0
      %2683 = vdwg.mxu0
      %v2684 = vadd.f32 %v2445, %v2606
      %v2685 = vadd.f32 %v2446, %v2609
      %v2686 = vadd.f32 %v2447, %v2614
      %v2687 = vadd.f32 %v2448, %v2617
      %v2688 = vadd.f32 %v2449, %v2622
      %v2689 = vadd.f32 %v2450, %v2625
      %v2690 = vadd.f32 %v2451, %v2630
      %v2691 = vadd.f32 %v2452, %v2633
      %v2692 = vadd.f32 %v2453, %v2638
      %v2693 = vadd.f32 %v2454, %v2641
      %v2694 = vadd.f32 %v2455, %v2646
      %v2695 = vadd.f32 %v2456, %v2649
      %v2696 = vadd.f32 %v2457, %v2654
      %v2697 = vadd.f32 %v2458, %v2657
      %v2698 = vadd.f32 %v2459, %v2662
      %v2699 = vadd.f32 %v2460, %v2665
      %v2700 = vadd.f32 %v2461, %v2670
      %v2701 = vadd.f32 %v2462, %v2673
      %v2702 = vadd.f32 %v2463, %v2678
      %v2703 = vadd.f32 %v2464, %v2681
      %v2704 = vld [vmem:[%s2465] sm:$0xf]
      %v2705 = vld [vmem:[%s2465 + $0x4] sm:$0xf]
      %v2706 = vld [vmem:[%s2465 + $0x8] sm:$0x1]
      %v2707 = vld [vmem:[%s2465 + $0xc] sm:$0xf]
      %v2708 = vld [vmem:[%s2465 + $0x10] sm:$0xf]
      %v2709 = vld [vmem:[%s2465 + $0x14] sm:$0x1]
      %v2710 = vld [vmem:[%s2465 + $0x18] sm:$0xf]
      %v2711 = vld [vmem:[%s2465 + $0x1c] sm:$0xf]
      %v2712 = vld [vmem:[%s2465 + $0x20] sm:$0x1]
      %v2713 = vld [vmem:[%s2465 + $0x24] sm:$0xf]
      %v2714 = vld [vmem:[%s2465 + $0x28] sm:$0xf]
      %v2715 = vld [vmem:[%s2465 + $0x2c] sm:$0x1]
      %v2716 = vld [vmem:[%s2465 + $0x30] sm:$0xf]
      %v2717 = vld [vmem:[%s2465 + $0x34] sm:$0xf]
      %v2718 = vld [vmem:[%s2465 + $0x38] sm:$0x1]
      %v2719 = vld [vmem:[%s2465 + $0x3c] sm:$0xf]
      %v2720 = vld [vmem:[%s2465 + $0x40] sm:$0xf]
      %v2721 = vld [vmem:[%s2465 + $0x44] sm:$0x1]
      %v2722 = vld [vmem:[%s2465 + $0x48] sm:$0xf]
      %v2723 = vld [vmem:[%s2465 + $0x4c] sm:$0xf]
      %v2724 = vld [vmem:[%s2465 + $0x50] sm:$0x1]
      %v2725 = vld [vmem:[%s2465 + $0x54] sm:$0xf]
      %v2726 = vld [vmem:[%s2465 + $0x58] sm:$0xf]
      %v2727 = vld [vmem:[%s2465 + $0x5c] sm:$0x1]
      %v2728 = vld [vmem:[%s2465 + $0x60] sm:$0xf]
      %v2729 = vld [vmem:[%s2465 + $0x64] sm:$0xf]
      %v2730 = vld [vmem:[%s2465 + $0x68] sm:$0x1]
      %v2731 = vld [vmem:[%s2465 + $0x6c] sm:$0xf]
      %v2732 = vld [vmem:[%s2465 + $0x70] sm:$0xf]
      %v2733 = vld [vmem:[%s2465 + $0x74] sm:$0x1]
      %v2735 = vshrl.u32 %v2704, 16
      %v2737 = vrot.slane %v2735, 4
      %v2738 = vshll.u32 %v2704, 16
      %v2740 = vrot.slane %v2738, 5
      %v2741 = vor.u32 %v2737, %v2740
      %v2742 = vrot.slane %v2741, 4
      %v2744 = vshll.u32 %v2705, 16
      %v2746 = vrot.slane %v2744, 5
      %v2747 = vsel %vm532, %v2742, %v2746
      %v2748 = vshrl.u32 %v2705, 16
      %v2750 = vrot.slane %v2748, 4
      %v2751 = vor.u32 %v2750, %v2746
      %v2752 = vrot.slane %v2751, 4
      %v2754 = vshll.u32 %v2706, 16
      %v2756 = vrot.slane %v2754, 5
      %v2757 = vsel %vm532, %v2752, %v2756
      %v2759 = vshrl.u32 %v2707, 16
      %v2761 = vrot.slane %v2759, 4
      %v2762 = vshll.u32 %v2707, 16
      %v2764 = vrot.slane %v2762, 5
      %v2765 = vor.u32 %v2761, %v2764
      %v2766 = vrot.slane %v2765, 4
      %v2768 = vshll.u32 %v2708, 16
      %v2770 = vrot.slane %v2768, 5
      %v2771 = vsel %vm532, %v2766, %v2770
      %v2772 = vshrl.u32 %v2708, 16
      %v2774 = vrot.slane %v2772, 4
      %v2775 = vor.u32 %v2774, %v2770
      %v2776 = vrot.slane %v2775, 4
      %v2778 = vshll.u32 %v2709, 16
      %v2780 = vrot.slane %v2778, 5
      %v2781 = vsel %vm532, %v2776, %v2780
      %v2783 = vshrl.u32 %v2710, 16
      %v2785 = vrot.slane %v2783, 4
      %v2786 = vshll.u32 %v2710, 16
      %v2788 = vrot.slane %v2786, 5
      %v2789 = vor.u32 %v2785, %v2788
      %v2790 = vrot.slane %v2789, 4
      %v2792 = vshll.u32 %v2711, 16
      %v2794 = vrot.slane %v2792, 5
      %v2795 = vsel %vm532, %v2790, %v2794
      %v2796 = vshrl.u32 %v2711, 16
      %v2798 = vrot.slane %v2796, 4
      %v2799 = vor.u32 %v2798, %v2794
      %v2800 = vrot.slane %v2799, 4
      %v2802 = vshll.u32 %v2712, 16
      %v2804 = vrot.slane %v2802, 5
      %v2805 = vsel %vm532, %v2800, %v2804
      %v2807 = vshrl.u32 %v2713, 16
      %v2809 = vrot.slane %v2807, 4
      %v2810 = vshll.u32 %v2713, 16
      %v2812 = vrot.slane %v2810, 5
      %v2813 = vor.u32 %v2809, %v2812
      %v2814 = vrot.slane %v2813, 4
      %v2816 = vshll.u32 %v2714, 16
      %v2818 = vrot.slane %v2816, 5
      %v2819 = vsel %vm532, %v2814, %v2818
      %v2820 = vshrl.u32 %v2714, 16
      %v2822 = vrot.slane %v2820, 4
      %v2823 = vor.u32 %v2822, %v2818
      %v2824 = vrot.slane %v2823, 4
      %v2826 = vshll.u32 %v2715, 16
      %v2828 = vrot.slane %v2826, 5
      %v2829 = vsel %vm532, %v2824, %v2828
      %v2831 = vshrl.u32 %v2716, 16
      %v2833 = vrot.slane %v2831, 4
      %v2834 = vshll.u32 %v2716, 16
      %v2836 = vrot.slane %v2834, 5
      %v2837 = vor.u32 %v2833, %v2836
      %v2838 = vrot.slane %v2837, 4
      %v2840 = vshll.u32 %v2717, 16
      %v2842 = vrot.slane %v2840, 5
      %v2843 = vsel %vm532, %v2838, %v2842
      %v2844 = vshrl.u32 %v2717, 16
      %v2846 = vrot.slane %v2844, 4
      %v2847 = vor.u32 %v2846, %v2842
      %v2848 = vrot.slane %v2847, 4
      %v2850 = vshll.u32 %v2718, 16
      %v2852 = vrot.slane %v2850, 5
      %v2853 = vsel %vm532, %v2848, %v2852
      %v2855 = vshrl.u32 %v2719, 16
      %v2857 = vrot.slane %v2855, 4
      %v2858 = vshll.u32 %v2719, 16
      %v2860 = vrot.slane %v2858, 5
      %v2861 = vor.u32 %v2857, %v2860
      %v2862 = vrot.slane %v2861, 4
      %v2864 = vshll.u32 %v2720, 16
      %v2866 = vrot.slane %v2864, 5
      %v2867 = vsel %vm532, %v2862, %v2866
      %v2868 = vshrl.u32 %v2720, 16
      %v2870 = vrot.slane %v2868, 4
      %v2871 = vor.u32 %v2870, %v2866
      %v2872 = vrot.slane %v2871, 4
      %v2874 = vshll.u32 %v2721, 16
      %v2876 = vrot.slane %v2874, 5
      %v2877 = vsel %vm532, %v2872, %v2876
      %v2879 = vshrl.u32 %v2722, 16
      %v2881 = vrot.slane %v2879, 4
      %v2882 = vshll.u32 %v2722, 16
      %v2884 = vrot.slane %v2882, 5
      %v2885 = vor.u32 %v2881, %v2884
      %v2886 = vrot.slane %v2885, 4
      %v2888 = vshll.u32 %v2723, 16
      %v2890 = vrot.slane %v2888, 5
      %v2891 = vsel %vm532, %v2886, %v2890
      %v2892 = vshrl.u32 %v2723, 16
      %v2894 = vrot.slane %v2892, 4
      %v2895 = vor.u32 %v2894, %v2890
      %v2896 = vrot.slane %v2895, 4
      %v2898 = vshll.u32 %v2724, 16
      %v2900 = vrot.slane %v2898, 5
      %v2901 = vsel %vm532, %v2896, %v2900
      %v2903 = vshrl.u32 %v2725, 16
      %v2905 = vrot.slane %v2903, 4
      %v2906 = vshll.u32 %v2725, 16
      %v2908 = vrot.slane %v2906, 5
      %v2909 = vor.u32 %v2905, %v2908
      %v2910 = vrot.slane %v2909, 4
      %v2912 = vshll.u32 %v2726, 16
      %v2914 = vrot.slane %v2912, 5
      %v2915 = vsel %vm532, %v2910, %v2914
      %v2916 = vshrl.u32 %v2726, 16
      %v2918 = vrot.slane %v2916, 4
      %v2919 = vor.u32 %v2918, %v2914
      %v2920 = vrot.slane %v2919, 4
      %v2922 = vshll.u32 %v2727, 16
      %v2924 = vrot.slane %v2922, 5
      %v2925 = vsel %vm532, %v2920, %v2924
      %v2927 = vshrl.u32 %v2728, 16
      %v2929 = vrot.slane %v2927, 4
      %v2930 = vshll.u32 %v2728, 16
      %v2932 = vrot.slane %v2930, 5
      %v2933 = vor.u32 %v2929, %v2932
      %v2934 = vrot.slane %v2933, 4
      %v2936 = vshll.u32 %v2729, 16
      %v2938 = vrot.slane %v2936, 5
      %v2939 = vsel %vm532, %v2934, %v2938
      %v2940 = vshrl.u32 %v2729, 16
      %v2942 = vrot.slane %v2940, 4
      %v2943 = vor.u32 %v2942, %v2938
      %v2944 = vrot.slane %v2943, 4
      %v2946 = vshll.u32 %v2730, 16
      %v2948 = vrot.slane %v2946, 5
      %v2949 = vsel %vm532, %v2944, %v2948
      %v2951 = vshrl.u32 %v2731, 16
      %v2953 = vrot.slane %v2951, 4
      %v2954 = vshll.u32 %v2731, 16
      %v2956 = vrot.slane %v2954, 5
      %v2957 = vor.u32 %v2953, %v2956
      %v2958 = vrot.slane %v2957, 4
      %v2960 = vshll.u32 %v2732, 16
      %v2962 = vrot.slane %v2960, 5
      %v2963 = vsel %vm532, %v2958, %v2962
      %v2964 = vshrl.u32 %v2732, 16
      %v2966 = vrot.slane %v2964, 4
      %v2967 = vor.u32 %v2966, %v2962
      %v2968 = vrot.slane %v2967, 4
      %v2970 = vshll.u32 %v2733, 16
      %v2972 = vrot.slane %v2970, 5
      %v2973 = vsel %vm532, %v2968, %v2972
      %s2974 = scalar_lea.vmem %s2, 14
      %v2975 = vld [vmem:[%s2974] sm:$0x3]
      %v2976 = vunpack.c.l.b16 %v2747
      %v2977 = vunpack.c.l.b16 %v2757
      %v2978 = vunpack.c.l.b16 %v2771
      %v2979 = vunpack.c.l.b16 %v2781
      %v2980 = vunpack.c.l.b16 %v2795
      %v2981 = vunpack.c.l.b16 %v2805
      %v2982 = vunpack.c.l.b16 %v2819
      %v2983 = vunpack.c.l.b16 %v2829
      %v2984 = vunpack.c.l.b16 %v2843
      %v2985 = vunpack.c.l.b16 %v2853
      %v2986 = vunpack.c.l.b16 %v2867
      %v2987 = vunpack.c.l.b16 %v2877
      %v2988 = vunpack.c.l.b16 %v2891
      %v2989 = vunpack.c.l.b16 %v2901
      %v2990 = vunpack.c.l.b16 %v2915
      %v2991 = vunpack.c.l.b16 %v2925
      %v2992 = vunpack.c.l.b16 %v2939
      %v2993 = vunpack.c.l.b16 %v2949
      %v2994 = vunpack.c.l.b16 %v2963
      %v2995 = vunpack.c.l.b16 %v2973
      %v2996 = vpack.c.b16 %v2977, %v2976
      %v2997 = vpack.c.b16 %v2979, %v2978
      %v2998 = vpack.c.b16 %v2981, %v2980
      %v2999 = vpack.c.b16 %v2983, %v2982
      %v3000 = vpack.c.b16 %v2985, %v2984
      %v3001 = vpack.c.b16 %v2987, %v2986
      %v3002 = vpack.c.b16 %v2989, %v2988
      %v3003 = vpack.c.b16 %v2991, %v2990
      %v3004 = vpack.c.b16 %v2993, %v2992
      %v3005 = vpack.c.b16 %v2995, %v2994
      %v3007 = vsel %vm805, %v2996, 0
      %v3010 = vsel %vm805, %v2997, 0
      %v3013 = vsel %vm805, %v2998, 0
      %v3016 = vsel %vm805, %v2999, 0
      %v3019 = vsel %vm805, %v3000, 0
      %v3022 = vsel %vm805, %v3001, 0
      %v3025 = vsel %vm805, %v3002, 0
      %v3028 = vsel %vm805, %v3003, 0
      %v3031 = vsel %vm805, %v3004, 0
      %v3034 = vsel %vm805, %v3005, 0
      %v3037 = vsel %vm836, %v2975, 0
      %3039 = vmatprep.subr.bf16.mxu0 0
      %3040 = vmatpush1.bf16.msra.mxu0 %v3037
      %3041 = vmatprep.subr.bf16.mxu0 0
      %3042 = vmatpush1.bf16.msra.mxu0 0
      %3043 = vmatprep.subr.bf16.mxu0 0
      %3044 = vmatpush1.bf16.msra.mxu0 0
      %3045 = vmatprep.subr.bf16.mxu0 0
      %3046 = vmatpush1.bf16.msra.mxu0 0
      %3047 = vmatprep.subr.bf16.mxu0 0
      %3048 = vmatpush1.bf16.msra.mxu0 0
      %3049 = vmatprep.subr.bf16.mxu0 0
      %3050 = vmatpush1.bf16.msra.mxu0 0
      %3051 = vmatprep.subr.bf16.mxu0 0
      %3052 = vmatpush1.bf16.msra.mxu0 0
      %3053 = vmatprep.subr.bf16.mxu0 0
      %3054 = vmatpush1.bf16.msra.mxu0 0
      %3055 = vmatprep.subr.bf16.mxu0 0
      %3056 = vmatpush1.bf16.msra.mxu0 0
      %3057 = vmatprep.subr.bf16.mxu0 0
      %3058 = vmatpush1.bf16.msra.mxu0 0
      %3059 = vmatprep.subr.bf16.mxu0 0
      %3060 = vmatpush1.bf16.msra.mxu0 0
      %3061 = vmatprep.subr.bf16.mxu0 0
      %3062 = vmatpush1.bf16.msra.mxu0 0
      %3063 = vmatprep.subr.bf16.mxu0 0
      %3064 = vmatpush1.bf16.msra.mxu0 0
      %3065 = vmatprep.subr.bf16.mxu0 0
      %3066 = vmatpush1.bf16.msra.mxu0 0
      %3067 = vmatprep.subr.bf16.mxu0 0
      %3068 = vmatpush1.bf16.msra.mxu0 0
      %3069 = vmatprep.subr.bf16.mxu0 0
      %3070 = vmatpush1.bf16.msra.mxu0 0
      %3071 = vmatprep.mubr.bf16.mxu0 0
      %3072 = vmatmul.mubr.bf16.gmra.mrb[0].mxu0 %v3007
      %v3073 = vpop.f32.mrb[0].mxu0
      %v3074 = vadd.f32 0.0, %v3073
      %v3075 = vpop.f32.mrb[0].mxu0
      %v3076 = vpop.f32.mrb[0].mxu0
      %v3077 = vadd.f32 0.0, %v3076
      %v3078 = vpop.f32.mrb[0].mxu0
      %3079 = vmatprep.mubr.bf16.mxu0 0
      %3080 = vmatmul.mubr.bf16.gmra.mrb[0].mxu0 %v3010
      %v3081 = vpop.f32.mrb[0].mxu0
      %v3082 = vadd.f32 0.0, %v3081
      %v3083 = vpop.f32.mrb[0].mxu0
      %v3084 = vpop.f32.mrb[0].mxu0
      %v3085 = vadd.f32 0.0, %v3084
      %v3086 = vpop.f32.mrb[0].mxu0
      %3087 = vmatprep.mubr.bf16.mxu0 0
      %3088 = vmatmul.mubr.bf16.gmra.mrb[0].mxu0 %v3013
      %v3089 = vpop.f32.mrb[0].mxu0
      %v3090 = vadd.f32 0.0, %v3089
      %v3091 = vpop.f32.mrb[0].mxu0
      %v3092 = vpop.f32.mrb[0].mxu0
      %v3093 = vadd.f32 0.0, %v3092
      %v3094 = vpop.f32.mrb[0].mxu0
      %3095 = vmatprep.mubr.bf16.mxu0 0
      %3096 = vmatmul.mubr.bf16.gmra.mrb[0].mxu0 %v3016
      %v3097 = vpop.f32.mrb[0].mxu0
      %v3098 = vadd.f32 0.0, %v3097
      %v3099 = vpop.f32.mrb[0].mxu0
      %v3100 = vpop.f32.mrb[0].mxu0
      %v3101 = vadd.f32 0.0, %v3100
      %v3102 = vpop.f32.mrb[0].mxu0
      %3103 = vmatprep.mubr.bf16.mxu0 0
      %3104 = vmatmul.mubr.bf16.gmra.mrb[0].mxu0 %v3019
      %v3105 = vpop.f32.mrb[0].mxu0
      %v3106 = vadd.f32 0.0, %v3105
      %v3107 = vpop.f32.mrb[0].mxu0
      %v3108 = vpop.f32.mrb[0].mxu0
      %v3109 = vadd.f32 0.0, %v3108
      %v3110 = vpop.f32.mrb[0].mxu0
      %3111 = vmatprep.mubr.bf16.mxu0 0
      %3112 = vmatmul.mubr.bf16.gmra.mrb[0].mxu0 %v3022
      %v3113 = vpop.f32.mrb[0].mxu0
      %v3114 = vadd.f32 0.0, %v3113
      %v3115 = vpop.f32.mrb[0].mxu0
      %v3116 = vpop.f32.mrb[0].mxu0
      %v3117 = vadd.f32 0.0, %v3116
      %v3118 = vpop.f32.mrb[0].mxu0
      %3119 = vmatprep.mubr.bf16.mxu0 0
      %3120 = vmatmul.mubr.bf16.gmra.mrb[0].mxu0 %v3025
      %v3121 = vpop.f32.mrb[0].mxu0
      %v3122 = vadd.f32 0.0, %v3121
      %v3123 = vpop.f32.mrb[0].mxu0
      %v3124 = vpop.f32.mrb[0].mxu0
      %v3125 = vadd.f32 0.0, %v3124
      %v3126 = vpop.f32.mrb[0].mxu0
      %3127 = vmatprep.mubr.bf16.mxu0 0
      %3128 = vmatmul.mubr.bf16.gmra.mrb[0].mxu0 %v3028
      %v3129 = vpop.f32.mrb[0].mxu0
      %v3130 = vadd.f32 0.0, %v3129
      %v3131 = vpop.f32.mrb[0].mxu0
      %v3132 = vpop.f32.mrb[0].mxu0
      %v3133 = vadd.f32 0.0, %v3132
      %v3134 = vpop.f32.mrb[0].mxu0
      %3135 = vmatprep.mubr.bf16.mxu0 0
      %3136 = vmatmul.mubr.bf16.gmra.mrb[0].mxu0 %v3031
      %v3137 = vpop.f32.mrb[0].mxu0
      %v3138 = vadd.f32 0.0, %v3137
      %v3139 = vpop.f32.mrb[0].mxu0
      %v3140 = vpop.f32.mrb[0].mxu0
      %v3141 = vadd.f32 0.0, %v3140
      %v3142 = vpop.f32.mrb[0].mxu0
      %3143 = vmatprep.mubr.bf16.mxu0 0
      %3144 = vmatmul.mubr.bf16.gmra.mrb[0].mxu0 %v3034
      %v3145 = vpop.f32.mrb[0].mxu0
      %v3146 = vadd.f32 0.0, %v3145
      %v3147 = vpop.f32.mrb[0].mxu0
      %v3148 = vpop.f32.mrb[0].mxu0
      %v3149 = vadd.f32 0.0, %v3148
      %v3150 = vpop.f32.mrb[0].mxu0
      %3151 = vdwg.mxu0
      %v3152 = vadd.f32 %v2684, %v3074
      %v3153 = vadd.f32 %v2685, %v3077
      %v3154 = vadd.f32 %v2686, %v3082
      %v3155 = vadd.f32 %v2687, %v3085
      %v3156 = vadd.f32 %v2688, %v3090
      %v3157 = vadd.f32 %v2689, %v3093
      %v3158 = vadd.f32 %v2690, %v3098
      %v3159 = vadd.f32 %v2691, %v3101
      %v3160 = vadd.f32 %v2692, %v3106
      %v3161 = vadd.f32 %v2693, %v3109
      %v3162 = vadd.f32 %v2694, %v3114
      %v3163 = vadd.f32 %v2695, %v3117
      %v3164 = vadd.f32 %v2696, %v3122
      %v3165 = vadd.f32 %v2697, %v3125
      %v3166 = vadd.f32 %v2698, %v3130
      %v3167 = vadd.f32 %v2699, %v3133
      %v3168 = vadd.f32 %v2700, %v3138
      %v3169 = vadd.f32 %v2701, %v3141
      %v3170 = vadd.f32 %v2702, %v3146
      %v3171 = vadd.f32 %v2703, %v3149
      %v3172 = vld [vmem:[%s2465] sm:$0xe]
      %v3173 = vld [vmem:[%s2465 + $0xc] sm:$0xe]
      %v3174 = vld [vmem:[%s2465 + $0x18] sm:$0xe]
      %v3175 = vld [vmem:[%s2465 + $0x24] sm:$0xe]
      %v3176 = vld [vmem:[%s2465 + $0x30] sm:$0xe]
      %v3177 = vld [vmem:[%s2465 + $0x3c] sm:$0xe]
      %v3178 = vld [vmem:[%s2465 + $0x48] sm:$0xe]
      %v3179 = vld [vmem:[%s2465 + $0x54] sm:$0xe]
      %v3180 = vld [vmem:[%s2465 + $0x60] sm:$0xe]
      %v3181 = vld [vmem:[%s2465 + $0x6c] sm:$0xe]
      %v3212 = vrot.slane %v3172, 5
      %v3213 = vrot.slane %v3212, 4
      %v3214 = vrot.slane %v2705, 5
      %v3215 = vsel %vm1181, %v3213, %v3214
      %v3216 = vrot.slane %v3214, 4
      %v3217 = vrot.slane %v2706, 5
      %v3218 = vsel %vm1181, %v3216, %v3217
      %v3219 = vrot.slane %v3173, 5
      %v3220 = vrot.slane %v3219, 4
      %v3221 = vrot.slane %v2708, 5
      %v3222 = vsel %vm1181, %v3220, %v3221
      %v3223 = vrot.slane %v3221, 4
      %v3224 = vrot.slane %v2709, 5
      %v3225 = vsel %vm1181, %v3223, %v3224
      %v3226 = vrot.slane %v3174, 5
      %v3227 = vrot.slane %v3226, 4
      %v3228 = vrot.slane %v2711, 5
      %v3229 = vsel %vm1181, %v3227, %v3228
      %v3230 = vrot.slane %v3228, 4
      %v3231 = vrot.slane %v2712, 5
      %v3232 = vsel %vm1181, %v3230, %v3231
      %v3233 = vrot.slane %v3175, 5
      %v3234 = vrot.slane %v3233, 4
      %v3235 = vrot.slane %v2714, 5
      %v3236 = vsel %vm1181, %v3234, %v3235
      %v3237 = vrot.slane %v3235, 4
      %v3238 = vrot.slane %v2715, 5
      %v3239 = vsel %vm1181, %v3237, %v3238
      %v3240 = vrot.slane %v3176, 5
      %v3241 = vrot.slane %v3240, 4
      %v3242 = vrot.slane %v2717, 5
      %v3243 = vsel %vm1181, %v3241, %v3242
      %v3244 = vrot.slane %v3242, 4
      %v3245 = vrot.slane %v2718, 5
      %v3246 = vsel %vm1181, %v3244, %v3245
      %v3247 = vrot.slane %v3177, 5
      %v3248 = vrot.slane %v3247, 4
      %v3249 = vrot.slane %v2720, 5
      %v3250 = vsel %vm1181, %v3248, %v3249
      %v3251 = vrot.slane %v3249, 4
      %v3252 = vrot.slane %v2721, 5
      %v3253 = vsel %vm1181, %v3251, %v3252
      %v3254 = vrot.slane %v3178, 5
      %v3255 = vrot.slane %v3254, 4
      %v3256 = vrot.slane %v2723, 5
      %v3257 = vsel %vm1181, %v3255, %v3256
      %v3258 = vrot.slane %v3256, 4
      %v3259 = vrot.slane %v2724, 5
      %v3260 = vsel %vm1181, %v3258, %v3259
      %v3261 = vrot.slane %v3179, 5
      %v3262 = vrot.slane %v3261, 4
      %v3263 = vrot.slane %v2726, 5
      %v3264 = vsel %vm1181, %v3262, %v3263
      %v3265 = vrot.slane %v3263, 4
      %v3266 = vrot.slane %v2727, 5
      %v3267 = vsel %vm1181, %v3265, %v3266
      %v3268 = vrot.slane %v3180, 5
      %v3269 = vrot.slane %v3268, 4
      %v3270 = vrot.slane %v2729, 5
      %v3271 = vsel %vm1181, %v3269, %v3270
      %v3272 = vrot.slane %v3270, 4
      %v3273 = vrot.slane %v2730, 5
      %v3274 = vsel %vm1181, %v3272, %v3273
      %v3275 = vrot.slane %v3181, 5
      %v3276 = vrot.slane %v3275, 4
      %v3277 = vrot.slane %v2732, 5
      %v3278 = vsel %vm1181, %v3276, %v3277
      %v3279 = vrot.slane %v3277, 4
      %v3280 = vrot.slane %v2733, 5
      %v3281 = vsel %vm1181, %v3279, %v3280
      %s3282 = scalar_lea.vmem %s2, 16
      %v3283 = vld [vmem:[%s3282] sm:$0x3]
      %v3284 = vunpack.c.l.b16 %v3215
      %v3285 = vunpack.c.l.b16 %v3218
      %v3286 = vunpack.c.l.b16 %v3222
      %v3287 = vunpack.c.l.b16 %v3225
      %v3288 = vunpack.c.l.b16 %v3229
      %v3289 = vunpack.c.l.b16 %v3232
      %v3290 = vunpack.c.l.b16 %v3236
      %v3291 = vunpack.c.l.b16 %v3239
      %v3292 = vunpack.c.l.b16 %v3243
      %v3293 = vunpack.c.l.b16 %v3246
      %v3294 = vunpack.c.l.b16 %v3250
      %v3295 = vunpack.c.l.b16 %v3253
      %v3296 = vunpack.c.l.b16 %v3257
      %v3297 = vunpack.c.l.b16 %v3260
      %v3298 = vunpack.c.l.b16 %v3264
      %v3299 = vunpack.c.l.b16 %v3267
      %v3300 = vunpack.c.l.b16 %v3271
      %v3301 = vunpack.c.l.b16 %v3274
      %v3302 = vunpack.c.l.b16 %v3278
      %v3303 = vunpack.c.l.b16 %v3281
      %v3304 = vpack.c.b16 %v3285, %v3284
      %v3305 = vpack.c.b16 %v3287, %v3286
      %v3306 = vpack.c.b16 %v3289, %v3288
      %v3307 = vpack.c.b16 %v3291, %v3290
      %v3308 = vpack.c.b16 %v3293, %v3292
      %v3309 = vpack.c.b16 %v3295, %v3294
      %v3310 = vpack.c.b16 %v3297, %v3296
      %v3311 = vpack.c.b16 %v3299, %v3298
      %v3312 = vpack.c.b16 %v3301, %v3300
      %v3313 = vpack.c.b16 %v3303, %v3302
      %v3315 = vsel %vm805, %v3304, 0
      %v3318 = vsel %vm805, %v3305, 0
      %v3321 = vsel %vm805, %v3306, 0
      %v3324 = vsel %vm805, %v3307, 0
      %v3327 = vsel %vm805, %v3308, 0
      %v3330 = vsel %vm805, %v3309, 0
      %v3333 = vsel %vm805, %v3310, 0
      %v3336 = vsel %vm805, %v3311, 0
      %v3339 = vsel %vm805, %v3312, 0
      %v3342 = vsel %vm805, %v3313, 0
      %v3345 = vsel %vm836, %v3283, 0
      %3347 = vmatprep.subr.bf16.mxu0 0
      %3348 = vmatpush1.bf16.msra.mxu0 %v3345
      %3349 = vmatprep.subr.bf16.mxu0 0
      %3350 = vmatpush1.bf16.msra.mxu0 0
      %3351 = vmatprep.subr.bf16.mxu0 0
      %3352 = vmatpush1.bf16.msra.mxu0 0
      %3353 = vmatprep.subr.bf16.mxu0 0
      %3354 = vmatpush1.bf16.msra.mxu0 0
      %3355 = vmatprep.subr.bf16.mxu0 0
      %3356 = vmatpush1.bf16.msra.mxu0 0
      %3357 = vmatprep.subr.bf16.mxu0 0
      %3358 = vmatpush1.bf16.msra.mxu0 0
      %3359 = vmatprep.subr.bf16.mxu0 0
      %3360 = vmatpush1.bf16.msra.mxu0 0
      %3361 = vmatprep.subr.bf16.mxu0 0
      %3362 = vmatpush1.bf16.msra.mxu0 0
      %3363 = vmatprep.subr.bf16.mxu0 0
      %3364 = vmatpush1.bf16.msra.mxu0 0
      %3365 = vmatprep.subr.bf16.mxu0 0
      %3366 = vmatpush1.bf16.msra.mxu0 0
      %3367 = vmatprep.subr.bf16.mxu0 0
      %3368 = vmatpush1.bf16.msra.mxu0 0
      %3369 = vmatprep.subr.bf16.mxu0 0
      %3370 = vmatpush1.bf16.msra.mxu0 0
      %3371 = vmatprep.subr.bf16.mxu0 0
      %3372 = vmatpush1.bf16.msra.mxu0 0
      %3373 = vmatprep.subr.bf16.mxu0 0
      %3374 = vmatpush1.bf16.msra.mxu0 0
      %3375 = vmatprep.subr.bf16.mxu0 0
      %3376 = vmatpush1.bf16.msra.mxu0 0
      %3377 = vmatprep.subr.bf16.mxu0 0
      %3378 = vmatpush1.bf16.msra.mxu0 0
      %3379 = vmatprep.mubr.bf16.mxu0 0
      %3380 = vmatmul.mubr.bf16.gmra.mrb[0].mxu0 %v3315
      %v3381 = vpop.f32.mrb[0].mxu0
      %v3382 = vadd.f32 0.0, %v3381
      %v3383 = vpop.f32.mrb[0].mxu0
      %v3384 = vpop.f32.mrb[0].mxu0
      %v3385 = vadd.f32 0.0, %v3384
      %v3386 = vpop.f32.mrb[0].mxu0
      %3387 = vmatprep.mubr.bf16.mxu0 0
      %3388 = vmatmul.mubr.bf16.gmra.mrb[0].mxu0 %v3318
      %v3389 = vpop.f32.mrb[0].mxu0
      %v3390 = vadd.f32 0.0, %v3389
      %v3391 = vpop.f32.mrb[0].mxu0
      %v3392 = vpop.f32.mrb[0].mxu0
      %v3393 = vadd.f32 0.0, %v3392
      %v3394 = vpop.f32.mrb[0].mxu0
      %3395 = vmatprep.mubr.bf16.mxu0 0
      %3396 = vmatmul.mubr.bf16.gmra.mrb[0].mxu0 %v3321
      %v3397 = vpop.f32.mrb[0].mxu0
      %v3398 = vadd.f32 0.0, %v3397
      %v3399 = vpop.f32.mrb[0].mxu0
      %v3400 = vpop.f32.mrb[0].mxu0
      %v3401 = vadd.f32 0.0, %v3400
      %v3402 = vpop.f32.mrb[0].mxu0
      %3403 = vmatprep.mubr.bf16.mxu0 0
      %3404 = vmatmul.mubr.bf16.gmra.mrb[0].mxu0 %v3324
      %v3405 = vpop.f32.mrb[0].mxu0
      %v3406 = vadd.f32 0.0, %v3405
      %v3407 = vpop.f32.mrb[0].mxu0
      %v3408 = vpop.f32.mrb[0].mxu0
      %v3409 = vadd.f32 0.0, %v3408
      %v3410 = vpop.f32.mrb[0].mxu0
      %3411 = vmatprep.mubr.bf16.mxu0 0
      %3412 = vmatmul.mubr.bf16.gmra.mrb[0].mxu0 %v3327
      %v3413 = vpop.f32.mrb[0].mxu0
      %v3414 = vadd.f32 0.0, %v3413
      %v3415 = vpop.f32.mrb[0].mxu0
      %v3416 = vpop.f32.mrb[0].mxu0
      %v3417 = vadd.f32 0.0, %v3416
      %v3418 = vpop.f32.mrb[0].mxu0
      %3419 = vmatprep.mubr.bf16.mxu0 0
      %3420 = vmatmul.mubr.bf16.gmra.mrb[0].mxu0 %v3330
      %v3421 = vpop.f32.mrb[0].mxu0
      %v3422 = vadd.f32 0.0, %v3421
      %v3423 = vpop.f32.mrb[0].mxu0
      %v3424 = vpop.f32.mrb[0].mxu0
      %v3425 = vadd.f32 0.0, %v3424
      %v3426 = vpop.f32.mrb[0].mxu0
      %3427 = vmatprep.mubr.bf16.mxu0 0
      %3428 = vmatmul.mubr.bf16.gmra.mrb[0].mxu0 %v3333
      %v3429 = vpop.f32.mrb[0].mxu0
      %v3430 = vadd.f32 0.0, %v3429
      %v3431 = vpop.f32.mrb[0].mxu0
      %v3432 = vpop.f32.mrb[0].mxu0
      %v3433 = vadd.f32 0.0, %v3432
      %v3434 = vpop.f32.mrb[0].mxu0
      %3435 = vmatprep.mubr.bf16.mxu0 0
      %3436 = vmatmul.mubr.bf16.gmra.mrb[0].mxu0 %v3336
      %v3437 = vpop.f32.mrb[0].mxu0
      %v3438 = vadd.f32 0.0, %v3437
      %v3439 = vpop.f32.mrb[0].mxu0
      %v3440 = vpop.f32.mrb[0].mxu0
      %v3441 = vadd.f32 0.0, %v3440
      %v3442 = vpop.f32.mrb[0].mxu0
      %3443 = vmatprep.mubr.bf16.mxu0 0
      %3444 = vmatmul.mubr.bf16.gmra.mrb[0].mxu0 %v3339
      %v3445 = vpop.f32.mrb[0].mxu0
      %v3446 = vadd.f32 0.0, %v3445
      %v3447 = vpop.f32.mrb[0].mxu0
      %v3448 = vpop.f32.mrb[0].mxu0
      %v3449 = vadd.f32 0.0, %v3448
      %v3450 = vpop.f32.mrb[0].mxu0
      %3451 = vmatprep.mubr.bf16.mxu0 0
      %3452 = vmatmul.mubr.bf16.gmra.mrb[0].mxu0 %v3342
      %v3453 = vpop.f32.mrb[0].mxu0
      %v3454 = vadd.f32 0.0, %v3453
      %v3455 = vpop.f32.mrb[0].mxu0
      %v3456 = vpop.f32.mrb[0].mxu0
      %v3457 = vadd.f32 0.0, %v3456
      %v3458 = vpop.f32.mrb[0].mxu0
      %3459 = vdwg.mxu0
      %v3460 = vadd.f32 %v3152, %v3382
      %v3461 = vadd.f32 %v3153, %v3385
      %v3462 = vadd.f32 %v3154, %v3390
      %v3463 = vadd.f32 %v3155, %v3393
      %v3464 = vadd.f32 %v3156, %v3398
      %v3465 = vadd.f32 %v3157, %v3401
      %v3466 = vadd.f32 %v3158, %v3406
      %v3467 = vadd.f32 %v3159, %v3409
      %v3468 = vadd.f32 %v3160, %v3414
      %v3469 = vadd.f32 %v3161, %v3417
      %v3470 = vadd.f32 %v3162, %v3422
      %v3471 = vadd.f32 %v3163, %v3425
      %v3472 = vadd.f32 %v3164, %v3430
      %v3473 = vadd.f32 %v3165, %v3433
      %v3474 = vadd.f32 %v3166, %v3438
      %v3475 = vadd.f32 %v3167, %v3441
      %v3476 = vadd.f32 %v3168, %v3446
      %v3477 = vadd.f32 %v3169, %v3449
      %v3478 = vadd.f32 %v3170, %v3454
      %v3479 = vadd.f32 %v3171, %v3457
      %v3480 = vld [vmem:[%s3] sm:$0x1]
      %v3482 = vlaneseq
      %v3483 = vshrl.u32 %v3482, 7
      %v3484 = vsub.s32 0, %v3483
      %v3485 = vrot.slane %v3480, %v3484
      %v3487 = vmul.f32 %v3460, %v3485
      %v3488 = vmul.f32 %v3461, %v3485
      %v3489 = vmul.f32 %v3462, %v3485
      %v3490 = vmul.f32 %v3463, %v3485
      %v3491 = vmul.f32 %v3464, %v3485
      %v3492 = vmul.f32 %v3465, %v3485
      %v3493 = vmul.f32 %v3466, %v3485
      %v3494 = vmul.f32 %v3467, %v3485
      %v3495 = vmul.f32 %v3468, %v3485
      %v3496 = vmul.f32 %v3469, %v3485
      %v3497 = vmul.f32 %v3470, %v3485
      %v3498 = vmul.f32 %v3471, %v3485
      %v3499 = vmul.f32 %v3472, %v3485
      %v3500 = vmul.f32 %v3473, %v3485
      %v3501 = vmul.f32 %v3474, %v3485
      %v3502 = vmul.f32 %v3475, %v3485
      %v3503 = vmul.f32 %v3476, %v3485
      %v3504 = vmul.f32 %v3477, %v3485
      %v3505 = vmul.f32 %v3478, %v3485
      %v3506 = vmul.f32 %v3479, %v3485
      %v3507 = vld [vmem:[%s4] sm:$0x1]
      %v3509 = vlaneseq
      %v3510 = vshrl.u32 %v3509, 7
      %v3511 = vsub.s32 0, %v3510
      %v3512 = vrot.slane %v3507, %v3511
      %v3514 = vadd.f32 %v3487, %v3512
      %v3515 = vadd.f32 %v3488, %v3512
      %v3516 = vadd.f32 %v3489, %v3512
      %v3517 = vadd.f32 %v3490, %v3512
      %v3518 = vadd.f32 %v3491, %v3512
      %v3519 = vadd.f32 %v3492, %v3512
      %v3520 = vadd.f32 %v3493, %v3512
      %v3521 = vadd.f32 %v3494, %v3512
      %v3522 = vadd.f32 %v3495, %v3512
      %v3523 = vadd.f32 %v3496, %v3512
      %v3524 = vadd.f32 %v3497, %v3512
      %v3525 = vadd.f32 %v3498, %v3512
      %v3526 = vadd.f32 %v3499, %v3512
      %v3527 = vadd.f32 %v3500, %v3512
      %v3528 = vadd.f32 %v3501, %v3512
      %v3529 = vadd.f32 %v3502, %v3512
      %v3530 = vadd.f32 %v3503, %v3512
      %v3531 = vadd.f32 %v3504, %v3512
      %v3532 = vadd.f32 %v3505, %v3512
      %v3533 = vadd.f32 %v3506, %v3512
      %v3534 = vmax.f32 %v3514, 0.0
      %v3535 = vmax.f32 %v3515, 0.0
      %v3536 = vmax.f32 %v3516, 0.0
      %v3537 = vmax.f32 %v3517, 0.0
      %v3538 = vmax.f32 %v3518, 0.0
      %v3539 = vmax.f32 %v3519, 0.0
      %v3540 = vmax.f32 %v3520, 0.0
      %v3541 = vmax.f32 %v3521, 0.0
      %v3542 = vmax.f32 %v3522, 0.0
      %v3543 = vmax.f32 %v3523, 0.0
      %v3544 = vmax.f32 %v3524, 0.0
      %v3545 = vmax.f32 %v3525, 0.0
      %v3546 = vmax.f32 %v3526, 0.0
      %v3547 = vmax.f32 %v3527, 0.0
      %v3548 = vmax.f32 %v3528, 0.0
      %v3549 = vmax.f32 %v3529, 0.0
      %v3550 = vmax.f32 %v3530, 0.0
      %v3551 = vmax.f32 %v3531, 0.0
      %v3552 = vmax.f32 %v3532, 0.0
      %v3553 = vmax.f32 %v3533, 0.0
      %v3554 = vpack.c.bf16 %v3535, %v3534
      %v3555 = vpack.c.bf16 %v3537, %v3536
      %v3556 = vpack.c.bf16 %v3539, %v3538
      %v3557 = vpack.c.bf16 %v3541, %v3540
      %v3558 = vpack.c.bf16 %v3543, %v3542
      %v3559 = vpack.c.bf16 %v3545, %v3544
      %v3560 = vpack.c.bf16 %v3547, %v3546
      %v3561 = vpack.c.bf16 %v3549, %v3548
      %v3562 = vpack.c.bf16 %v3551, %v3550
      %v3563 = vpack.c.bf16 %v3553, %v3552
      %v3574 = vunpack.c.l.b16 %v3554
      %v3575 = vunpack.c.h.b16 %v3554
      %v3576 = vunpack.c.l.b16 %v3555
      %v3577 = vunpack.c.h.b16 %v3555
      %v3578 = vunpack.c.l.b16 %v3556
      %v3579 = vunpack.c.h.b16 %v3556
      %v3580 = vunpack.c.l.b16 %v3557
      %v3581 = vunpack.c.h.b16 %v3557
      %v3582 = vunpack.c.l.b16 %v3558
      %v3583 = vunpack.c.h.b16 %v3558
      %v3584 = vunpack.c.l.b16 %v3559
      %v3585 = vunpack.c.h.b16 %v3559
      %v3586 = vunpack.c.l.b16 %v3560
      %v3587 = vunpack.c.h.b16 %v3560
      %v3588 = vunpack.c.l.b16 %v3561
      %v3589 = vunpack.c.h.b16 %v3561
      %v3590 = vunpack.c.l.b16 %v3562
      %v3591 = vunpack.c.h.b16 %v3562
      %v3592 = vunpack.c.l.b16 %v3563
      %v3593 = vunpack.c.h.b16 %v3563
      %v3594 = vpack.c.b16 %v3574, %v3574
      %v3595 = vpack.c.b16 %v3575, %v3575
      %v3596 = vpack.c.b16 %v3576, %v3576
      %v3597 = vpack.c.b16 %v3577, %v3577
      %v3598 = vpack.c.b16 %v3578, %v3578
      %v3599 = vpack.c.b16 %v3579, %v3579
      %v3600 = vpack.c.b16 %v3580, %v3580
      %v3601 = vpack.c.b16 %v3581, %v3581
      %v3602 = vpack.c.b16 %v3582, %v3582
      %v3603 = vpack.c.b16 %v3583, %v3583
      %v3604 = vpack.c.b16 %v3584, %v3584
      %v3605 = vpack.c.b16 %v3585, %v3585
      %v3606 = vpack.c.b16 %v3586, %v3586
      %v3607 = vpack.c.b16 %v3587, %v3587
      %v3608 = vpack.c.b16 %v3588, %v3588
      %v3609 = vpack.c.b16 %v3589, %v3589
      %v3610 = vpack.c.b16 %v3590, %v3590
      %v3611 = vpack.c.b16 %v3591, %v3591
      %v3612 = vpack.c.b16 %v3592, %v3592
      %v3613 = vpack.c.b16 %v3593, %v3593
      %vm3614 = vsmask.f32 256
      %vm3615 = vsmask.f32 4368
      %vm3616 = vmor %vm3614, %vm3615
      %v3618 = vshrl.u32 %v3594, 16
      %v3620 = vrot.slane %v3618, 7
      %v3621 = vshll.u32 %v3594, 16
      %v3623 = vor.u32 %v3620, %v3621
      %v3624 = vrot.slane %v3620, 4
      %v3626 = vshrl.u32 %v3595, 16
      %v3628 = vrot.slane %v3626, 7
      %v3629 = vshll.u32 %v3595, 16
      %v3631 = vor.u32 %v3628, %v3629
      %v3632 = vsel %vm3616, %v3624, %v3631
      %v3633 = vrot.slane %v3628, 4
      %v3635 = vshrl.u32 %v3596, 16
      %v3637 = vrot.slane %v3635, 7
      %v3638 = vshll.u32 %v3596, 16
      %v3640 = vor.u32 %v3637, %v3638
      %v3641 = vrot.slane %v3637, 4
      %v3643 = vshrl.u32 %v3597, 16
      %v3645 = vrot.slane %v3643, 7
      %v3646 = vshll.u32 %v3597, 16
      %v3648 = vor.u32 %v3645, %v3646
      %v3649 = vsel %vm3616, %v3641, %v3648
      %v3650 = vrot.slane %v3645, 4
      %v3652 = vshrl.u32 %v3598, 16
      %v3654 = vrot.slane %v3652, 7
      %v3655 = vshll.u32 %v3598, 16
      %v3657 = vor.u32 %v3654, %v3655
      %v3658 = vrot.slane %v3654, 4
      %v3660 = vshrl.u32 %v3599, 16
      %v3662 = vrot.slane %v3660, 7
      %v3663 = vshll.u32 %v3599, 16
      %v3665 = vor.u32 %v3662, %v3663
      %v3666 = vsel %vm3616, %v3658, %v3665
      %v3667 = vrot.slane %v3662, 4
      %v3669 = vshrl.u32 %v3600, 16
      %v3671 = vrot.slane %v3669, 7
      %v3672 = vshll.u32 %v3600, 16
      %v3674 = vor.u32 %v3671, %v3672
      %v3675 = vrot.slane %v3671, 4
      %v3677 = vshrl.u32 %v3601, 16
      %v3679 = vrot.slane %v3677, 7
      %v3680 = vshll.u32 %v3601, 16
      %v3682 = vor.u32 %v3679, %v3680
      %v3683 = vsel %vm3616, %v3675, %v3682
      %v3684 = vrot.slane %v3679, 4
      %v3686 = vshrl.u32 %v3602, 16
      %v3688 = vrot.slane %v3686, 7
      %v3689 = vshll.u32 %v3602, 16
      %v3691 = vor.u32 %v3688, %v3689
      %v3692 = vrot.slane %v3688, 4
      %v3694 = vshrl.u32 %v3603, 16
      %v3696 = vrot.slane %v3694, 7
      %v3697 = vshll.u32 %v3603, 16
      %v3699 = vor.u32 %v3696, %v3697
      %v3700 = vsel %vm3616, %v3692, %v3699
      %v3701 = vrot.slane %v3696, 4
      %v3703 = vshrl.u32 %v3604, 16
      %v3705 = vrot.slane %v3703, 7
      %v3706 = vshll.u32 %v3604, 16
      %v3708 = vor.u32 %v3705, %v3706
      %v3709 = vrot.slane %v3705, 4
      %v3711 = vshrl.u32 %v3605, 16
      %v3713 = vrot.slane %v3711, 7
      %v3714 = vshll.u32 %v3605, 16
      %v3716 = vor.u32 %v3713, %v3714
      %v3717 = vsel %vm3616, %v3709, %v3716
      %v3718 = vrot.slane %v3713, 4
      %v3720 = vshrl.u32 %v3606, 16
      %v3722 = vrot.slane %v3720, 7
      %v3723 = vshll.u32 %v3606, 16
      %v3725 = vor.u32 %v3722, %v3723
      %v3726 = vrot.slane %v3722, 4
      %v3728 = vshrl.u32 %v3607, 16
      %v3730 = vrot.slane %v3728, 7
      %v3731 = vshll.u32 %v3607, 16
      %v3733 = vor.u32 %v3730, %v3731
      %v3734 = vsel %vm3616, %v3726, %v3733
      %v3735 = vrot.slane %v3730, 4
      %v3737 = vshrl.u32 %v3608, 16
      %v3739 = vrot.slane %v3737, 7
      %v3740 = vshll.u32 %v3608, 16
      %v3742 = vor.u32 %v3739, %v3740
      %v3743 = vrot.slane %v3739, 4
      %v3745 = vshrl.u32 %v3609, 16
      %v3747 = vrot.slane %v3745, 7
      %v3748 = vshll.u32 %v3609, 16
      %v3750 = vor.u32 %v3747, %v3748
      %v3751 = vsel %vm3616, %v3743, %v3750
      %v3752 = vrot.slane %v3747, 4
      %v3754 = vshrl.u32 %v3610, 16
      %v3756 = vrot.slane %v3754, 7
      %v3757 = vshll.u32 %v3610, 16
      %v3759 = vor.u32 %v3756, %v3757
      %v3760 = vrot.slane %v3756, 4
      %v3762 = vshrl.u32 %v3611, 16
      %v3764 = vrot.slane %v3762, 7
      %v3765 = vshll.u32 %v3611, 16
      %v3767 = vor.u32 %v3764, %v3765
      %v3768 = vsel %vm3616, %v3760, %v3767
      %v3769 = vrot.slane %v3764, 4
      %v3771 = vshrl.u32 %v3612, 16
      %v3773 = vrot.slane %v3771, 7
      %v3774 = vshll.u32 %v3612, 16
      %v3776 = vor.u32 %v3773, %v3774
      %v3777 = vrot.slane %v3773, 4
      %v3779 = vshrl.u32 %v3613, 16
      %v3781 = vrot.slane %v3779, 7
      %v3782 = vshll.u32 %v3613, 16
      %v3784 = vor.u32 %v3781, %v3782
      %v3785 = vsel %vm3616, %v3777, %v3784
      %v3786 = vrot.slane %v3781, 4
      %vm3817 = vcmask 60416
      %vm3818 = vsmask.f32 7938
      %vm3819 = vmand %vm3817, %vm3818
      %v3820 = vld [vmem:[#allocation3] sm:$0xf]
      %v3821 = vsel %vm3819, %v3623, %v3820
      %3822 = vst [vmem:[#allocation3] sm:$0xf] %v3821
      %vm3823 = vcmask 60416
      %3824 = vst.msk [vmem:[#allocation3 + $0x4] sm:$0xf] %vm3823, %v3632
      %vm3825 = vcmask 57344
      %vm3826 = vmand %vm3825, %vm3614
      %v3827 = vld [vmem:[#allocation3 + $0x8] sm:$0x1]
      %v3828 = vsel %vm3826, %v3633, %v3827
      %3829 = vst [vmem:[#allocation3 + $0x8] sm:$0x1] %v3828
      %v3830 = vld [vmem:[#allocation3 + $0xc] sm:$0xf]
      %v3831 = vsel %vm3819, %v3640, %v3830
      %3832 = vst [vmem:[#allocation3 + $0xc] sm:$0xf] %v3831
      %3833 = vst.msk [vmem:[#allocation3 + $0x10] sm:$0xf] %vm3823, %v3649
      %v3834 = vld [vmem:[#allocation3 + $0x14] sm:$0x1]
      %v3835 = vsel %vm3826, %v3650, %v3834
      %3836 = vst [vmem:[#allocation3 + $0x14] sm:$0x1] %v3835
      %v3837 = vld [vmem:[#allocation3 + $0x18] sm:$0xf]
      %v3838 = vsel %vm3819, %v3657, %v3837
      %3839 = vst [vmem:[#allocation3 + $0x18] sm:$0xf] %v3838
      %3840 = vst.msk [vmem:[#allocation3 + $0x1c] sm:$0xf] %vm3823, %v3666
      %v3841 = vld [vmem:[#allocation3 + $0x20] sm:$0x1]
      %v3842 = vsel %vm3826, %v3667, %v3841
      %3843 = vst [vmem:[#allocation3 + $0x20] sm:$0x1] %v3842
      %v3844 = vld [vmem:[#allocation3 + $0x24] sm:$0xf]
      %v3845 = vsel %vm3819, %v3674, %v3844
      %3846 = vst [vmem:[#allocation3 + $0x24] sm:$0xf] %v3845
      %3847 = vst.msk [vmem:[#allocation3 + $0x28] sm:$0xf] %vm3823, %v3683
      %v3848 = vld [vmem:[#allocation3 + $0x2c] sm:$0x1]
      %v3849 = vsel %vm3826, %v3684, %v3848
      %3850 = vst [vmem:[#allocation3 + $0x2c] sm:$0x1] %v3849
      %v3851 = vld [vmem:[#allocation3 + $0x30] sm:$0xf]
      %v3852 = vsel %vm3819, %v3691, %v3851
      %3853 = vst [vmem:[#allocation3 + $0x30] sm:$0xf] %v3852
      %3854 = vst.msk [vmem:[#allocation3 + $0x34] sm:$0xf] %vm3823, %v3700
      %v3855 = vld [vmem:[#allocation3 + $0x38] sm:$0x1]
      %v3856 = vsel %vm3826, %v3701, %v3855
      %3857 = vst [vmem:[#allocation3 + $0x38] sm:$0x1] %v3856
      %v3858 = vld [vmem:[#allocation3 + $0x3c] sm:$0xf]
      %v3859 = vsel %vm3819, %v3708, %v3858
      %3860 = vst [vmem:[#allocation3 + $0x3c] sm:$0xf] %v3859
      %3861 = vst.msk [vmem:[#allocation3 + $0x40] sm:$0xf] %vm3823, %v3717
      %v3862 = vld [vmem:[#allocation3 + $0x44] sm:$0x1]
      %v3863 = vsel %vm3826, %v3718, %v3862
      %3864 = vst [vmem:[#allocation3 + $0x44] sm:$0x1] %v3863
      %v3865 = vld [vmem:[#allocation3 + $0x48] sm:$0xf]
      %v3866 = vsel %vm3819, %v3725, %v3865
      %3867 = vst [vmem:[#allocation3 + $0x48] sm:$0xf] %v3866
      %3868 = vst.msk [vmem:[#allocation3 + $0x4c] sm:$0xf] %vm3823, %v3734
      %v3869 = vld [vmem:[#allocation3 + $0x50] sm:$0x1]
      %v3870 = vsel %vm3826, %v3735, %v3869
      %3871 = vst [vmem:[#allocation3 + $0x50] sm:$0x1] %v3870
      %v3872 = vld [vmem:[#allocation3 + $0x54] sm:$0xf]
      %v3873 = vsel %vm3819, %v3742, %v3872
      %3874 = vst [vmem:[#allocation3 + $0x54] sm:$0xf] %v3873
      %3875 = vst.msk [vmem:[#allocation3 + $0x58] sm:$0xf] %vm3823, %v3751
      %v3876 = vld [vmem:[#allocation3 + $0x5c] sm:$0x1]
      %v3877 = vsel %vm3826, %v3752, %v3876
      %3878 = vst [vmem:[#allocation3 + $0x5c] sm:$0x1] %v3877
      %v3879 = vld [vmem:[#allocation3 + $0x60] sm:$0xf]
      %v3880 = vsel %vm3819, %v3759, %v3879
      %3881 = vst [vmem:[#allocation3 + $0x60] sm:$0xf] %v3880
      %3882 = vst.msk [vmem:[#allocation3 + $0x64] sm:$0xf] %vm3823, %v3768
      %v3883 = vld [vmem:[#allocation3 + $0x68] sm:$0x1]
      %v3884 = vsel %vm3826, %v3769, %v3883
      %3885 = vst [vmem:[#allocation3 + $0x68] sm:$0x1] %v3884
      %v3886 = vld [vmem:[#allocation3 + $0x6c] sm:$0xf]
      %v3887 = vsel %vm3819, %v3776, %v3886
      %3888 = vst [vmem:[#allocation3 + $0x6c] sm:$0xf] %v3887
      %3889 = vst.msk [vmem:[#allocation3 + $0x70] sm:$0xf] %vm3823, %v3785
      %v3890 = vld [vmem:[#allocation3 + $0x74] sm:$0x1]
      %v3891 = vsel %vm3826, %v3786, %v3890
      %3892 = vst [vmem:[#allocation3 + $0x74] sm:$0x1] %v3891
      %v3893 = vld [vmem:[#allocation3] sm:$0x1]
      %v3894 = vsel %vm3826, 0, %v3893
      %3895 = vst [vmem:[#allocation3] sm:$0x1] %v3894
      %v3896 = vld [vmem:[#allocation3 + $0xc] sm:$0x1]
      %v3897 = vsel %vm3826, 0, %v3896
      %3898 = vst [vmem:[#allocation3 + $0xc] sm:$0x1] %v3897
      %v3899 = vld [vmem:[#allocation3 + $0x18] sm:$0x1]
      %v3900 = vsel %vm3826, 0, %v3899
      %3901 = vst [vmem:[#allocation3 + $0x18] sm:$0x1] %v3900
      %v3902 = vld [vmem:[#allocation3 + $0x24] sm:$0x1]
      %v3903 = vsel %vm3826, 0, %v3902
      %3904 = vst [vmem:[#allocation3 + $0x24] sm:$0x1] %v3903
      %v3905 = vld [vmem:[#allocation3 + $0x30] sm:$0x1]
      %v3906 = vsel %vm3826, 0, %v3905
      %3907 = vst [vmem:[#allocation3 + $0x30] sm:$0x1] %v3906
      %v3908 = vld [vmem:[#allocation3 + $0x3c] sm:$0x1]
      %v3909 = vsel %vm3826, 0, %v3908
      %3910 = vst [vmem:[#allocation3 + $0x3c] sm:$0x1] %v3909
      %v3911 = vld [vmem:[#allocation3 + $0x48] sm:$0x1]
      %v3912 = vsel %vm3826, 0, %v3911
      %3913 = vst [vmem:[#allocation3 + $0x48] sm:$0x1] %v3912
      %v3914 = vld [vmem:[#allocation3 + $0x54] sm:$0x1]
      %v3915 = vsel %vm3826, 0, %v3914
      %3916 = vst [vmem:[#allocation3 + $0x54] sm:$0x1] %v3915
      %v3917 = vld [vmem:[#allocation3 + $0x60] sm:$0x1]
      %v3918 = vsel %vm3826, 0, %v3917
      %3919 = vst [vmem:[#allocation3 + $0x60] sm:$0x1] %v3918
      %v3920 = vld [vmem:[#allocation3 + $0x6c] sm:$0x1]
      %v3921 = vsel %vm3826, 0, %v3920
      %3922 = vst [vmem:[#allocation3 + $0x6c] sm:$0x1] %v3921
      %vm3923 = vmand %vm3825, %vm3818
      %v3924 = vld [vmem:[#allocation3 + $0x8] sm:$0x1]
      %v3925 = vsel %vm3923, 0, %v3924
      %3926 = vst [vmem:[#allocation3 + $0x8] sm:$0x1] %v3925
      %v3927 = vld [vmem:[#allocation3 + $0x14] sm:$0x1]
      %v3928 = vsel %vm3923, 0, %v3927
      %3929 = vst [vmem:[#allocation3 + $0x14] sm:$0x1] %v3928
      %v3930 = vld [vmem:[#allocation3 + $0x20] sm:$0x1]
      %v3931 = vsel %vm3923, 0, %v3930
      %3932 = vst [vmem:[#allocation3 + $0x20] sm:$0x1] %v3931
      %v3933 = vld [vmem:[#allocation3 + $0x2c] sm:$0x1]
      %v3934 = vsel %vm3923, 0, %v3933
      %3935 = vst [vmem:[#allocation3 + $0x2c] sm:$0x1] %v3934
      %v3936 = vld [vmem:[#allocation3 + $0x38] sm:$0x1]
      %v3937 = vsel %vm3923, 0, %v3936
      %3938 = vst [vmem:[#allocation3 + $0x38] sm:$0x1] %v3937
      %v3939 = vld [vmem:[#allocation3 + $0x44] sm:$0x1]
      %v3940 = vsel %vm3923, 0, %v3939
      %3941 = vst [vmem:[#allocation3 + $0x44] sm:$0x1] %v3940
      %v3942 = vld [vmem:[#allocation3 + $0x50] sm:$0x1]
      %v3943 = vsel %vm3923, 0, %v3942
      %3944 = vst [vmem:[#allocation3 + $0x50] sm:$0x1] %v3943
      %v3945 = vld [vmem:[#allocation3 + $0x5c] sm:$0x1]
      %v3946 = vsel %vm3923, 0, %v3945
      %3947 = vst [vmem:[#allocation3 + $0x5c] sm:$0x1] %v3946
      %v3948 = vld [vmem:[#allocation3 + $0x68] sm:$0x1]
      %v3949 = vsel %vm3923, 0, %v3948
      %3950 = vst [vmem:[#allocation3 + $0x68] sm:$0x1] %v3949
      %v3951 = vld [vmem:[#allocation3 + $0x74] sm:$0x1]
      %v3952 = vsel %vm3923, 0, %v3951
      %3953 = vst [vmem:[#allocation3 + $0x74] sm:$0x1] %v3952
      %p3954 = scmp.eq.s32.totalorder %s24, 0
      // Predicated region
      $region53: #{_lambda_.1} parent=51 // pred_check
        %p3955 = pneg %p3954
      $region54: #{_lambda_.1} parent=51 // pred_check_branch
        %3957 = sbr.rel (%p3955) target = $region56
      $region55: #{_lambda_.1} parent=51 // pred_region
        %3958 = vst.msk [vmem:[#allocation3] sm:$0xf] %vm3823, 0
        %3959 = vst.msk [vmem:[#allocation3 + $0x4] sm:$0xf] %vm3823, 0
        %vm3960 = vcmask 57344
        %3961 = vst.msk [vmem:[#allocation3 + $0x8] sm:$0x1] %vm3960, 0
      $region56: #{_lambda_.1} parent=51 // pred_fallthru
        _
      %p3962 = scmp.eq.s32.totalorder %s24, 1
      // Predicated region
      $region57: #{_lambda_.1} parent=51 // pred_check
        %p3963 = pneg %p3962
      $region58: #{_lambda_.1} parent=51 // pred_check_branch
        %3965 = sbr.rel (%p3963) target = $region60
      $region59: #{_lambda_.1} parent=51 // pred_region
        %s3966 = scalar_lea.vmem [#allocation3], 108
        %3967 = vst.msk [vmem:[%s3966] sm:$0xf] %vm3823, 0
        %3968 = vst.msk [vmem:[%s3966 + $0x4] sm:$0xf] %vm3823, 0
        %vm3969 = vcmask 57344
        %3970 = vst.msk [vmem:[%s3966 + $0x8] sm:$0x1] %vm3969, 0
      $region60: #{_lambda_.1} parent=51 // pred_fallthru
        _
      %v3971 = vld [vmem:[#allocation3] sm:$0xf]
      %v3972 = vld [vmem:[#allocation3 + $0x4] sm:$0xf]
      %v3973 = vld [vmem:[#allocation3 + $0xc] sm:$0xf]
      %v3974 = vld [vmem:[#allocation3 + $0x10] sm:$0xf]
      %v3975 = vld [vmem:[#allocation3 + $0x18] sm:$0xf]
      %v3976 = vld [vmem:[#allocation3 + $0x1c] sm:$0xf]
      %v3977 = vld [vmem:[#allocation3 + $0x24] sm:$0xf]
      %v3978 = vld [vmem:[#allocation3 + $0x28] sm:$0xf]
      %v3979 = vld [vmem:[#allocation3 + $0x30] sm:$0xf]
      %v3980 = vld [vmem:[#allocation3 + $0x34] sm:$0xf]
      %v3981 = vld [vmem:[#allocation3 + $0x3c] sm:$0xf]
      %v3982 = vld [vmem:[#allocation3 + $0x40] sm:$0xf]
      %v3983 = vld [vmem:[#allocation3 + $0x48] sm:$0xf]
      %v3984 = vld [vmem:[#allocation3 + $0x4c] sm:$0xf]
      %v3985 = vld [vmem:[#allocation3 + $0x54] sm:$0xf]
      %v3986 = vld [vmem:[#allocation3 + $0x58] sm:$0xf]
      %v3987 = vld [vmem:[%s5] sm:$0xf]
      %v3988 = vld [vmem:[#allocation3 + $0x8] sm:$0x1]
      %v3989 = vld [vmem:[#allocation3 + $0x14] sm:$0x1]
      %v3990 = vld [vmem:[#allocation3 + $0x20] sm:$0x1]
      %v3991 = vld [vmem:[#allocation3 + $0x2c] sm:$0x1]
      %v3992 = vld [vmem:[#allocation3 + $0x38] sm:$0x1]
      %v3993 = vld [vmem:[#allocation3 + $0x44] sm:$0x1]
      %v3994 = vld [vmem:[#allocation3 + $0x50] sm:$0x1]
      %v3995 = vld [vmem:[#allocation3 + $0x5c] sm:$0x1]
      %v3997 = vshrl.u32 %v3971, 16
      %v3999 = vrot.slane %v3997, 4
      %v4000 = vshll.u32 %v3971, 16
      %v4002 = vrot.slane %v4000, 5
      %v4003 = vor.u32 %v3999, %v4002
      %v4004 = vrot.slane %v4003, 4
      %v4006 = vshll.u32 %v3972, 16
      %v4008 = vrot.slane %v4006, 5
      %v4009 = vsel %vm532, %v4004, %v4008
      %v4010 = vshrl.u32 %v3972, 16
      %v4012 = vrot.slane %v4010, 4
      %v4013 = vor.u32 %v4012, %v4008
      %v4014 = vrot.slane %v4013, 4
      %v4016 = vshll.u32 %v3988, 16
      %v4018 = vrot.slane %v4016, 5
      %v4019 = vsel %vm532, %v4014, %v4018
      %v4021 = vshrl.u32 %v3973, 16
      %v4023 = vrot.slane %v4021, 4
      %v4024 = vshll.u32 %v3973, 16
      %v4026 = vrot.slane %v4024, 5
      %v4027 = vor.u32 %v4023, %v4026
      %v4028 = vrot.slane %v4027, 4
      %v4030 = vshll.u32 %v3974, 16
      %v4032 = vrot.slane %v4030, 5
      %v4033 = vsel %vm532, %v4028, %v4032
      %v4034 = vshrl.u32 %v3974, 16
      %v4036 = vrot.slane %v4034, 4
      %v4037 = vor.u32 %v4036, %v4032
      %v4038 = vrot.slane %v4037, 4
      %v4040 = vshll.u32 %v3989, 16
      %v4042 = vrot.slane %v4040, 5
      %v4043 = vsel %vm532, %v4038, %v4042
      %v4045 = vshrl.u32 %v3975, 16
      %v4047 = vrot.slane %v4045, 4
      %v4048 = vshll.u32 %v3975, 16
      %v4050 = vrot.slane %v4048, 5
      %v4051 = vor.u32 %v4047, %v4050
      %v4052 = vrot.slane %v4051, 4
      %v4054 = vshll.u32 %v3976, 16
      %v4056 = vrot.slane %v4054, 5
      %v4057 = vsel %vm532, %v4052, %v4056
      %v4058 = vshrl.u32 %v3976, 16
      %v4060 = vrot.slane %v4058, 4
      %v4061 = vor.u32 %v4060, %v4056
      %v4062 = vrot.slane %v4061, 4
      %v4064 = vshll.u32 %v3990, 16
      %v4066 = vrot.slane %v4064, 5
      %v4067 = vsel %vm532, %v4062, %v4066
      %v4069 = vshrl.u32 %v3977, 16
      %v4071 = vrot.slane %v4069, 4
      %v4072 = vshll.u32 %v3977, 16
      %v4074 = vrot.slane %v4072, 5
      %v4075 = vor.u32 %v4071, %v4074
      %v4076 = vrot.slane %v4075, 4
      %v4078 = vshll.u32 %v3978, 16
      %v4080 = vrot.slane %v4078, 5
      %v4081 = vsel %vm532, %v4076, %v4080
      %v4082 = vshrl.u32 %v3978, 16
      %v4084 = vrot.slane %v4082, 4
      %v4085 = vor.u32 %v4084, %v4080
      %v4086 = vrot.slane %v4085, 4
      %v4088 = vshll.u32 %v3991, 16
      %v4090 = vrot.slane %v4088, 5
      %v4091 = vsel %vm532, %v4086, %v4090
      %v4093 = vshrl.u32 %v3979, 16
      %v4095 = vrot.slane %v4093, 4
      %v4096 = vshll.u32 %v3979, 16
      %v4098 = vrot.slane %v4096, 5
      %v4099 = vor.u32 %v4095, %v4098
      %v4100 = vrot.slane %v4099, 4
      %v4102 = vshll.u32 %v3980, 16
      %v4104 = vrot.slane %v4102, 5
      %v4105 = vsel %vm532, %v4100, %v4104
      %v4106 = vshrl.u32 %v3980, 16
      %v4108 = vrot.slane %v4106, 4
      %v4109 = vor.u32 %v4108, %v4104
      %v4110 = vrot.slane %v4109, 4
      %v4112 = vshll.u32 %v3992, 16
      %v4114 = vrot.slane %v4112, 5
      %v4115 = vsel %vm532, %v4110, %v4114
      %v4117 = vshrl.u32 %v3981, 16
      %v4119 = vrot.slane %v4117, 4
      %v4120 = vshll.u32 %v3981, 16
      %v4122 = vrot.slane %v4120, 5
      %v4123 = vor.u32 %v4119, %v4122
      %v4124 = vrot.slane %v4123, 4
      %v4126 = vshll.u32 %v3982, 16
      %v4128 = vrot.slane %v4126, 5
      %v4129 = vsel %vm532, %v4124, %v4128
      %v4130 = vshrl.u32 %v3982, 16
      %v4132 = vrot.slane %v4130, 4
      %v4133 = vor.u32 %v4132, %v4128
      %v4134 = vrot.slane %v4133, 4
      %v4136 = vshll.u32 %v3993, 16
      %v4138 = vrot.slane %v4136, 5
      %v4139 = vsel %vm532, %v4134, %v4138
      %v4141 = vshrl.u32 %v3983, 16
      %v4143 = vrot.slane %v4141, 4
      %v4144 = vshll.u32 %v3983, 16
      %v4146 = vrot.slane %v4144, 5
      %v4147 = vor.u32 %v4143, %v4146
      %v4148 = vrot.slane %v4147, 4
      %v4150 = vshll.u32 %v3984, 16
      %v4152 = vrot.slane %v4150, 5
      %v4153 = vsel %vm532, %v4148, %v4152
      %v4154 = vshrl.u32 %v3984, 16
      %v4156 = vrot.slane %v4154, 4
      %v4157 = vor.u32 %v4156, %v4152
      %v4158 = vrot.slane %v4157, 4
      %v4160 = vshll.u32 %v3994, 16
      %v4162 = vrot.slane %v4160, 5
      %v4163 = vsel %vm532, %v4158, %v4162
      %v4165 = vshrl.u32 %v3985, 16
      %v4167 = vrot.slane %v4165, 4
      %v4168 = vshll.u32 %v3985, 16
      %v4170 = vrot.slane %v4168, 5
      %v4171 = vor.u32 %v4167, %v4170
      %v4172 = vrot.slane %v4171, 4
      %v4174 = vshll.u32 %v3986, 16
      %v4176 = vrot.slane %v4174, 5
      %v4177 = vsel %vm532, %v4172, %v4176
      %v4178 = vshrl.u32 %v3986, 16
      %v4180 = vrot.slane %v4178, 4
      %v4181 = vor.u32 %v4180, %v4176
      %v4182 = vrot.slane %v4181, 4
      %v4184 = vshll.u32 %v3995, 16
      %v4186 = vrot.slane %v4184, 5
      %v4187 = vsel %vm532, %v4182, %v4186
      %s4188 = scalar_lea.vmem %s5, 4
      %v4189 = vld [vmem:[%s4188] sm:$0xf]
      %v4190 = vunpack.c.l.b16 %v4009
      %v4191 = vunpack.c.l.b16 %v4019
      %v4192 = vunpack.c.l.b16 %v4033
      %v4193 = vunpack.c.l.b16 %v4043
      %v4194 = vunpack.c.l.b16 %v4057
      %v4195 = vunpack.c.l.b16 %v4067
      %v4196 = vunpack.c.l.b16 %v4081
      %v4197 = vunpack.c.l.b16 %v4091
      %v4198 = vunpack.c.l.b16 %v4105
      %v4199 = vunpack.c.l.b16 %v4115
      %v4200 = vunpack.c.l.b16 %v4129
      %v4201 = vunpack.c.l.b16 %v4139
      %v4202 = vunpack.c.l.b16 %v4153
      %v4203 = vunpack.c.l.b16 %v4163
      %v4204 = vunpack.c.l.b16 %v4177
      %v4205 = vunpack.c.l.b16 %v4187
      %v4206 = vpack.c.b16 %v4191, %v4190
      %v4207 = vpack.c.b16 %v4193, %v4192
      %v4208 = vpack.c.b16 %v4195, %v4194
      %v4209 = vpack.c.b16 %v4197, %v4196
      %v4210 = vpack.c.b16 %v4199, %v4198
      %v4211 = vpack.c.b16 %v4201, %v4200
      %v4212 = vpack.c.b16 %v4203, %v4202
      %v4213 = vpack.c.b16 %v4205, %v4204
      %vm4214 = vcmask 64512
      %v4216 = vsel %vm4214, %v4206, 0
      %v4219 = vsel %vm4214, %v4207, 0
      %v4222 = vsel %vm4214, %v4208, 0
      %v4225 = vsel %vm4214, %v4209, 0
      %v4228 = vsel %vm4214, %v4210, 0
      %v4231 = vsel %vm4214, %v4211, 0
      %v4234 = vsel %vm4214, %v4212, 0
      %v4237 = vsel %vm4214, %v4213, 0
      %vm4239 = vcmask 1043456
      %v4241 = vsel %vm4239, %v4189, 0
      %4243 = vmatprep.subr.bf16.mxu0 0
      %4244 = vmatpush1.bf16.msra.mxu0 %v4241
      %4245 = vmatprep.subr.bf16.mxu0 0
      %4246 = vmatpush1.bf16.msra.mxu0 0
      %4247 = vmatprep.subr.bf16.mxu0 0
      %4248 = vmatpush1.bf16.msra.mxu0 0
      %4249 = vmatprep.subr.bf16.mxu0 0
      %4250 = vmatpush1.bf16.msra.mxu0 0
      %4251 = vmatprep.subr.bf16.mxu0 0
      %4252 = vmatpush1.bf16.msra.mxu0 0
      %4253 = vmatprep.subr.bf16.mxu0 0
      %4254 = vmatpush1.bf16.msra.mxu0 0
      %4255 = vmatprep.subr.bf16.mxu0 0
      %4256 = vmatpush1.bf16.msra.mxu0 0
      %4257 = vmatprep.subr.bf16.mxu0 0
      %4258 = vmatpush1.bf16.msra.mxu0 0
      %4259 = vmatprep.subr.bf16.mxu0 0
      %4260 = vmatpush1.bf16.msra.mxu0 0
      %4261 = vmatprep.subr.bf16.mxu0 0
      %4262 = vmatpush1.bf16.msra.mxu0 0
      %4263 = vmatprep.subr.bf16.mxu0 0
      %4264 = vmatpush1.bf16.msra.mxu0 0
      %4265 = vmatprep.subr.bf16.mxu0 0
      %4266 = vmatpush1.bf16.msra.mxu0 0
      %4267 = vmatprep.subr.bf16.mxu0 0
      %4268 = vmatpush1.bf16.msra.mxu0 0
      %4269 = vmatprep.subr.bf16.mxu0 0
      %4270 = vmatpush1.bf16.msra.mxu0 0
      %4271 = vmatprep.subr.bf16.mxu0 0
      %4272 = vmatpush1.bf16.msra.mxu0 0
      %4273 = vmatprep.subr.bf16.mxu0 0
      %4274 = vmatpush1.bf16.msra.mxu0 0
      %4275 = vmatprep.mubr.bf16.mxu0 0
      %4276 = vmatmul.mubr.bf16.gmra.mrb[0].mxu0 %v4216
      %v4277 = vpop.f32.mrb[0].mxu0
      %v4278 = vadd.f32 0.0, %v4277
      %v4279 = vpop.f32.mrb[0].mxu0
      %v4280 = vpop.f32.mrb[0].mxu0
      %v4281 = vadd.f32 0.0, %v4280
      %v4282 = vpop.f32.mrb[0].mxu0
      %4283 = vmatprep.mubr.bf16.mxu0 0
      %4284 = vmatmul.mubr.bf16.gmra.mrb[0].mxu0 %v4219
      %v4285 = vpop.f32.mrb[0].mxu0
      %v4286 = vadd.f32 0.0, %v4285
      %v4287 = vpop.f32.mrb[0].mxu0
      %v4288 = vpop.f32.mrb[0].mxu0
      %v4289 = vadd.f32 0.0, %v4288
      %v4290 = vpop.f32.mrb[0].mxu0
      %4291 = vmatprep.mubr.bf16.mxu0 0
      %4292 = vmatmul.mubr.bf16.gmra.mrb[0].mxu0 %v4222
      %v4293 = vpop.f32.mrb[0].mxu0
      %v4294 = vadd.f32 0.0, %v4293
      %v4295 = vpop.f32.mrb[0].mxu0
      %v4296 = vpop.f32.mrb[0].mxu0
      %v4297 = vadd.f32 0.0, %v4296
      %v4298 = vpop.f32.mrb[0].mxu0
      %4299 = vmatprep.mubr.bf16.mxu0 0
      %4300 = vmatmul.mubr.bf16.gmra.mrb[0].mxu0 %v4225
      %v4301 = vpop.f32.mrb[0].mxu0
      %v4302 = vadd.f32 0.0, %v4301
      %v4303 = vpop.f32.mrb[0].mxu0
      %v4304 = vpop.f32.mrb[0].mxu0
      %v4305 = vadd.f32 0.0, %v4304
      %v4306 = vpop.f32.mrb[0].mxu0
      %4307 = vmatprep.mubr.bf16.mxu0 0
      %4308 = vmatmul.mubr.bf16.gmra.mrb[0].mxu0 %v4228
      %v4309 = vpop.f32.mrb[0].mxu0
      %v4310 = vadd.f32 0.0, %v4309
      %v4311 = vpop.f32.mrb[0].mxu0
      %v4312 = vpop.f32.mrb[0].mxu0
      %v4313 = vadd.f32 0.0, %v4312
      %v4314 = vpop.f32.mrb[0].mxu0
      %4315 = vmatprep.mubr.bf16.mxu0 0
      %4316 = vmatmul.mubr.bf16.gmra.mrb[0].mxu0 %v4231
      %v4317 = vpop.f32.mrb[0].mxu0
      %v4318 = vadd.f32 0.0, %v4317
      %v4319 = vpop.f32.mrb[0].mxu0
      %v4320 = vpop.f32.mrb[0].mxu0
      %v4321 = vadd.f32 0.0, %v4320
      %v4322 = vpop.f32.mrb[0].mxu0
      %4323 = vmatprep.mubr.bf16.mxu0 0
      %4324 = vmatmul.mubr.bf16.gmra.mrb[0].mxu0 %v4234
      %v4325 = vpop.f32.mrb[0].mxu0
      %v4326 = vadd.f32 0.0, %v4325
      %v4327 = vpop.f32.mrb[0].mxu0
      %v4328 = vpop.f32.mrb[0].mxu0
      %v4329 = vadd.f32 0.0, %v4328
      %v4330 = vpop.f32.mrb[0].mxu0
      %4331 = vmatprep.mubr.bf16.mxu0 0
      %4332 = vmatmul.mubr.bf16.gmra.mrb[0].mxu0 %v4237
      %v4333 = vpop.f32.mrb[0].mxu0
      %v4334 = vadd.f32 0.0, %v4333
      %v4335 = vpop.f32.mrb[0].mxu0
      %v4336 = vpop.f32.mrb[0].mxu0
      %v4337 = vadd.f32 0.0, %v4336
      %v4338 = vpop.f32.mrb[0].mxu0
      %4339 = vdwg.mxu0
      %v4356 = vunpack.c.l.b16 %v3971
      %v4357 = vunpack.c.l.b16 %v3972
      %v4358 = vunpack.c.l.b16 %v3973
      %v4359 = vunpack.c.l.b16 %v3974
      %v4360 = vunpack.c.l.b16 %v3975
      %v4361 = vunpack.c.l.b16 %v3976
      %v4362 = vunpack.c.l.b16 %v3977
      %v4363 = vunpack.c.l.b16 %v3978
      %v4364 = vunpack.c.l.b16 %v3979
      %v4365 = vunpack.c.l.b16 %v3980
      %v4366 = vunpack.c.l.b16 %v3981
      %v4367 = vunpack.c.l.b16 %v3982
      %v4368 = vunpack.c.l.b16 %v3983
      %v4369 = vunpack.c.l.b16 %v3984
      %v4370 = vunpack.c.l.b16 %v3985
      %v4371 = vunpack.c.l.b16 %v3986
      %v4372 = vpack.c.b16 %v4357, %v4356
      %v4373 = vpack.c.b16 %v4359, %v4358
      %v4374 = vpack.c.b16 %v4361, %v4360
      %v4375 = vpack.c.b16 %v4363, %v4362
      %v4376 = vpack.c.b16 %v4365, %v4364
      %v4377 = vpack.c.b16 %v4367, %v4366
      %v4378 = vpack.c.b16 %v4369, %v4368
      %v4379 = vpack.c.b16 %v4371, %v4370
      %v4381 = vsel %vm4214, %v4372, 0
      %v4384 = vsel %vm4214, %v4373, 0
      %v4387 = vsel %vm4214, %v4374, 0
      %v4390 = vsel %vm4214, %v4375, 0
      %v4393 = vsel %vm4214, %v4376, 0
      %v4396 = vsel %vm4214, %v4377, 0
      %v4399 = vsel %vm4214, %v4378, 0
      %v4402 = vsel %vm4214, %v4379, 0
      %v4405 = vsel %vm4239, %v3987, 0
      %4407 = vmatprep.subr.bf16.mxu0 0
      %4408 = vmatpush1.bf16.msra.mxu0 %v4405
      %4409 = vmatprep.subr.bf16.mxu0 0
      %4410 = vmatpush1.bf16.msra.mxu0 0
      %4411 = vmatprep.subr.bf16.mxu0 0
      %4412 = vmatpush1.bf16.msra.mxu0 0
      %4413 = vmatprep.subr.bf16.mxu0 0
      %4414 = vmatpush1.bf16.msra.mxu0 0
      %4415 = vmatprep.subr.bf16.mxu0 0
      %4416 = vmatpush1.bf16.msra.mxu0 0
      %4417 = vmatprep.subr.bf16.mxu0 0
      %4418 = vmatpush1.bf16.msra.mxu0 0
      %4419 = vmatprep.subr.bf16.mxu0 0
      %4420 = vmatpush1.bf16.msra.mxu0 0
      %4421 = vmatprep.subr.bf16.mxu0 0
      %4422 = vmatpush1.bf16.msra.mxu0 0
      %4423 = vmatprep.subr.bf16.mxu0 0
      %4424 = vmatpush1.bf16.msra.mxu0 0
      %4425 = vmatprep.subr.bf16.mxu0 0
      %4426 = vmatpush1.bf16.msra.mxu0 0
      %4427 = vmatprep.subr.bf16.mxu0 0
      %4428 = vmatpush1.bf16.msra.mxu0 0
      %4429 = vmatprep.subr.bf16.mxu0 0
      %4430 = vmatpush1.bf16.msra.mxu0 0
      %4431 = vmatprep.subr.bf16.mxu0 0
      %4432 = vmatpush1.bf16.msra.mxu0 0
      %4433 = vmatprep.subr.bf16.mxu0 0
      %4434 = vmatpush1.bf16.msra.mxu0 0
      %4435 = vmatprep.subr.bf16.mxu0 0
      %4436 = vmatpush1.bf16.msra.mxu0 0
      %4437 = vmatprep.subr.bf16.mxu0 0
      %4438 = vmatpush1.bf16.msra.mxu0 0
      %4439 = vmatprep.mubr.bf16.mxu0 0
      %4440 = vmatmul.mubr.bf16.gmra.mrb[0].mxu0 %v4381
      %v4441 = vpop.f32.mrb[0].mxu0
      %v4442 = vadd.f32 %v4278, %v4441
      %v4443 = vpop.f32.mrb[0].mxu0
      %v4444 = vpop.f32.mrb[0].mxu0
      %v4445 = vadd.f32 %v4281, %v4444
      %v4446 = vpop.f32.mrb[0].mxu0
      %4447 = vmatprep.mubr.bf16.mxu0 0
      %4448 = vmatmul.mubr.bf16.gmra.mrb[0].mxu0 %v4384
      %v4449 = vpop.f32.mrb[0].mxu0
      %v4450 = vadd.f32 %v4286, %v4449
      %v4451 = vpop.f32.mrb[0].mxu0
      %v4452 = vpop.f32.mrb[0].mxu0
      %v4453 = vadd.f32 %v4289, %v4452
      %v4454 = vpop.f32.mrb[0].mxu0
      %4455 = vmatprep.mubr.bf16.mxu0 0
      %4456 = vmatmul.mubr.bf16.gmra.mrb[0].mxu0 %v4387
      %v4457 = vpop.f32.mrb[0].mxu0
      %v4458 = vadd.f32 %v4294, %v4457
      %v4459 = vpop.f32.mrb[0].mxu0
      %v4460 = vpop.f32.mrb[0].mxu0
      %v4461 = vadd.f32 %v4297, %v4460
      %v4462 = vpop.f32.mrb[0].mxu0
      %4463 = vmatprep.mubr.bf16.mxu0 0
      %4464 = vmatmul.mubr.bf16.gmra.mrb[0].mxu0 %v4390
      %v4465 = vpop.f32.mrb[0].mxu0
      %v4466 = vadd.f32 %v4302, %v4465
      %v4467 = vpop.f32.mrb[0].mxu0
      %v4468 = vpop.f32.mrb[0].mxu0
      %v4469 = vadd.f32 %v4305, %v4468
      %v4470 = vpop.f32.mrb[0].mxu0
      %4471 = vmatprep.mubr.bf16.mxu0 0
      %4472 = vmatmul.mubr.bf16.gmra.mrb[0].mxu0 %v4393
      %v4473 = vpop.f32.mrb[0].mxu0
      %v4474 = vadd.f32 %v4310, %v4473
      %v4475 = vpop.f32.mrb[0].mxu0
      %v4476 = vpop.f32.mrb[0].mxu0
      %v4477 = vadd.f32 %v4313, %v4476
      %v4478 = vpop.f32.mrb[0].mxu0
      %4479 = vmatprep.mubr.bf16.mxu0 0
      %4480 = vmatmul.mubr.bf16.gmra.mrb[0].mxu0 %v4396
      %v4481 = vpop.f32.mrb[0].mxu0
      %v4482 = vadd.f32 %v4318, %v4481
      %v4483 = vpop.f32.mrb[0].mxu0
      %v4484 = vpop.f32.mrb[0].mxu0
      %v4485 = vadd.f32 %v4321, %v4484
      %v4486 = vpop.f32.mrb[0].mxu0
      %4487 = vmatprep.mubr.bf16.mxu0 0
      %4488 = vmatmul.mubr.bf16.gmra.mrb[0].mxu0 %v4399
      %v4489 = vpop.f32.mrb[0].mxu0
      %v4490 = vadd.f32 %v4326, %v4489
      %v4491 = vpop.f32.mrb[0].mxu0
      %v4492 = vpop.f32.mrb[0].mxu0
      %v4493 = vadd.f32 %v4329, %v4492
      %v4494 = vpop.f32.mrb[0].mxu0
      %4495 = vmatprep.mubr.bf16.mxu0 0
      %4496 = vmatmul.mubr.bf16.gmra.mrb[0].mxu0 %v4402
      %v4497 = vpop.f32.mrb[0].mxu0
      %v4498 = vadd.f32 %v4334, %v4497
      %v4499 = vpop.f32.mrb[0].mxu0
      %v4500 = vpop.f32.mrb[0].mxu0
      %v4501 = vadd.f32 %v4337, %v4500
      %v4502 = vpop.f32.mrb[0].mxu0
      %4503 = vdwg.mxu0
      %v4504 = vld [vmem:[#allocation3] sm:$0xe]
      %v4505 = vld [vmem:[#allocation3 + $0xc] sm:$0xe]
      %v4506 = vld [vmem:[#allocation3 + $0x18] sm:$0xe]
      %v4507 = vld [vmem:[#allocation3 + $0x24] sm:$0xe]
      %v4508 = vld [vmem:[#allocation3 + $0x30] sm:$0xe]
      %v4509 = vld [vmem:[#allocation3 + $0x3c] sm:$0xe]
      %v4510 = vld [vmem:[#allocation3 + $0x48] sm:$0xe]
      %v4511 = vld [vmem:[#allocation3 + $0x54] sm:$0xe]
      %v4528 = vrot.slane %v4504, 5
      %v4529 = vrot.slane %v4528, 4
      %v4530 = vrot.slane %v3972, 5
      %v4531 = vsel %vm1181, %v4529, %v4530
      %v4532 = vrot.slane %v4530, 4
      %v4533 = vrot.slane %v3988, 5
      %v4534 = vsel %vm1181, %v4532, %v4533
      %v4535 = vrot.slane %v4505, 5
      %v4536 = vrot.slane %v4535, 4
      %v4537 = vrot.slane %v3974, 5
      %v4538 = vsel %vm1181, %v4536, %v4537
      %v4539 = vrot.slane %v4537, 4
      %v4540 = vrot.slane %v3989, 5
      %v4541 = vsel %vm1181, %v4539, %v4540
      %v4542 = vrot.slane %v4506, 5
      %v4543 = vrot.slane %v4542, 4
      %v4544 = vrot.slane %v3976, 5
      %v4545 = vsel %vm1181, %v4543, %v4544
      %v4546 = vrot.slane %v4544, 4
      %v4547 = vrot.slane %v3990, 5
      %v4548 = vsel %vm1181, %v4546, %v4547
      %v4549 = vrot.slane %v4507, 5
      %v4550 = vrot.slane %v4549, 4
      %v4551 = vrot.slane %v3978, 5
      %v4552 = vsel %vm1181, %v4550, %v4551
      %v4553 = vrot.slane %v4551, 4
      %v4554 = vrot.slane %v3991, 5
      %v4555 = vsel %vm1181, %v4553, %v4554
      %v4556 = vrot.slane %v4508, 5
      %v4557 = vrot.slane %v4556, 4
      %v4558 = vrot.slane %v3980, 5
      %v4559 = vsel %vm1181, %v4557, %v4558
      %v4560 = vrot.slane %v4558, 4
      %v4561 = vrot.slane %v3992, 5
      %v4562 = vsel %vm1181, %v4560, %v4561
      %v4563 = vrot.slane %v4509, 5
      %v4564 = vrot.slane %v4563, 4
      %v4565 = vrot.slane %v3982, 5
      %v4566 = vsel %vm1181, %v4564, %v4565
      %v4567 = vrot.slane %v4565, 4
      %v4568 = vrot.slane %v3993, 5
      %v4569 = vsel %vm1181, %v4567, %v4568
      %v4570 = vrot.slane %v4510, 5
      %v4571 = vrot.slane %v4570, 4
      %v4572 = vrot.slane %v3984, 5
      %v4573 = vsel %vm1181, %v4571, %v4572
      %v4574 = vrot.slane %v4572, 4
      %v4575 = vrot.slane %v3994, 5
      %v4576 = vsel %vm1181, %v4574, %v4575
      %v4577 = vrot.slane %v4511, 5
      %v4578 = vrot.slane %v4577, 4
      %v4579 = vrot.slane %v3986, 5
      %v4580 = vsel %vm1181, %v4578, %v4579
      %v4581 = vrot.slane %v4579, 4
      %v4582 = vrot.slane %v3995, 5
      %v4583 = vsel %vm1181, %v4581, %v4582
      %s4584 = scalar_lea.vmem %s5, 8
      %v4585 = vld [vmem:[%s4584] sm:$0xf]
      %v4586 = vunpack.c.l.b16 %v4531
      %v4587 = vunpack.c.l.b16 %v4534
      %v4588 = vunpack.c.l.b16 %v4538
      %v4589 = vunpack.c.l.b16 %v4541
      %v4590 = vunpack.c.l.b16 %v4545
      %v4591 = vunpack.c.l.b16 %v4548
      %v4592 = vunpack.c.l.b16 %v4552
      %v4593 = vunpack.c.l.b16 %v4555
      %v4594 = vunpack.c.l.b16 %v4559
      %v4595 = vunpack.c.l.b16 %v4562
      %v4596 = vunpack.c.l.b16 %v4566
      %v4597 = vunpack.c.l.b16 %v4569
      %v4598 = vunpack.c.l.b16 %v4573
      %v4599 = vunpack.c.l.b16 %v4576
      %v4600 = vunpack.c.l.b16 %v4580
      %v4601 = vunpack.c.l.b16 %v4583
      %v4602 = vpack.c.b16 %v4587, %v4586
      %v4603 = vpack.c.b16 %v4589, %v4588
      %v4604 = vpack.c.b16 %v4591, %v4590
      %v4605 = vpack.c.b16 %v4593, %v4592
      %v4606 = vpack.c.b16 %v4595, %v4594
      %v4607 = vpack.c.b16 %v4597, %v4596
      %v4608 = vpack.c.b16 %v4599, %v4598
      %v4609 = vpack.c.b16 %v4601, %v4600
      %v4611 = vsel %vm4214, %v4602, 0
      %v4614 = vsel %vm4214, %v4603, 0
      %v4617 = vsel %vm4214, %v4604, 0
      %v4620 = vsel %vm4214, %v4605, 0
      %v4623 = vsel %vm4214, %v4606, 0
      %v4626 = vsel %vm4214, %v4607, 0
      %v4629 = vsel %vm4214, %v4608, 0
      %v4632 = vsel %vm4214, %v4609, 0
      %v4635 = vsel %vm4239, %v4585, 0
      %4637 = vmatprep.subr.bf16.mxu0 0
      %4638 = vmatpush1.bf16.msra.mxu0 %v4635
      %4639 = vmatprep.subr.bf16.mxu0 0
      %4640 = vmatpush1.bf16.msra.mxu0 0
      %4641 = vmatprep.subr.bf16.mxu0 0
      %4642 = vmatpush1.bf16.msra.mxu0 0
      %4643 = vmatprep.subr.bf16.mxu0 0
      %4644 = vmatpush1.bf16.msra.mxu0 0
      %4645 = vmatprep.subr.bf16.mxu0 0
      %4646 = vmatpush1.bf16.msra.mxu0 0
      %4647 = vmatprep.subr.bf16.mxu0 0
      %4648 = vmatpush1.bf16.msra.mxu0 0
      %4649 = vmatprep.subr.bf16.mxu0 0
      %4650 = vmatpush1.bf16.msra.mxu0 0
      %4651 = vmatprep.subr.bf16.mxu0 0
      %4652 = vmatpush1.bf16.msra.mxu0 0
      %4653 = vmatprep.subr.bf16.mxu0 0
      %4654 = vmatpush1.bf16.msra.mxu0 0
      %4655 = vmatprep.subr.bf16.mxu0 0
      %4656 = vmatpush1.bf16.msra.mxu0 0
      %4657 = vmatprep.subr.bf16.mxu0 0
      %4658 = vmatpush1.bf16.msra.mxu0 0
      %4659 = vmatprep.subr.bf16.mxu0 0
      %4660 = vmatpush1.bf16.msra.mxu0 0
      %4661 = vmatprep.subr.bf16.mxu0 0
      %4662 = vmatpush1.bf16.msra.mxu0 0
      %4663 = vmatprep.subr.bf16.mxu0 0
      %4664 = vmatpush1.bf16.msra.mxu0 0
      %4665 = vmatprep.subr.bf16.mxu0 0
      %4666 = vmatpush1.bf16.msra.mxu0 0
      %4667 = vmatprep.subr.bf16.mxu0 0
      %4668 = vmatpush1.bf16.msra.mxu0 0
      %4669 = vmatprep.mubr.bf16.mxu0 0
      %4670 = vmatmul.mubr.bf16.gmra.mrb[0].mxu0 %v4611
      %v4671 = vpop.f32.mrb[0].mxu0
      %v4672 = vadd.f32 0.0, %v4671
      %v4673 = vpop.f32.mrb[0].mxu0
      %v4674 = vpop.f32.mrb[0].mxu0
      %v4675 = vadd.f32 0.0, %v4674
      %v4676 = vpop.f32.mrb[0].mxu0
      %4677 = vmatprep.mubr.bf16.mxu0 0
      %4678 = vmatmul.mubr.bf16.gmra.mrb[0].mxu0 %v4614
      %v4679 = vpop.f32.mrb[0].mxu0
      %v4680 = vadd.f32 0.0, %v4679
      %v4681 = vpop.f32.mrb[0].mxu0
      %v4682 = vpop.f32.mrb[0].mxu0
      %v4683 = vadd.f32 0.0, %v4682
      %v4684 = vpop.f32.mrb[0].mxu0
      %4685 = vmatprep.mubr.bf16.mxu0 0
      %4686 = vmatmul.mubr.bf16.gmra.mrb[0].mxu0 %v4617
      %v4687 = vpop.f32.mrb[0].mxu0
      %v4688 = vadd.f32 0.0, %v4687
      %v4689 = vpop.f32.mrb[0].mxu0
      %v4690 = vpop.f32.mrb[0].mxu0
      %v4691 = vadd.f32 0.0, %v4690
      %v4692 = vpop.f32.mrb[0].mxu0
      %4693 = vmatprep.mubr.bf16.mxu0 0
      %4694 = vmatmul.mubr.bf16.gmra.mrb[0].mxu0 %v4620
      %v4695 = vpop.f32.mrb[0].mxu0
      %v4696 = vadd.f32 0.0, %v4695
      %v4697 = vpop.f32.mrb[0].mxu0
      %v4698 = vpop.f32.mrb[0].mxu0
      %v4699 = vadd.f32 0.0, %v4698
      %v4700 = vpop.f32.mrb[0].mxu0
      %4701 = vmatprep.mubr.bf16.mxu0 0
      %4702 = vmatmul.mubr.bf16.gmra.mrb[0].mxu0 %v4623
      %v4703 = vpop.f32.mrb[0].mxu0
      %v4704 = vadd.f32 0.0, %v4703
      %v4705 = vpop.f32.mrb[0].mxu0
      %v4706 = vpop.f32.mrb[0].mxu0
      %v4707 = vadd.f32 0.0, %v4706
      %v4708 = vpop.f32.mrb[0].mxu0
      %4709 = vmatprep.mubr.bf16.mxu0 0
      %4710 = vmatmul.mubr.bf16.gmra.mrb[0].mxu0 %v4626
      %v4711 = vpop.f32.mrb[0].mxu0
      %v4712 = vadd.f32 0.0, %v4711
      %v4713 = vpop.f32.mrb[0].mxu0
      %v4714 = vpop.f32.mrb[0].mxu0
      %v4715 = vadd.f32 0.0, %v4714
      %v4716 = vpop.f32.mrb[0].mxu0
      %4717 = vmatprep.mubr.bf16.mxu0 0
      %4718 = vmatmul.mubr.bf16.gmra.mrb[0].mxu0 %v4629
      %v4719 = vpop.f32.mrb[0].mxu0
      %v4720 = vadd.f32 0.0, %v4719
      %v4721 = vpop.f32.mrb[0].mxu0
      %v4722 = vpop.f32.mrb[0].mxu0
      %v4723 = vadd.f32 0.0, %v4722
      %v4724 = vpop.f32.mrb[0].mxu0
      %4725 = vmatprep.mubr.bf16.mxu0 0
      %4726 = vmatmul.mubr.bf16.gmra.mrb[0].mxu0 %v4632
      %v4727 = vpop.f32.mrb[0].mxu0
      %v4728 = vadd.f32 0.0, %v4727
      %v4729 = vpop.f32.mrb[0].mxu0
      %v4730 = vpop.f32.mrb[0].mxu0
      %v4731 = vadd.f32 0.0, %v4730
      %v4732 = vpop.f32.mrb[0].mxu0
      %4733 = vdwg.mxu0
      %v4734 = vadd.f32 %v4442, %v4672
      %v4735 = vadd.f32 %v4445, %v4675
      %v4736 = vadd.f32 %v4450, %v4680
      %v4737 = vadd.f32 %v4453, %v4683
      %v4738 = vadd.f32 %v4458, %v4688
      %v4739 = vadd.f32 %v4461, %v4691
      %v4740 = vadd.f32 %v4466, %v4696
      %v4741 = vadd.f32 %v4469, %v4699
      %v4742 = vadd.f32 %v4474, %v4704
      %v4743 = vadd.f32 %v4477, %v4707
      %v4744 = vadd.f32 %v4482, %v4712
      %v4745 = vadd.f32 %v4485, %v4715
      %v4746 = vadd.f32 %v4490, %v4720
      %v4747 = vadd.f32 %v4493, %v4723
      %v4748 = vadd.f32 %v4498, %v4728
      %v4749 = vadd.f32 %v4501, %v4731
      %s4750 = scalar_lea.vmem [#allocation3], 12
      %v4751 = vld [vmem:[%s4750] sm:$0xf]
      %v4752 = vld [vmem:[%s4750 + $0x4] sm:$0xf]
      %v4753 = vld [vmem:[%s4750 + $0xc] sm:$0xf]
      %v4754 = vld [vmem:[%s4750 + $0x10] sm:$0xf]
      %v4755 = vld [vmem:[%s4750 + $0x18] sm:$0xf]
      %v4756 = vld [vmem:[%s4750 + $0x1c] sm:$0xf]
      %v4757 = vld [vmem:[%s4750 + $0x24] sm:$0xf]
      %v4758 = vld [vmem:[%s4750 + $0x28] sm:$0xf]
      %v4759 = vld [vmem:[%s4750 + $0x30] sm:$0xf]
      %v4760 = vld [vmem:[%s4750 + $0x34] sm:$0xf]
      %v4761 = vld [vmem:[%s4750 + $0x3c] sm:$0xf]
      %v4762 = vld [vmem:[%s4750 + $0x40] sm:$0xf]
      %v4763 = vld [vmem:[%s4750 + $0x48] sm:$0xf]
      %v4764 = vld [vmem:[%s4750 + $0x4c] sm:$0xf]
      %v4765 = vld [vmem:[%s4750 + $0x54] sm:$0xf]
      %v4766 = vld [vmem:[%s4750 + $0x58] sm:$0xf]
      %s4767 = scalar_lea.vmem %s5, 12
      %v4768 = vld [vmem:[%s4767] sm:$0xf]
      %v4785 = vunpack.c.l.b16 %v4751
      %v4786 = vunpack.c.l.b16 %v4752
      %v4787 = vunpack.c.l.b16 %v4753
      %v4788 = vunpack.c.l.b16 %v4754
      %v4789 = vunpack.c.l.b16 %v4755
      %v4790 = vunpack.c.l.b16 %v4756
      %v4791 = vunpack.c.l.b16 %v4757
      %v4792 = vunpack.c.l.b16 %v4758
      %v4793 = vunpack.c.l.b16 %v4759
      %v4794 = vunpack.c.l.b16 %v4760
      %v4795 = vunpack.c.l.b16 %v4761
      %v4796 = vunpack.c.l.b16 %v4762
      %v4797 = vunpack.c.l.b16 %v4763
      %v4798 = vunpack.c.l.b16 %v4764
      %v4799 = vunpack.c.l.b16 %v4765
      %v4800 = vunpack.c.l.b16 %v4766
      %v4801 = vpack.c.b16 %v4786, %v4785
      %v4802 = vpack.c.b16 %v4788, %v4787
      %v4803 = vpack.c.b16 %v4790, %v4789
      %v4804 = vpack.c.b16 %v4792, %v4791
      %v4805 = vpack.c.b16 %v4794, %v4793
      %v4806 = vpack.c.b16 %v4796, %v4795
      %v4807 = vpack.c.b16 %v4798, %v4797
      %v4808 = vpack.c.b16 %v4800, %v4799
      %v4810 = vsel %vm4214, %v4801, 0
      %v4813 = vsel %vm4214, %v4802, 0
      %v4816 = vsel %vm4214, %v4803, 0
      %v4819 = vsel %vm4214, %v4804, 0
      %v4822 = vsel %vm4214, %v4805, 0
      %v4825 = vsel %vm4214, %v4806, 0
      %v4828 = vsel %vm4214, %v4807, 0
      %v4831 = vsel %vm4214, %v4808, 0
      %v4834 = vsel %vm4239, %v4768, 0
      %4836 = vmatprep.subr.bf16.mxu0 0
      %4837 = vmatpush1.bf16.msra.mxu0 %v4834
      %4838 = vmatprep.subr.bf16.mxu0 0
      %4839 = vmatpush1.bf16.msra.mxu0 0
      %4840 = vmatprep.subr.bf16.mxu0 0
      %4841 = vmatpush1.bf16.msra.mxu0 0
      %4842 = vmatprep.subr.bf16.mxu0 0
      %4843 = vmatpush1.bf16.msra.mxu0 0
      %4844 = vmatprep.subr.bf16.mxu0 0
      %4845 = vmatpush1.bf16.msra.mxu0 0
      %4846 = vmatprep.subr.bf16.mxu0 0
      %4847 = vmatpush1.bf16.msra.mxu0 0
      %4848 = vmatprep.subr.bf16.mxu0 0
      %4849 = vmatpush1.bf16.msra.mxu0 0
      %4850 = vmatprep.subr.bf16.mxu0 0
      %4851 = vmatpush1.bf16.msra.mxu0 0
      %4852 = vmatprep.subr.bf16.mxu0 0
      %4853 = vmatpush1.bf16.msra.mxu0 0
      %4854 = vmatprep.subr.bf16.mxu0 0
      %4855 = vmatpush1.bf16.msra.mxu0 0
      %4856 = vmatprep.subr.bf16.mxu0 0
      %4857 = vmatpush1.bf16.msra.mxu0 0
      %4858 = vmatprep.subr.bf16.mxu0 0
      %4859 = vmatpush1.bf16.msra.mxu0 0
      %4860 = vmatprep.subr.bf16.mxu0 0
      %4861 = vmatpush1.bf16.msra.mxu0 0
      %4862 = vmatprep.subr.bf16.mxu0 0
      %4863 = vmatpush1.bf16.msra.mxu0 0
      %4864 = vmatprep.subr.bf16.mxu0 0
      %4865 = vmatpush1.bf16.msra.mxu0 0
      %4866 = vmatprep.subr.bf16.mxu0 0
      %4867 = vmatpush1.bf16.msra.mxu0 0
      %4868 = vmatprep.mubr.bf16.mxu0 0
      %4869 = vmatmul.mubr.bf16.gmra.mrb[0].mxu0 %v4810
      %v4870 = vpop.f32.mrb[0].mxu0
      %v4871 = vadd.f32 0.0, %v4870
      %v4872 = vpop.f32.mrb[0].mxu0
      %v4873 = vpop.f32.mrb[0].mxu0
      %v4874 = vadd.f32 0.0, %v4873
      %v4875 = vpop.f32.mrb[0].mxu0
      %4876 = vmatprep.mubr.bf16.mxu0 0
      %4877 = vmatmul.mubr.bf16.gmra.mrb[0].mxu0 %v4813
      %v4878 = vpop.f32.mrb[0].mxu0
      %v4879 = vadd.f32 0.0, %v4878
      %v4880 = vpop.f32.mrb[0].mxu0
      %v4881 = vpop.f32.mrb[0].mxu0
      %v4882 = vadd.f32 0.0, %v4881
      %v4883 = vpop.f32.mrb[0].mxu0
      %4884 = vmatprep.mubr.bf16.mxu0 0
      %4885 = vmatmul.mubr.bf16.gmra.mrb[0].mxu0 %v4816
      %v4886 = vpop.f32.mrb[0].mxu0
      %v4887 = vadd.f32 0.0, %v4886
      %v4888 = vpop.f32.mrb[0].mxu0
      %v4889 = vpop.f32.mrb[0].mxu0
      %v4890 = vadd.f32 0.0, %v4889
      %v4891 = vpop.f32.mrb[0].mxu0
      %4892 = vmatprep.mubr.bf16.mxu0 0
      %4893 = vmatmul.mubr.bf16.gmra.mrb[0].mxu0 %v4819
      %v4894 = vpop.f32.mrb[0].mxu0
      %v4895 = vadd.f32 0.0, %v4894
      %v4896 = vpop.f32.mrb[0].mxu0
      %v4897 = vpop.f32.mrb[0].mxu0
      %v4898 = vadd.f32 0.0, %v4897
      %v4899 = vpop.f32.mrb[0].mxu0
      %4900 = vmatprep.mubr.bf16.mxu0 0
      %4901 = vmatmul.mubr.bf16.gmra.mrb[0].mxu0 %v4822
      %v4902 = vpop.f32.mrb[0].mxu0
      %v4903 = vadd.f32 0.0, %v4902
      %v4904 = vpop.f32.mrb[0].mxu0
      %v4905 = vpop.f32.mrb[0].mxu0
      %v4906 = vadd.f32 0.0, %v4905
      %v4907 = vpop.f32.mrb[0].mxu0
      %4908 = vmatprep.mubr.bf16.mxu0 0
      %4909 = vmatmul.mubr.bf16.gmra.mrb[0].mxu0 %v4825
      %v4910 = vpop.f32.mrb[0].mxu0
      %v4911 = vadd.f32 0.0, %v4910
      %v4912 = vpop.f32.mrb[0].mxu0
      %v4913 = vpop.f32.mrb[0].mxu0
      %v4914 = vadd.f32 0.0, %v4913
      %v4915 = vpop.f32.mrb[0].mxu0
      %4916 = vmatprep.mubr.bf16.mxu0 0
      %4917 = vmatmul.mubr.bf16.gmra.mrb[0].mxu0 %v4828
      %v4918 = vpop.f32.mrb[0].mxu0
      %v4919 = vadd.f32 0.0, %v4918
      %v4920 = vpop.f32.mrb[0].mxu0
      %v4921 = vpop.f32.mrb[0].mxu0
      %v4922 = vadd.f32 0.0, %v4921
      %v4923 = vpop.f32.mrb[0].mxu0
      %4924 = vmatprep.mubr.bf16.mxu0 0
      %4925 = vmatmul.mubr.bf16.gmra.mrb[0].mxu0 %v4831
      %v4926 = vpop.f32.mrb[0].mxu0
      %v4927 = vadd.f32 0.0, %v4926
      %v4928 = vpop.f32.mrb[0].mxu0
      %v4929 = vpop.f32.mrb[0].mxu0
      %v4930 = vadd.f32 0.0, %v4929
      %v4931 = vpop.f32.mrb[0].mxu0
      %4932 = vdwg.mxu0
      %v4933 = vadd.f32 %v4734, %v4871
      %v4934 = vadd.f32 %v4735, %v4874
      %v4935 = vadd.f32 %v4736, %v4879
      %v4936 = vadd.f32 %v4737, %v4882
      %v4937 = vadd.f32 %v4738, %v4887
      %v4938 = vadd.f32 %v4739, %v4890
      %v4939 = vadd.f32 %v4740, %v4895
      %v4940 = vadd.f32 %v4741, %v4898
      %v4941 = vadd.f32 %v4742, %v4903
      %v4942 = vadd.f32 %v4743, %v4906
      %v4943 = vadd.f32 %v4744, %v4911
      %v4944 = vadd.f32 %v4745, %v4914
      %v4945 = vadd.f32 %v4746, %v4919
      %v4946 = vadd.f32 %v4747, %v4922
      %v4947 = vadd.f32 %v4748, %v4927
      %v4948 = vadd.f32 %v4749, %v4930
      %v4949 = vld [vmem:[%s4750] sm:$0xf]
      %v4950 = vld [vmem:[%s4750 + $0x4] sm:$0xf]
      %v4951 = vld [vmem:[%s4750 + $0x8] sm:$0x1]
      %v4952 = vld [vmem:[%s4750 + $0xc] sm:$0xf]
      %v4953 = vld [vmem:[%s4750 + $0x10] sm:$0xf]
      %v4954 = vld [vmem:[%s4750 + $0x14] sm:$0x1]
      %v4955 = vld [vmem:[%s4750 + $0x18] sm:$0xf]
      %v4956 = vld [vmem:[%s4750 + $0x1c] sm:$0xf]
      %v4957 = vld [vmem:[%s4750 + $0x20] sm:$0x1]
      %v4958 = vld [vmem:[%s4750 + $0x24] sm:$0xf]
      %v4959 = vld [vmem:[%s4750 + $0x28] sm:$0xf]
      %v4960 = vld [vmem:[%s4750 + $0x2c] sm:$0x1]
      %v4961 = vld [vmem:[%s4750 + $0x30] sm:$0xf]
      %v4962 = vld [vmem:[%s4750 + $0x34] sm:$0xf]
      %v4963 = vld [vmem:[%s4750 + $0x38] sm:$0x1]
      %v4964 = vld [vmem:[%s4750 + $0x3c] sm:$0xf]
      %v4965 = vld [vmem:[%s4750 + $0x40] sm:$0xf]
      %v4966 = vld [vmem:[%s4750 + $0x44] sm:$0x1]
      %v4967 = vld [vmem:[%s4750 + $0x48] sm:$0xf]
      %v4968 = vld [vmem:[%s4750 + $0x4c] sm:$0xf]
      %v4969 = vld [vmem:[%s4750 + $0x50] sm:$0x1]
      %v4970 = vld [vmem:[%s4750 + $0x54] sm:$0xf]
      %v4971 = vld [vmem:[%s4750 + $0x58] sm:$0xf]
      %v4972 = vld [vmem:[%s4750 + $0x5c] sm:$0x1]
      %v4974 = vshrl.u32 %v4949, 16
      %v4976 = vrot.slane %v4974, 4
      %v4977 = vshll.u32 %v4949, 16
      %v4979 = vrot.slane %v4977, 5
      %v4980 = vor.u32 %v4976, %v4979
      %v4981 = vrot.slane %v4980, 4
      %v4983 = vshll.u32 %v4950, 16
      %v4985 = vrot.slane %v4983, 5
      %v4986 = vsel %vm532, %v4981, %v4985
      %v4987 = vshrl.u32 %v4950, 16
      %v4989 = vrot.slane %v4987, 4
      %v4990 = vor.u32 %v4989, %v4985
      %v4991 = vrot.slane %v4990, 4
      %v4993 = vshll.u32 %v4951, 16
      %v4995 = vrot.slane %v4993, 5
      %v4996 = vsel %vm532, %v4991, %v4995
      %v4998 = vshrl.u32 %v4952, 16
      %v5000 = vrot.slane %v4998, 4
      %v5001 = vshll.u32 %v4952, 16
      %v5003 = vrot.slane %v5001, 5
      %v5004 = vor.u32 %v5000, %v5003
      %v5005 = vrot.slane %v5004, 4
      %v5007 = vshll.u32 %v4953, 16
      %v5009 = vrot.slane %v5007, 5
      %v5010 = vsel %vm532, %v5005, %v5009
      %v5011 = vshrl.u32 %v4953, 16
      %v5013 = vrot.slane %v5011, 4
      %v5014 = vor.u32 %v5013, %v5009
      %v5015 = vrot.slane %v5014, 4
      %v5017 = vshll.u32 %v4954, 16
      %v5019 = vrot.slane %v5017, 5
      %v5020 = vsel %vm532, %v5015, %v5019
      %v5022 = vshrl.u32 %v4955, 16
      %v5024 = vrot.slane %v5022, 4
      %v5025 = vshll.u32 %v4955, 16
      %v5027 = vrot.slane %v5025, 5
      %v5028 = vor.u32 %v5024, %v5027
      %v5029 = vrot.slane %v5028, 4
      %v5031 = vshll.u32 %v4956, 16
      %v5033 = vrot.slane %v5031, 5
      %v5034 = vsel %vm532, %v5029, %v5033
      %v5035 = vshrl.u32 %v4956, 16
      %v5037 = vrot.slane %v5035, 4
      %v5038 = vor.u32 %v5037, %v5033
      %v5039 = vrot.slane %v5038, 4
      %v5041 = vshll.u32 %v4957, 16
      %v5043 = vrot.slane %v5041, 5
      %v5044 = vsel %vm532, %v5039, %v5043
      %v5046 = vshrl.u32 %v4958, 16
      %v5048 = vrot.slane %v5046, 4
      %v5049 = vshll.u32 %v4958, 16
      %v5051 = vrot.slane %v5049, 5
      %v5052 = vor.u32 %v5048, %v5051
      %v5053 = vrot.slane %v5052, 4
      %v5055 = vshll.u32 %v4959, 16
      %v5057 = vrot.slane %v5055, 5
      %v5058 = vsel %vm532, %v5053, %v5057
      %v5059 = vshrl.u32 %v4959, 16
      %v5061 = vrot.slane %v5059, 4
      %v5062 = vor.u32 %v5061, %v5057
      %v5063 = vrot.slane %v5062, 4
      %v5065 = vshll.u32 %v4960, 16
      %v5067 = vrot.slane %v5065, 5
      %v5068 = vsel %vm532, %v5063, %v5067
      %v5070 = vshrl.u32 %v4961, 16
      %v5072 = vrot.slane %v5070, 4
      %v5073 = vshll.u32 %v4961, 16
      %v5075 = vrot.slane %v5073, 5
      %v5076 = vor.u32 %v5072, %v5075
      %v5077 = vrot.slane %v5076, 4
      %v5079 = vshll.u32 %v4962, 16
      %v5081 = vrot.slane %v5079, 5
      %v5082 = vsel %vm532, %v5077, %v5081
      %v5083 = vshrl.u32 %v4962, 16
      %v5085 = vrot.slane %v5083, 4
      %v5086 = vor.u32 %v5085, %v5081
      %v5087 = vrot.slane %v5086, 4
      %v5089 = vshll.u32 %v4963, 16
      %v5091 = vrot.slane %v5089, 5
      %v5092 = vsel %vm532, %v5087, %v5091
      %v5094 = vshrl.u32 %v4964, 16
      %v5096 = vrot.slane %v5094, 4
      %v5097 = vshll.u32 %v4964, 16
      %v5099 = vrot.slane %v5097, 5
      %v5100 = vor.u32 %v5096, %v5099
      %v5101 = vrot.slane %v5100, 4
      %v5103 = vshll.u32 %v4965, 16
      %v5105 = vrot.slane %v5103, 5
      %v5106 = vsel %vm532, %v5101, %v5105
      %v5107 = vshrl.u32 %v4965, 16
      %v5109 = vrot.slane %v5107, 4
      %v5110 = vor.u32 %v5109, %v5105
      %v5111 = vrot.slane %v5110, 4
      %v5113 = vshll.u32 %v4966, 16
      %v5115 = vrot.slane %v5113, 5
      %v5116 = vsel %vm532, %v5111, %v5115
      %v5118 = vshrl.u32 %v4967, 16
      %v5120 = vrot.slane %v5118, 4
      %v5121 = vshll.u32 %v4967, 16
      %v5123 = vrot.slane %v5121, 5
      %v5124 = vor.u32 %v5120, %v5123
      %v5125 = vrot.slane %v5124, 4
      %v5127 = vshll.u32 %v4968, 16
      %v5129 = vrot.slane %v5127, 5
      %v5130 = vsel %vm532, %v5125, %v5129
      %v5131 = vshrl.u32 %v4968, 16
      %v5133 = vrot.slane %v5131, 4
      %v5134 = vor.u32 %v5133, %v5129
      %v5135 = vrot.slane %v5134, 4
      %v5137 = vshll.u32 %v4969, 16
      %v5139 = vrot.slane %v5137, 5
      %v5140 = vsel %vm532, %v5135, %v5139
      %v5142 = vshrl.u32 %v4970, 16
      %v5144 = vrot.slane %v5142, 4
      %v5145 = vshll.u32 %v4970, 16
      %v5147 = vrot.slane %v5145, 5
      %v5148 = vor.u32 %v5144, %v5147
      %v5149 = vrot.slane %v5148, 4
      %v5151 = vshll.u32 %v4971, 16
      %v5153 = vrot.slane %v5151, 5
      %v5154 = vsel %vm532, %v5149, %v5153
      %v5155 = vshrl.u32 %v4971, 16
      %v5157 = vrot.slane %v5155, 4
      %v5158 = vor.u32 %v5157, %v5153
      %v5159 = vrot.slane %v5158, 4
      %v5161 = vshll.u32 %v4972, 16
      %v5163 = vrot.slane %v5161, 5
      %v5164 = vsel %vm532, %v5159, %v5163
      %s5165 = scalar_lea.vmem %s5, 16
      %v5166 = vld [vmem:[%s5165] sm:$0xf]
      %v5167 = vunpack.c.l.b16 %v4986
      %v5168 = vunpack.c.l.b16 %v4996
      %v5169 = vunpack.c.l.b16 %v5010
      %v5170 = vunpack.c.l.b16 %v5020
      %v5171 = vunpack.c.l.b16 %v5034
      %v5172 = vunpack.c.l.b16 %v5044
      %v5173 = vunpack.c.l.b16 %v5058
      %v5174 = vunpack.c.l.b16 %v5068
      %v5175 = vunpack.c.l.b16 %v5082
      %v5176 = vunpack.c.l.b16 %v5092
      %v5177 = vunpack.c.l.b16 %v5106
      %v5178 = vunpack.c.l.b16 %v5116
      %v5179 = vunpack.c.l.b16 %v5130
      %v5180 = vunpack.c.l.b16 %v5140
      %v5181 = vunpack.c.l.b16 %v5154
      %v5182 = vunpack.c.l.b16 %v5164
      %v5183 = vpack.c.b16 %v5168, %v5167
      %v5184 = vpack.c.b16 %v5170, %v5169
      %v5185 = vpack.c.b16 %v5172, %v5171
      %v5186 = vpack.c.b16 %v5174, %v5173
      %v5187 = vpack.c.b16 %v5176, %v5175
      %v5188 = vpack.c.b16 %v5178, %v5177
      %v5189 = vpack.c.b16 %v5180, %v5179
      %v5190 = vpack.c.b16 %v5182, %v5181
      %v5192 = vsel %vm4214, %v5183, 0
      %v5195 = vsel %vm4214, %v5184, 0
      %v5198 = vsel %vm4214, %v5185, 0
      %v5201 = vsel %vm4214, %v5186, 0
      %v5204 = vsel %vm4214, %v5187, 0
      %v5207 = vsel %vm4214, %v5188, 0
      %v5210 = vsel %vm4214, %v5189, 0
      %v5213 = vsel %vm4214, %v5190, 0
      %v5216 = vsel %vm4239, %v5166, 0
      %5218 = vmatprep.subr.bf16.mxu0 0
      %5219 = vmatpush1.bf16.msra.mxu0 %v5216
      %5220 = vmatprep.subr.bf16.mxu0 0
      %5221 = vmatpush1.bf16.msra.mxu0 0
      %5222 = vmatprep.subr.bf16.mxu0 0
      %5223 = vmatpush1.bf16.msra.mxu0 0
      %5224 = vmatprep.subr.bf16.mxu0 0
      %5225 = vmatpush1.bf16.msra.mxu0 0
      %5226 = vmatprep.subr.bf16.mxu0 0
      %5227 = vmatpush1.bf16.msra.mxu0 0
      %5228 = vmatprep.subr.bf16.mxu0 0
      %5229 = vmatpush1.bf16.msra.mxu0 0
      %5230 = vmatprep.subr.bf16.mxu0 0
      %5231 = vmatpush1.bf16.msra.mxu0 0
      %5232 = vmatprep.subr.bf16.mxu0 0
      %5233 = vmatpush1.bf16.msra.mxu0 0
      %5234 = vmatprep.subr.bf16.mxu0 0
      %5235 = vmatpush1.bf16.msra.mxu0 0
      %5236 = vmatprep.subr.bf16.mxu0 0
      %5237 = vmatpush1.bf16.msra.mxu0 0
      %5238 = vmatprep.subr.bf16.mxu0 0
      %5239 = vmatpush1.bf16.msra.mxu0 0
      %5240 = vmatprep.subr.bf16.mxu0 0
      %5241 = vmatpush1.bf16.msra.mxu0 0
      %5242 = vmatprep.subr.bf16.mxu0 0
      %5243 = vmatpush1.bf16.msra.mxu0 0
      %5244 = vmatprep.subr.bf16.mxu0 0
      %5245 = vmatpush1.bf16.msra.mxu0 0
      %5246 = vmatprep.subr.bf16.mxu0 0
      %5247 = vmatpush1.bf16.msra.mxu0 0
      %5248 = vmatprep.subr.bf16.mxu0 0
      %5249 = vmatpush1.bf16.msra.mxu0 0
      %5250 = vmatprep.mubr.bf16.mxu0 0
      %5251 = vmatmul.mubr.bf16.gmra.mrb[0].mxu0 %v5192
      %v5252 = vpop.f32.mrb[0].mxu0
      %v5253 = vadd.f32 0.0, %v5252
      %v5254 = vpop.f32.mrb[0].mxu0
      %v5255 = vpop.f32.mrb[0].mxu0
      %v5256 = vadd.f32 0.0, %v5255
      %v5257 = vpop.f32.mrb[0].mxu0
      %5258 = vmatprep.mubr.bf16.mxu0 0
      %5259 = vmatmul.mubr.bf16.gmra.mrb[0].mxu0 %v5195
      %v5260 = vpop.f32.mrb[0].mxu0
      %v5261 = vadd.f32 0.0, %v5260
      %v5262 = vpop.f32.mrb[0].mxu0
      %v5263 = vpop.f32.mrb[0].mxu0
      %v5264 = vadd.f32 0.0, %v5263
      %v5265 = vpop.f32.mrb[0].mxu0
      %5266 = vmatprep.mubr.bf16.mxu0 0
      %5267 = vmatmul.mubr.bf16.gmra.mrb[0].mxu0 %v5198
      %v5268 = vpop.f32.mrb[0].mxu0
      %v5269 = vadd.f32 0.0, %v5268
      %v5270 = vpop.f32.mrb[0].mxu0
      %v5271 = vpop.f32.mrb[0].mxu0
      %v5272 = vadd.f32 0.0, %v5271
      %v5273 = vpop.f32.mrb[0].mxu0
      %5274 = vmatprep.mubr.bf16.mxu0 0
      %5275 = vmatmul.mubr.bf16.gmra.mrb[0].mxu0 %v5201
      %v5276 = vpop.f32.mrb[0].mxu0
      %v5277 = vadd.f32 0.0, %v5276
      %v5278 = vpop.f32.mrb[0].mxu0
      %v5279 = vpop.f32.mrb[0].mxu0
      %v5280 = vadd.f32 0.0, %v5279
      %v5281 = vpop.f32.mrb[0].mxu0
      %5282 = vmatprep.mubr.bf16.mxu0 0
      %5283 = vmatmul.mubr.bf16.gmra.mrb[0].mxu0 %v5204
      %v5284 = vpop.f32.mrb[0].mxu0
      %v5285 = vadd.f32 0.0, %v5284
      %v5286 = vpop.f32.mrb[0].mxu0
      %v5287 = vpop.f32.mrb[0].mxu0
      %v5288 = vadd.f32 0.0, %v5287
      %v5289 = vpop.f32.mrb[0].mxu0
      %5290 = vmatprep.mubr.bf16.mxu0 0
      %5291 = vmatmul.mubr.bf16.gmra.mrb[0].mxu0 %v5207
      %v5292 = vpop.f32.mrb[0].mxu0
      %v5293 = vadd.f32 0.0, %v5292
      %v5294 = vpop.f32.mrb[0].mxu0
      %v5295 = vpop.f32.mrb[0].mxu0
      %v5296 = vadd.f32 0.0, %v5295
      %v5297 = vpop.f32.mrb[0].mxu0
      %5298 = vmatprep.mubr.bf16.mxu0 0
      %5299 = vmatmul.mubr.bf16.gmra.mrb[0].mxu0 %v5210
      %v5300 = vpop.f32.mrb[0].mxu0
      %v5301 = vadd.f32 0.0, %v5300
      %v5302 = vpop.f32.mrb[0].mxu0
      %v5303 = vpop.f32.mrb[0].mxu0
      %v5304 = vadd.f32 0.0, %v5303
      %v5305 = vpop.f32.mrb[0].mxu0
      %5306 = vmatprep.mubr.bf16.mxu0 0
      %5307 = vmatmul.mubr.bf16.gmra.mrb[0].mxu0 %v5213
      %v5308 = vpop.f32.mrb[0].mxu0
      %v5309 = vadd.f32 0.0, %v5308
      %v5310 = vpop.f32.mrb[0].mxu0
      %v5311 = vpop.f32.mrb[0].mxu0
      %v5312 = vadd.f32 0.0, %v5311
      %v5313 = vpop.f32.mrb[0].mxu0
      %5314 = vdwg.mxu0
      %v5315 = vadd.f32 %v4933, %v5253
      %v5316 = vadd.f32 %v4934, %v5256
      %v5317 = vadd.f32 %v4935, %v5261
      %v5318 = vadd.f32 %v4936, %v5264
      %v5319 = vadd.f32 %v4937, %v5269
      %v5320 = vadd.f32 %v4938, %v5272
      %v5321 = vadd.f32 %v4939, %v5277
      %v5322 = vadd.f32 %v4940, %v5280
      %v5323 = vadd.f32 %v4941, %v5285
      %v5324 = vadd.f32 %v4942, %v5288
      %v5325 = vadd.f32 %v4943, %v5293
      %v5326 = vadd.f32 %v4944, %v5296
      %v5327 = vadd.f32 %v4945, %v5301
      %v5328 = vadd.f32 %v4946, %v5304
      %v5329 = vadd.f32 %v4947, %v5309
      %v5330 = vadd.f32 %v4948, %v5312
      %v5331 = vld [vmem:[%s4750] sm:$0xe]
      %v5332 = vld [vmem:[%s4750 + $0xc] sm:$0xe]
      %v5333 = vld [vmem:[%s4750 + $0x18] sm:$0xe]
      %v5334 = vld [vmem:[%s4750 + $0x24] sm:$0xe]
      %v5335 = vld [vmem:[%s4750 + $0x30] sm:$0xe]
      %v5336 = vld [vmem:[%s4750 + $0x3c] sm:$0xe]
      %v5337 = vld [vmem:[%s4750 + $0x48] sm:$0xe]
      %v5338 = vld [vmem:[%s4750 + $0x54] sm:$0xe]
      %v5363 = vrot.slane %v5331, 5
      %v5364 = vrot.slane %v5363, 4
      %v5365 = vrot.slane %v4950, 5
      %v5366 = vsel %vm1181, %v5364, %v5365
      %v5367 = vrot.slane %v5365, 4
      %v5368 = vrot.slane %v4951, 5
      %v5369 = vsel %vm1181, %v5367, %v5368
      %v5370 = vrot.slane %v5332, 5
      %v5371 = vrot.slane %v5370, 4
      %v5372 = vrot.slane %v4953, 5
      %v5373 = vsel %vm1181, %v5371, %v5372
      %v5374 = vrot.slane %v5372, 4
      %v5375 = vrot.slane %v4954, 5
      %v5376 = vsel %vm1181, %v5374, %v5375
      %v5377 = vrot.slane %v5333, 5
      %v5378 = vrot.slane %v5377, 4
      %v5379 = vrot.slane %v4956, 5
      %v5380 = vsel %vm1181, %v5378, %v5379
      %v5381 = vrot.slane %v5379, 4
      %v5382 = vrot.slane %v4957, 5
      %v5383 = vsel %vm1181, %v5381, %v5382
      %v5384 = vrot.slane %v5334, 5
      %v5385 = vrot.slane %v5384, 4
      %v5386 = vrot.slane %v4959, 5
      %v5387 = vsel %vm1181, %v5385, %v5386
      %v5388 = vrot.slane %v5386, 4
      %v5389 = vrot.slane %v4960, 5
      %v5390 = vsel %vm1181, %v5388, %v5389
      %v5391 = vrot.slane %v5335, 5
      %v5392 = vrot.slane %v5391, 4
      %v5393 = vrot.slane %v4962, 5
      %v5394 = vsel %vm1181, %v5392, %v5393
      %v5395 = vrot.slane %v5393, 4
      %v5396 = vrot.slane %v4963, 5
      %v5397 = vsel %vm1181, %v5395, %v5396
      %v5398 = vrot.slane %v5336, 5
      %v5399 = vrot.slane %v5398, 4
      %v5400 = vrot.slane %v4965, 5
      %v5401 = vsel %vm1181, %v5399, %v5400
      %v5402 = vrot.slane %v5400, 4
      %v5403 = vrot.slane %v4966, 5
      %v5404 = vsel %vm1181, %v5402, %v5403
      %v5405 = vrot.slane %v5337, 5
      %v5406 = vrot.slane %v5405, 4
      %v5407 = vrot.slane %v4968, 5
      %v5408 = vsel %vm1181, %v5406, %v5407
      %v5409 = vrot.slane %v5407, 4
      %v5410 = vrot.slane %v4969, 5
      %v5411 = vsel %vm1181, %v5409, %v5410
      %v5412 = vrot.slane %v5338, 5
      %v5413 = vrot.slane %v5412, 4
      %v5414 = vrot.slane %v4971, 5
      %v5415 = vsel %vm1181, %v5413, %v5414
      %v5416 = vrot.slane %v5414, 4
      %v5417 = vrot.slane %v4972, 5
      %v5418 = vsel %vm1181, %v5416, %v5417
      %s5419 = scalar_lea.vmem %s5, 20
      %v5420 = vld [vmem:[%s5419] sm:$0xf]
      %v5421 = vunpack.c.l.b16 %v5366
      %v5422 = vunpack.c.l.b16 %v5369
      %v5423 = vunpack.c.l.b16 %v5373
      %v5424 = vunpack.c.l.b16 %v5376
      %v5425 = vunpack.c.l.b16 %v5380
      %v5426 = vunpack.c.l.b16 %v5383
      %v5427 = vunpack.c.l.b16 %v5387
      %v5428 = vunpack.c.l.b16 %v5390
      %v5429 = vunpack.c.l.b16 %v5394
      %v5430 = vunpack.c.l.b16 %v5397
      %v5431 = vunpack.c.l.b16 %v5401
      %v5432 = vunpack.c.l.b16 %v5404
      %v5433 = vunpack.c.l.b16 %v5408
      %v5434 = vunpack.c.l.b16 %v5411
      %v5435 = vunpack.c.l.b16 %v5415
      %v5436 = vunpack.c.l.b16 %v5418
      %v5437 = vpack.c.b16 %v5422, %v5421
      %v5438 = vpack.c.b16 %v5424, %v5423
      %v5439 = vpack.c.b16 %v5426, %v5425
      %v5440 = vpack.c.b16 %v5428, %v5427
      %v5441 = vpack.c.b16 %v5430, %v5429
      %v5442 = vpack.c.b16 %v5432, %v5431
      %v5443 = vpack.c.b16 %v5434, %v5433
      %v5444 = vpack.c.b16 %v5436, %v5435
      %v5446 = vsel %vm4214, %v5437, 0
      %v5449 = vsel %vm4214, %v5438, 0
      %v5452 = vsel %vm4214, %v5439, 0
      %v5455 = vsel %vm4214, %v5440, 0
      %v5458 = vsel %vm4214, %v5441, 0
      %v5461 = vsel %vm4214, %v5442, 0
      %v5464 = vsel %vm4214, %v5443, 0
      %v5467 = vsel %vm4214, %v5444, 0
      %v5470 = vsel %vm4239, %v5420, 0
      %5472 = vmatprep.subr.bf16.mxu0 0
      %5473 = vmatpush1.bf16.msra.mxu0 %v5470
      %5474 = vmatprep.subr.bf16.mxu0 0
      %5475 = vmatpush1.bf16.msra.mxu0 0
      %5476 = vmatprep.subr.bf16.mxu0 0
      %5477 = vmatpush1.bf16.msra.mxu0 0
      %5478 = vmatprep.subr.bf16.mxu0 0
      %5479 = vmatpush1.bf16.msra.mxu0 0
      %5480 = vmatprep.subr.bf16.mxu0 0
      %5481 = vmatpush1.bf16.msra.mxu0 0
      %5482 = vmatprep.subr.bf16.mxu0 0
      %5483 = vmatpush1.bf16.msra.mxu0 0
      %5484 = vmatprep.subr.bf16.mxu0 0
      %5485 = vmatpush1.bf16.msra.mxu0 0
      %5486 = vmatprep.subr.bf16.mxu0 0
      %5487 = vmatpush1.bf16.msra.mxu0 0
      %5488 = vmatprep.subr.bf16.mxu0 0
      %5489 = vmatpush1.bf16.msra.mxu0 0
      %5490 = vmatprep.subr.bf16.mxu0 0
      %5491 = vmatpush1.bf16.msra.mxu0 0
      %5492 = vmatprep.subr.bf16.mxu0 0
      %5493 = vmatpush1.bf16.msra.mxu0 0
      %5494 = vmatprep.subr.bf16.mxu0 0
      %5495 = vmatpush1.bf16.msra.mxu0 0
      %5496 = vmatprep.subr.bf16.mxu0 0
      %5497 = vmatpush1.bf16.msra.mxu0 0
      %5498 = vmatprep.subr.bf16.mxu0 0
      %5499 = vmatpush1.bf16.msra.mxu0 0
      %5500 = vmatprep.subr.bf16.mxu0 0
      %5501 = vmatpush1.bf16.msra.mxu0 0
      %5502 = vmatprep.subr.bf16.mxu0 0
      %5503 = vmatpush1.bf16.msra.mxu0 0
      %5504 = vmatprep.mubr.bf16.mxu0 0
      %5505 = vmatmul.mubr.bf16.gmra.mrb[0].mxu0 %v5446
      %v5506 = vpop.f32.mrb[0].mxu0
      %v5507 = vadd.f32 0.0, %v5506
      %v5508 = vpop.f32.mrb[0].mxu0
      %v5509 = vpop.f32.mrb[0].mxu0
      %v5510 = vadd.f32 0.0, %v5509
      %v5511 = vpop.f32.mrb[0].mxu0
      %5512 = vmatprep.mubr.bf16.mxu0 0
      %5513 = vmatmul.mubr.bf16.gmra.mrb[0].mxu0 %v5449
      %v5514 = vpop.f32.mrb[0].mxu0
      %v5515 = vadd.f32 0.0, %v5514
      %v5516 = vpop.f32.mrb[0].mxu0
      %v5517 = vpop.f32.mrb[0].mxu0
      %v5518 = vadd.f32 0.0, %v5517
      %v5519 = vpop.f32.mrb[0].mxu0
      %5520 = vmatprep.mubr.bf16.mxu0 0
      %5521 = vmatmul.mubr.bf16.gmra.mrb[0].mxu0 %v5452
      %v5522 = vpop.f32.mrb[0].mxu0
      %v5523 = vadd.f32 0.0, %v5522
      %v5524 = vpop.f32.mrb[0].mxu0
      %v5525 = vpop.f32.mrb[0].mxu0
      %v5526 = vadd.f32 0.0, %v5525
      %v5527 = vpop.f32.mrb[0].mxu0
      %5528 = vmatprep.mubr.bf16.mxu0 0
      %5529 = vmatmul.mubr.bf16.gmra.mrb[0].mxu0 %v5455
      %v5530 = vpop.f32.mrb[0].mxu0
      %v5531 = vadd.f32 0.0, %v5530
      %v5532 = vpop.f32.mrb[0].mxu0
      %v5533 = vpop.f32.mrb[0].mxu0
      %v5534 = vadd.f32 0.0, %v5533
      %v5535 = vpop.f32.mrb[0].mxu0
      %5536 = vmatprep.mubr.bf16.mxu0 0
      %5537 = vmatmul.mubr.bf16.gmra.mrb[0].mxu0 %v5458
      %v5538 = vpop.f32.mrb[0].mxu0
      %v5539 = vadd.f32 0.0, %v5538
      %v5540 = vpop.f32.mrb[0].mxu0
      %v5541 = vpop.f32.mrb[0].mxu0
      %v5542 = vadd.f32 0.0, %v5541
      %v5543 = vpop.f32.mrb[0].mxu0
      %5544 = vmatprep.mubr.bf16.mxu0 0
      %5545 = vmatmul.mubr.bf16.gmra.mrb[0].mxu0 %v5461
      %v5546 = vpop.f32.mrb[0].mxu0
      %v5547 = vadd.f32 0.0, %v5546
      %v5548 = vpop.f32.mrb[0].mxu0
      %v5549 = vpop.f32.mrb[0].mxu0
      %v5550 = vadd.f32 0.0, %v5549
      %v5551 = vpop.f32.mrb[0].mxu0
      %5552 = vmatprep.mubr.bf16.mxu0 0
      %5553 = vmatmul.mubr.bf16.gmra.mrb[0].mxu0 %v5464
      %v5554 = vpop.f32.mrb[0].mxu0
      %v5555 = vadd.f32 0.0, %v5554
      %v5556 = vpop.f32.mrb[0].mxu0
      %v5557 = vpop.f32.mrb[0].mxu0
      %v5558 = vadd.f32 0.0, %v5557
      %v5559 = vpop.f32.mrb[0].mxu0
      %5560 = vmatprep.mubr.bf16.mxu0 0
      %5561 = vmatmul.mubr.bf16.gmra.mrb[0].mxu0 %v5467
      %v5562 = vpop.f32.mrb[0].mxu0
      %v5563 = vadd.f32 0.0, %v5562
      %v5564 = vpop.f32.mrb[0].mxu0
      %v5565 = vpop.f32.mrb[0].mxu0
      %v5566 = vadd.f32 0.0, %v5565
      %v5567 = vpop.f32.mrb[0].mxu0
      %5568 = vdwg.mxu0
      %v5569 = vadd.f32 %v5315, %v5507
      %v5570 = vadd.f32 %v5316, %v5510
      %v5571 = vadd.f32 %v5317, %v5515
      %v5572 = vadd.f32 %v5318, %v5518
      %v5573 = vadd.f32 %v5319, %v5523
      %v5574 = vadd.f32 %v5320, %v5526
      %v5575 = vadd.f32 %v5321, %v5531
      %v5576 = vadd.f32 %v5322, %v5534
      %v5577 = vadd.f32 %v5323, %v5539
      %v5578 = vadd.f32 %v5324, %v5542
      %v5579 = vadd.f32 %v5325, %v5547
      %v5580 = vadd.f32 %v5326, %v5550
      %v5581 = vadd.f32 %v5327, %v5555
      %v5582 = vadd.f32 %v5328, %v5558
      %v5583 = vadd.f32 %v5329, %v5563
      %v5584 = vadd.f32 %v5330, %v5566
      %s5585 = scalar_lea.vmem [#allocation3], 24
      %v5586 = vld [vmem:[%s5585] sm:$0xf]
      %v5587 = vld [vmem:[%s5585 + $0x4] sm:$0xf]
      %v5588 = vld [vmem:[%s5585 + $0xc] sm:$0xf]
      %v5589 = vld [vmem:[%s5585 + $0x10] sm:$0xf]
      %v5590 = vld [vmem:[%s5585 + $0x18] sm:$0xf]
      %v5591 = vld [vmem:[%s5585 + $0x1c] sm:$0xf]
      %v5592 = vld [vmem:[%s5585 + $0x24] sm:$0xf]
      %v5593 = vld [vmem:[%s5585 + $0x28] sm:$0xf]
      %v5594 = vld [vmem:[%s5585 + $0x30] sm:$0xf]
      %v5595 = vld [vmem:[%s5585 + $0x34] sm:$0xf]
      %v5596 = vld [vmem:[%s5585 + $0x3c] sm:$0xf]
      %v5597 = vld [vmem:[%s5585 + $0x40] sm:$0xf]
      %v5598 = vld [vmem:[%s5585 + $0x48] sm:$0xf]
      %v5599 = vld [vmem:[%s5585 + $0x4c] sm:$0xf]
      %v5600 = vld [vmem:[%s5585 + $0x54] sm:$0xf]
      %v5601 = vld [vmem:[%s5585 + $0x58] sm:$0xf]
      %s5602 = scalar_lea.vmem %s5, 24
      %v5603 = vld [vmem:[%s5602] sm:$0xf]
      %v5620 = vunpack.c.l.b16 %v5586
      %v5621 = vunpack.c.l.b16 %v5587
      %v5622 = vunpack.c.l.b16 %v5588
      %v5623 = vunpack.c.l.b16 %v5589
      %v5624 = vunpack.c.l.b16 %v5590
      %v5625 = vunpack.c.l.b16 %v5591
      %v5626 = vunpack.c.l.b16 %v5592
      %v5627 = vunpack.c.l.b16 %v5593
      %v5628 = vunpack.c.l.b16 %v5594
      %v5629 = vunpack.c.l.b16 %v5595
      %v5630 = vunpack.c.l.b16 %v5596
      %v5631 = vunpack.c.l.b16 %v5597
      %v5632 = vunpack.c.l.b16 %v5598
      %v5633 = vunpack.c.l.b16 %v5599
      %v5634 = vunpack.c.l.b16 %v5600
      %v5635 = vunpack.c.l.b16 %v5601
      %v5636 = vpack.c.b16 %v5621, %v5620
      %v5637 = vpack.c.b16 %v5623, %v5622
      %v5638 = vpack.c.b16 %v5625, %v5624
      %v5639 = vpack.c.b16 %v5627, %v5626
      %v5640 = vpack.c.b16 %v5629, %v5628
      %v5641 = vpack.c.b16 %v5631, %v5630
      %v5642 = vpack.c.b16 %v5633, %v5632
      %v5643 = vpack.c.b16 %v5635, %v5634
      %v5645 = vsel %vm4214, %v5636, 0
      %v5648 = vsel %vm4214, %v5637, 0
      %v5651 = vsel %vm4214, %v5638, 0
      %v5654 = vsel %vm4214, %v5639, 0
      %v5657 = vsel %vm4214, %v5640, 0
      %v5660 = vsel %vm4214, %v5641, 0
      %v5663 = vsel %vm4214, %v5642, 0
      %v5666 = vsel %vm4214, %v5643, 0
      %v5669 = vsel %vm4239, %v5603, 0
      %5671 = vmatprep.subr.bf16.mxu0 0
      %5672 = vmatpush1.bf16.msra.mxu0 %v5669
      %5673 = vmatprep.subr.bf16.mxu0 0
      %5674 = vmatpush1.bf16.msra.mxu0 0
      %5675 = vmatprep.subr.bf16.mxu0 0
      %5676 = vmatpush1.bf16.msra.mxu0 0
      %5677 = vmatprep.subr.bf16.mxu0 0
      %5678 = vmatpush1.bf16.msra.mxu0 0
      %5679 = vmatprep.subr.bf16.mxu0 0
      %5680 = vmatpush1.bf16.msra.mxu0 0
      %5681 = vmatprep.subr.bf16.mxu0 0
      %5682 = vmatpush1.bf16.msra.mxu0 0
      %5683 = vmatprep.subr.bf16.mxu0 0
      %5684 = vmatpush1.bf16.msra.mxu0 0
      %5685 = vmatprep.subr.bf16.mxu0 0
      %5686 = vmatpush1.bf16.msra.mxu0 0
      %5687 = vmatprep.subr.bf16.mxu0 0
      %5688 = vmatpush1.bf16.msra.mxu0 0
      %5689 = vmatprep.subr.bf16.mxu0 0
      %5690 = vmatpush1.bf16.msra.mxu0 0
      %5691 = vmatprep.subr.bf16.mxu0 0
      %5692 = vmatpush1.bf16.msra.mxu0 0
      %5693 = vmatprep.subr.bf16.mxu0 0
      %5694 = vmatpush1.bf16.msra.mxu0 0
      %5695 = vmatprep.subr.bf16.mxu0 0
      %5696 = vmatpush1.bf16.msra.mxu0 0
      %5697 = vmatprep.subr.bf16.mxu0 0
      %5698 = vmatpush1.bf16.msra.mxu0 0
      %5699 = vmatprep.subr.bf16.mxu0 0
      %5700 = vmatpush1.bf16.msra.mxu0 0
      %5701 = vmatprep.subr.bf16.mxu0 0
      %5702 = vmatpush1.bf16.msra.mxu0 0
      %5703 = vmatprep.mubr.bf16.mxu0 0
      %5704 = vmatmul.mubr.bf16.gmra.mrb[0].mxu0 %v5645
      %v5705 = vpop.f32.mrb[0].mxu0
      %v5706 = vadd.f32 0.0, %v5705
      %v5707 = vpop.f32.mrb[0].mxu0
      %v5708 = vpop.f32.mrb[0].mxu0
      %v5709 = vadd.f32 0.0, %v5708
      %v5710 = vpop.f32.mrb[0].mxu0
      %5711 = vmatprep.mubr.bf16.mxu0 0
      %5712 = vmatmul.mubr.bf16.gmra.mrb[0].mxu0 %v5648
      %v5713 = vpop.f32.mrb[0].mxu0
      %v5714 = vadd.f32 0.0, %v5713
      %v5715 = vpop.f32.mrb[0].mxu0
      %v5716 = vpop.f32.mrb[0].mxu0
      %v5717 = vadd.f32 0.0, %v5716
      %v5718 = vpop.f32.mrb[0].mxu0
      %5719 = vmatprep.mubr.bf16.mxu0 0
      %5720 = vmatmul.mubr.bf16.gmra.mrb[0].mxu0 %v5651
      %v5721 = vpop.f32.mrb[0].mxu0
      %v5722 = vadd.f32 0.0, %v5721
      %v5723 = vpop.f32.mrb[0].mxu0
      %v5724 = vpop.f32.mrb[0].mxu0
      %v5725 = vadd.f32 0.0, %v5724
      %v5726 = vpop.f32.mrb[0].mxu0
      %5727 = vmatprep.mubr.bf16.mxu0 0
      %5728 = vmatmul.mubr.bf16.gmra.mrb[0].mxu0 %v5654
      %v5729 = vpop.f32.mrb[0].mxu0
      %v5730 = vadd.f32 0.0, %v5729
      %v5731 = vpop.f32.mrb[0].mxu0
      %v5732 = vpop.f32.mrb[0].mxu0
      %v5733 = vadd.f32 0.0, %v5732
      %v5734 = vpop.f32.mrb[0].mxu0
      %5735 = vmatprep.mubr.bf16.mxu0 0
      %5736 = vmatmul.mubr.bf16.gmra.mrb[0].mxu0 %v5657
      %v5737 = vpop.f32.mrb[0].mxu0
      %v5738 = vadd.f32 0.0, %v5737
      %v5739 = vpop.f32.mrb[0].mxu0
      %v5740 = vpop.f32.mrb[0].mxu0
      %v5741 = vadd.f32 0.0, %v5740
      %v5742 = vpop.f32.mrb[0].mxu0
      %5743 = vmatprep.mubr.bf16.mxu0 0
      %5744 = vmatmul.mubr.bf16.gmra.mrb[0].mxu0 %v5660
      %v5745 = vpop.f32.mrb[0].mxu0
      %v5746 = vadd.f32 0.0, %v5745
      %v5747 = vpop.f32.mrb[0].mxu0
      %v5748 = vpop.f32.mrb[0].mxu0
      %v5749 = vadd.f32 0.0, %v5748
      %v5750 = vpop.f32.mrb[0].mxu0
      %5751 = vmatprep.mubr.bf16.mxu0 0
      %5752 = vmatmul.mubr.bf16.gmra.mrb[0].mxu0 %v5663
      %v5753 = vpop.f32.mrb[0].mxu0
      %v5754 = vadd.f32 0.0, %v5753
      %v5755 = vpop.f32.mrb[0].mxu0
      %v5756 = vpop.f32.mrb[0].mxu0
      %v5757 = vadd.f32 0.0, %v5756
      %v5758 = vpop.f32.mrb[0].mxu0
      %5759 = vmatprep.mubr.bf16.mxu0 0
      %5760 = vmatmul.mubr.bf16.gmra.mrb[0].mxu0 %v5666
      %v5761 = vpop.f32.mrb[0].mxu0
      %v5762 = vadd.f32 0.0, %v5761
      %v5763 = vpop.f32.mrb[0].mxu0
      %v5764 = vpop.f32.mrb[0].mxu0
      %v5765 = vadd.f32 0.0, %v5764
      %v5766 = vpop.f32.mrb[0].mxu0
      %5767 = vdwg.mxu0
      %v5768 = vadd.f32 %v5569, %v5706
      %v5769 = vadd.f32 %v5570, %v5709
      %v5770 = vadd.f32 %v5571, %v5714
      %v5771 = vadd.f32 %v5572, %v5717
      %v5772 = vadd.f32 %v5573, %v5722
      %v5773 = vadd.f32 %v5574, %v5725
      %v5774 = vadd.f32 %v5575, %v5730
      %v5775 = vadd.f32 %v5576, %v5733
      %v5776 = vadd.f32 %v5577, %v5738
      %v5777 = vadd.f32 %v5578, %v5741
      %v5778 = vadd.f32 %v5579, %v5746
      %v5779 = vadd.f32 %v5580, %v5749
      %v5780 = vadd.f32 %v5581, %v5754
      %v5781 = vadd.f32 %v5582, %v5757
      %v5782 = vadd.f32 %v5583, %v5762
      %v5783 = vadd.f32 %v5584, %v5765
      %v5784 = vld [vmem:[%s5585] sm:$0xf]
      %v5785 = vld [vmem:[%s5585 + $0x4] sm:$0xf]
      %v5786 = vld [vmem:[%s5585 + $0x8] sm:$0x1]
      %v5787 = vld [vmem:[%s5585 + $0xc] sm:$0xf]
      %v5788 = vld [vmem:[%s5585 + $0x10] sm:$0xf]
      %v5789 = vld [vmem:[%s5585 + $0x14] sm:$0x1]
      %v5790 = vld [vmem:[%s5585 + $0x18] sm:$0xf]
      %v5791 = vld [vmem:[%s5585 + $0x1c] sm:$0xf]
      %v5792 = vld [vmem:[%s5585 + $0x20] sm:$0x1]
      %v5793 = vld [vmem:[%s5585 + $0x24] sm:$0xf]
      %v5794 = vld [vmem:[%s5585 + $0x28] sm:$0xf]
      %v5795 = vld [vmem:[%s5585 + $0x2c] sm:$0x1]
      %v5796 = vld [vmem:[%s5585 + $0x30] sm:$0xf]
      %v5797 = vld [vmem:[%s5585 + $0x34] sm:$0xf]
      %v5798 = vld [vmem:[%s5585 + $0x38] sm:$0x1]
      %v5799 = vld [vmem:[%s5585 + $0x3c] sm:$0xf]
      %v5800 = vld [vmem:[%s5585 + $0x40] sm:$0xf]
      %v5801 = vld [vmem:[%s5585 + $0x44] sm:$0x1]
      %v5802 = vld [vmem:[%s5585 + $0x48] sm:$0xf]
      %v5803 = vld [vmem:[%s5585 + $0x4c] sm:$0xf]
      %v5804 = vld [vmem:[%s5585 + $0x50] sm:$0x1]
      %v5805 = vld [vmem:[%s5585 + $0x54] sm:$0xf]
      %v5806 = vld [vmem:[%s5585 + $0x58] sm:$0xf]
      %v5807 = vld [vmem:[%s5585 + $0x5c] sm:$0x1]
      %v5809 = vshrl.u32 %v5784, 16
      %v5811 = vrot.slane %v5809, 4
      %v5812 = vshll.u32 %v5784, 16
      %v5814 = vrot.slane %v5812, 5
      %v5815 = vor.u32 %v5811, %v5814
      %v5816 = vrot.slane %v5815, 4
      %v5818 = vshll.u32 %v5785, 16
      %v5820 = vrot.slane %v5818, 5
      %v5821 = vsel %vm532, %v5816, %v5820
      %v5822 = vshrl.u32 %v5785, 16
      %v5824 = vrot.slane %v5822, 4
      %v5825 = vor.u32 %v5824, %v5820
      %v5826 = vrot.slane %v5825, 4
      %v5828 = vshll.u32 %v5786, 16
      %v5830 = vrot.slane %v5828, 5
      %v5831 = vsel %vm532, %v5826, %v5830
      %v5833 = vshrl.u32 %v5787, 16
      %v5835 = vrot.slane %v5833, 4
      %v5836 = vshll.u32 %v5787, 16
      %v5838 = vrot.slane %v5836, 5
      %v5839 = vor.u32 %v5835, %v5838
      %v5840 = vrot.slane %v5839, 4
      %v5842 = vshll.u32 %v5788, 16
      %v5844 = vrot.slane %v5842, 5
      %v5845 = vsel %vm532, %v5840, %v5844
      %v5846 = vshrl.u32 %v5788, 16
      %v5848 = vrot.slane %v5846, 4
      %v5849 = vor.u32 %v5848, %v5844
      %v5850 = vrot.slane %v5849, 4
      %v5852 = vshll.u32 %v5789, 16
      %v5854 = vrot.slane %v5852, 5
      %v5855 = vsel %vm532, %v5850, %v5854
      %v5857 = vshrl.u32 %v5790, 16
      %v5859 = vrot.slane %v5857, 4
      %v5860 = vshll.u32 %v5790, 16
      %v5862 = vrot.slane %v5860, 5
      %v5863 = vor.u32 %v5859, %v5862
      %v5864 = vrot.slane %v5863, 4
      %v5866 = vshll.u32 %v5791, 16
      %v5868 = vrot.slane %v5866, 5
      %v5869 = vsel %vm532, %v5864, %v5868
      %v5870 = vshrl.u32 %v5791, 16
      %v5872 = vrot.slane %v5870, 4
      %v5873 = vor.u32 %v5872, %v5868
      %v5874 = vrot.slane %v5873, 4
      %v5876 = vshll.u32 %v5792, 16
      %v5878 = vrot.slane %v5876, 5
      %v5879 = vsel %vm532, %v5874, %v5878
      %v5881 = vshrl.u32 %v5793, 16
      %v5883 = vrot.slane %v5881, 4
      %v5884 = vshll.u32 %v5793, 16
      %v5886 = vrot.slane %v5884, 5
      %v5887 = vor.u32 %v5883, %v5886
      %v5888 = vrot.slane %v5887, 4
      %v5890 = vshll.u32 %v5794, 16
      %v5892 = vrot.slane %v5890, 5
      %v5893 = vsel %vm532, %v5888, %v5892
      %v5894 = vshrl.u32 %v5794, 16
      %v5896 = vrot.slane %v5894, 4
      %v5897 = vor.u32 %v5896, %v5892
      %v5898 = vrot.slane %v5897, 4
      %v5900 = vshll.u32 %v5795, 16
      %v5902 = vrot.slane %v5900, 5
      %v5903 = vsel %vm532, %v5898, %v5902
      %v5905 = vshrl.u32 %v5796, 16
      %v5907 = vrot.slane %v5905, 4
      %v5908 = vshll.u32 %v5796, 16
      %v5910 = vrot.slane %v5908, 5
      %v5911 = vor.u32 %v5907, %v5910
      %v5912 = vrot.slane %v5911, 4
      %v5914 = vshll.u32 %v5797, 16
      %v5916 = vrot.slane %v5914, 5
      %v5917 = vsel %vm532, %v5912, %v5916
      %v5918 = vshrl.u32 %v5797, 16
      %v5920 = vrot.slane %v5918, 4
      %v5921 = vor.u32 %v5920, %v5916
      %v5922 = vrot.slane %v5921, 4
      %v5924 = vshll.u32 %v5798, 16
      %v5926 = vrot.slane %v5924, 5
      %v5927 = vsel %vm532, %v5922, %v5926
      %v5929 = vshrl.u32 %v5799, 16
      %v5931 = vrot.slane %v5929, 4
      %v5932 = vshll.u32 %v5799, 16
      %v5934 = vrot.slane %v5932, 5
      %v5935 = vor.u32 %v5931, %v5934
      %v5936 = vrot.slane %v5935, 4
      %v5938 = vshll.u32 %v5800, 16
      %v5940 = vrot.slane %v5938, 5
      %v5941 = vsel %vm532, %v5936, %v5940
      %v5942 = vshrl.u32 %v5800, 16
      %v5944 = vrot.slane %v5942, 4
      %v5945 = vor.u32 %v5944, %v5940
      %v5946 = vrot.slane %v5945, 4
      %v5948 = vshll.u32 %v5801, 16
      %v5950 = vrot.slane %v5948, 5
      %v5951 = vsel %vm532, %v5946, %v5950
      %v5953 = vshrl.u32 %v5802, 16
      %v5955 = vrot.slane %v5953, 4
      %v5956 = vshll.u32 %v5802, 16
      %v5958 = vrot.slane %v5956, 5
      %v5959 = vor.u32 %v5955, %v5958
      %v5960 = vrot.slane %v5959, 4
      %v5962 = vshll.u32 %v5803, 16
      %v5964 = vrot.slane %v5962, 5
      %v5965 = vsel %vm532, %v5960, %v5964
      %v5966 = vshrl.u32 %v5803, 16
      %v5968 = vrot.slane %v5966, 4
      %v5969 = vor.u32 %v5968, %v5964
      %v5970 = vrot.slane %v5969, 4
      %v5972 = vshll.u32 %v5804, 16
      %v5974 = vrot.slane %v5972, 5
      %v5975 = vsel %vm532, %v5970, %v5974
      %v5977 = vshrl.u32 %v5805, 16
      %v5979 = vrot.slane %v5977, 4
      %v5980 = vshll.u32 %v5805, 16
      %v5982 = vrot.slane %v5980, 5
      %v5983 = vor.u32 %v5979, %v5982
      %v5984 = vrot.slane %v5983, 4
      %v5986 = vshll.u32 %v5806, 16
      %v5988 = vrot.slane %v5986, 5
      %v5989 = vsel %vm532, %v5984, %v5988
      %v5990 = vshrl.u32 %v5806, 16
      %v5992 = vrot.slane %v5990, 4
      %v5993 = vor.u32 %v5992, %v5988
      %v5994 = vrot.slane %v5993, 4
      %v5996 = vshll.u32 %v5807, 16
      %v5998 = vrot.slane %v5996, 5
      %v5999 = vsel %vm532, %v5994, %v5998
      %s6000 = scalar_lea.vmem %s5, 28
      %v6001 = vld [vmem:[%s6000] sm:$0xf]
      %v6002 = vunpack.c.l.b16 %v5821
      %v6003 = vunpack.c.l.b16 %v5831
      %v6004 = vunpack.c.l.b16 %v5845
      %v6005 = vunpack.c.l.b16 %v5855
      %v6006 = vunpack.c.l.b16 %v5869
      %v6007 = vunpack.c.l.b16 %v5879
      %v6008 = vunpack.c.l.b16 %v5893
      %v6009 = vunpack.c.l.b16 %v5903
      %v6010 = vunpack.c.l.b16 %v5917
      %v6011 = vunpack.c.l.b16 %v5927
      %v6012 = vunpack.c.l.b16 %v5941
      %v6013 = vunpack.c.l.b16 %v5951
      %v6014 = vunpack.c.l.b16 %v5965
      %v6015 = vunpack.c.l.b16 %v5975
      %v6016 = vunpack.c.l.b16 %v5989
      %v6017 = vunpack.c.l.b16 %v5999
      %v6018 = vpack.c.b16 %v6003, %v6002
      %v6019 = vpack.c.b16 %v6005, %v6004
      %v6020 = vpack.c.b16 %v6007, %v6006
      %v6021 = vpack.c.b16 %v6009, %v6008
      %v6022 = vpack.c.b16 %v6011, %v6010
      %v6023 = vpack.c.b16 %v6013, %v6012
      %v6024 = vpack.c.b16 %v6015, %v6014
      %v6025 = vpack.c.b16 %v6017, %v6016
      %v6027 = vsel %vm4214, %v6018, 0
      %v6030 = vsel %vm4214, %v6019, 0
      %v6033 = vsel %vm4214, %v6020, 0
      %v6036 = vsel %vm4214, %v6021, 0
      %v6039 = vsel %vm4214, %v6022, 0
      %v6042 = vsel %vm4214, %v6023, 0
      %v6045 = vsel %vm4214, %v6024, 0
      %v6048 = vsel %vm4214, %v6025, 0
      %v6051 = vsel %vm4239, %v6001, 0
      %6053 = vmatprep.subr.bf16.mxu0 0
      %6054 = vmatpush1.bf16.msra.mxu0 %v6051
      %6055 = vmatprep.subr.bf16.mxu0 0
      %6056 = vmatpush1.bf16.msra.mxu0 0
      %6057 = vmatprep.subr.bf16.mxu0 0
      %6058 = vmatpush1.bf16.msra.mxu0 0
      %6059 = vmatprep.subr.bf16.mxu0 0
      %6060 = vmatpush1.bf16.msra.mxu0 0
      %6061 = vmatprep.subr.bf16.mxu0 0
      %6062 = vmatpush1.bf16.msra.mxu0 0
      %6063 = vmatprep.subr.bf16.mxu0 0
      %6064 = vmatpush1.bf16.msra.mxu0 0
      %6065 = vmatprep.subr.bf16.mxu0 0
      %6066 = vmatpush1.bf16.msra.mxu0 0
      %6067 = vmatprep.subr.bf16.mxu0 0
      %6068 = vmatpush1.bf16.msra.mxu0 0
      %6069 = vmatprep.subr.bf16.mxu0 0
      %6070 = vmatpush1.bf16.msra.mxu0 0
      %6071 = vmatprep.subr.bf16.mxu0 0
      %6072 = vmatpush1.bf16.msra.mxu0 0
      %6073 = vmatprep.subr.bf16.mxu0 0
      %6074 = vmatpush1.bf16.msra.mxu0 0
      %6075 = vmatprep.subr.bf16.mxu0 0
      %6076 = vmatpush1.bf16.msra.mxu0 0
      %6077 = vmatprep.subr.bf16.mxu0 0
      %6078 = vmatpush1.bf16.msra.mxu0 0
      %6079 = vmatprep.subr.bf16.mxu0 0
      %6080 = vmatpush1.bf16.msra.mxu0 0
      %6081 = vmatprep.subr.bf16.mxu0 0
      %6082 = vmatpush1.bf16.msra.mxu0 0
      %6083 = vmatprep.subr.bf16.mxu0 0
      %6084 = vmatpush1.bf16.msra.mxu0 0
      %6085 = vmatprep.mubr.bf16.mxu0 0
      %6086 = vmatmul.mubr.bf16.gmra.mrb[0].mxu0 %v6027
      %v6087 = vpop.f32.mrb[0].mxu0
      %v6088 = vadd.f32 0.0, %v6087
      %v6089 = vpop.f32.mrb[0].mxu0
      %v6090 = vpop.f32.mrb[0].mxu0
      %v6091 = vadd.f32 0.0, %v6090
      %v6092 = vpop.f32.mrb[0].mxu0
      %6093 = vmatprep.mubr.bf16.mxu0 0
      %6094 = vmatmul.mubr.bf16.gmra.mrb[0].mxu0 %v6030
      %v6095 = vpop.f32.mrb[0].mxu0
      %v6096 = vadd.f32 0.0, %v6095
      %v6097 = vpop.f32.mrb[0].mxu0
      %v6098 = vpop.f32.mrb[0].mxu0
      %v6099 = vadd.f32 0.0, %v6098
      %v6100 = vpop.f32.mrb[0].mxu0
      %6101 = vmatprep.mubr.bf16.mxu0 0
      %6102 = vmatmul.mubr.bf16.gmra.mrb[0].mxu0 %v6033
      %v6103 = vpop.f32.mrb[0].mxu0
      %v6104 = vadd.f32 0.0, %v6103
      %v6105 = vpop.f32.mrb[0].mxu0
      %v6106 = vpop.f32.mrb[0].mxu0
      %v6107 = vadd.f32 0.0, %v6106
      %v6108 = vpop.f32.mrb[0].mxu0
      %6109 = vmatprep.mubr.bf16.mxu0 0
      %6110 = vmatmul.mubr.bf16.gmra.mrb[0].mxu0 %v6036
      %v6111 = vpop.f32.mrb[0].mxu0
      %v6112 = vadd.f32 0.0, %v6111
      %v6113 = vpop.f32.mrb[0].mxu0
      %v6114 = vpop.f32.mrb[0].mxu0
      %v6115 = vadd.f32 0.0, %v6114
      %v6116 = vpop.f32.mrb[0].mxu0
      %6117 = vmatprep.mubr.bf16.mxu0 0
      %6118 = vmatmul.mubr.bf16.gmra.mrb[0].mxu0 %v6039
      %v6119 = vpop.f32.mrb[0].mxu0
      %v6120 = vadd.f32 0.0, %v6119
      %v6121 = vpop.f32.mrb[0].mxu0
      %v6122 = vpop.f32.mrb[0].mxu0
      %v6123 = vadd.f32 0.0, %v6122
      %v6124 = vpop.f32.mrb[0].mxu0
      %6125 = vmatprep.mubr.bf16.mxu0 0
      %6126 = vmatmul.mubr.bf16.gmra.mrb[0].mxu0 %v6042
      %v6127 = vpop.f32.mrb[0].mxu0
      %v6128 = vadd.f32 0.0, %v6127
      %v6129 = vpop.f32.mrb[0].mxu0
      %v6130 = vpop.f32.mrb[0].mxu0
      %v6131 = vadd.f32 0.0, %v6130
      %v6132 = vpop.f32.mrb[0].mxu0
      %6133 = vmatprep.mubr.bf16.mxu0 0
      %6134 = vmatmul.mubr.bf16.gmra.mrb[0].mxu0 %v6045
      %v6135 = vpop.f32.mrb[0].mxu0
      %v6136 = vadd.f32 0.0, %v6135
      %v6137 = vpop.f32.mrb[0].mxu0
      %v6138 = vpop.f32.mrb[0].mxu0
      %v6139 = vadd.f32 0.0, %v6138
      %v6140 = vpop.f32.mrb[0].mxu0
      %6141 = vmatprep.mubr.bf16.mxu0 0
      %6142 = vmatmul.mubr.bf16.gmra.mrb[0].mxu0 %v6048
      %v6143 = vpop.f32.mrb[0].mxu0
      %v6144 = vadd.f32 0.0, %v6143
      %v6145 = vpop.f32.mrb[0].mxu0
      %v6146 = vpop.f32.mrb[0].mxu0
      %v6147 = vadd.f32 0.0, %v6146
      %v6148 = vpop.f32.mrb[0].mxu0
      %6149 = vdwg.mxu0
      %v6150 = vadd.f32 %v5768, %v6088
      %v6151 = vadd.f32 %v5769, %v6091
      %v6152 = vadd.f32 %v5770, %v6096
      %v6153 = vadd.f32 %v5771, %v6099
      %v6154 = vadd.f32 %v5772, %v6104
      %v6155 = vadd.f32 %v5773, %v6107
      %v6156 = vadd.f32 %v5774, %v6112
      %v6157 = vadd.f32 %v5775, %v6115
      %v6158 = vadd.f32 %v5776, %v6120
      %v6159 = vadd.f32 %v5777, %v6123
      %v6160 = vadd.f32 %v5778, %v6128
      %v6161 = vadd.f32 %v5779, %v6131
      %v6162 = vadd.f32 %v5780, %v6136
      %v6163 = vadd.f32 %v5781, %v6139
      %v6164 = vadd.f32 %v5782, %v6144
      %v6165 = vadd.f32 %v5783, %v6147
      %v6166 = vld [vmem:[%s5585] sm:$0xe]
      %v6167 = vld [vmem:[%s5585 + $0xc] sm:$0xe]
      %v6168 = vld [vmem:[%s5585 + $0x18] sm:$0xe]
      %v6169 = vld [vmem:[%s5585 + $0x24] sm:$0xe]
      %v6170 = vld [vmem:[%s5585 + $0x30] sm:$0xe]
      %v6171 = vld [vmem:[%s5585 + $0x3c] sm:$0xe]
      %v6172 = vld [vmem:[%s5585 + $0x48] sm:$0xe]
      %v6173 = vld [vmem:[%s5585 + $0x54] sm:$0xe]
      %v6198 = vrot.slane %v6166, 5
      %v6199 = vrot.slane %v6198, 4
      %v6200 = vrot.slane %v5785, 5
      %v6201 = vsel %vm1181, %v6199, %v6200
      %v6202 = vrot.slane %v6200, 4
      %v6203 = vrot.slane %v5786, 5
      %v6204 = vsel %vm1181, %v6202, %v6203
      %v6205 = vrot.slane %v6167, 5
      %v6206 = vrot.slane %v6205, 4
      %v6207 = vrot.slane %v5788, 5
      %v6208 = vsel %vm1181, %v6206, %v6207
      %v6209 = vrot.slane %v6207, 4
      %v6210 = vrot.slane %v5789, 5
      %v6211 = vsel %vm1181, %v6209, %v6210
      %v6212 = vrot.slane %v6168, 5
      %v6213 = vrot.slane %v6212, 4
      %v6214 = vrot.slane %v5791, 5
      %v6215 = vsel %vm1181, %v6213, %v6214
      %v6216 = vrot.slane %v6214, 4
      %v6217 = vrot.slane %v5792, 5
      %v6218 = vsel %vm1181, %v6216, %v6217
      %v6219 = vrot.slane %v6169, 5
      %v6220 = vrot.slane %v6219, 4
      %v6221 = vrot.slane %v5794, 5
      %v6222 = vsel %vm1181, %v6220, %v6221
      %v6223 = vrot.slane %v6221, 4
      %v6224 = vrot.slane %v5795, 5
      %v6225 = vsel %vm1181, %v6223, %v6224
      %v6226 = vrot.slane %v6170, 5
      %v6227 = vrot.slane %v6226, 4
      %v6228 = vrot.slane %v5797, 5
      %v6229 = vsel %vm1181, %v6227, %v6228
      %v6230 = vrot.slane %v6228, 4
      %v6231 = vrot.slane %v5798, 5
      %v6232 = vsel %vm1181, %v6230, %v6231
      %v6233 = vrot.slane %v6171, 5
      %v6234 = vrot.slane %v6233, 4
      %v6235 = vrot.slane %v5800, 5
      %v6236 = vsel %vm1181, %v6234, %v6235
      %v6237 = vrot.slane %v6235, 4
      %v6238 = vrot.slane %v5801, 5
      %v6239 = vsel %vm1181, %v6237, %v6238
      %v6240 = vrot.slane %v6172, 5
      %v6241 = vrot.slane %v6240, 4
      %v6242 = vrot.slane %v5803, 5
      %v6243 = vsel %vm1181, %v6241, %v6242
      %v6244 = vrot.slane %v6242, 4
      %v6245 = vrot.slane %v5804, 5
      %v6246 = vsel %vm1181, %v6244, %v6245
      %v6247 = vrot.slane %v6173, 5
      %v6248 = vrot.slane %v6247, 4
      %v6249 = vrot.slane %v5806, 5
      %v6250 = vsel %vm1181, %v6248, %v6249
      %v6251 = vrot.slane %v6249, 4
      %v6252 = vrot.slane %v5807, 5
      %v6253 = vsel %vm1181, %v6251, %v6252
      %s6254 = scalar_lea.vmem %s5, 32
      %v6255 = vld [vmem:[%s6254] sm:$0xf]
      %v6256 = vunpack.c.l.b16 %v6201
      %v6257 = vunpack.c.l.b16 %v6204
      %v6258 = vunpack.c.l.b16 %v6208
      %v6259 = vunpack.c.l.b16 %v6211
      %v6260 = vunpack.c.l.b16 %v6215
      %v6261 = vunpack.c.l.b16 %v6218
      %v6262 = vunpack.c.l.b16 %v6222
      %v6263 = vunpack.c.l.b16 %v6225
      %v6264 = vunpack.c.l.b16 %v6229
      %v6265 = vunpack.c.l.b16 %v6232
      %v6266 = vunpack.c.l.b16 %v6236
      %v6267 = vunpack.c.l.b16 %v6239
      %v6268 = vunpack.c.l.b16 %v6243
      %v6269 = vunpack.c.l.b16 %v6246
      %v6270 = vunpack.c.l.b16 %v6250
      %v6271 = vunpack.c.l.b16 %v6253
      %v6272 = vpack.c.b16 %v6257, %v6256
      %v6273 = vpack.c.b16 %v6259, %v6258
      %v6274 = vpack.c.b16 %v6261, %v6260
      %v6275 = vpack.c.b16 %v6263, %v6262
      %v6276 = vpack.c.b16 %v6265, %v6264
      %v6277 = vpack.c.b16 %v6267, %v6266
      %v6278 = vpack.c.b16 %v6269, %v6268
      %v6279 = vpack.c.b16 %v6271, %v6270
      %v6281 = vsel %vm4214, %v6272, 0
      %v6284 = vsel %vm4214, %v6273, 0
      %v6287 = vsel %vm4214, %v6274, 0
      %v6290 = vsel %vm4214, %v6275, 0
      %v6293 = vsel %vm4214, %v6276, 0
      %v6296 = vsel %vm4214, %v6277, 0
      %v6299 = vsel %vm4214, %v6278, 0
      %v6302 = vsel %vm4214, %v6279, 0
      %v6305 = vsel %vm4239, %v6255, 0
      %6307 = vmatprep.subr.bf16.mxu0 0
      %6308 = vmatpush1.bf16.msra.mxu0 %v6305
      %6309 = vmatprep.subr.bf16.mxu0 0
      %6310 = vmatpush1.bf16.msra.mxu0 0
      %6311 = vmatprep.subr.bf16.mxu0 0
      %6312 = vmatpush1.bf16.msra.mxu0 0
      %6313 = vmatprep.subr.bf16.mxu0 0
      %6314 = vmatpush1.bf16.msra.mxu0 0
      %6315 = vmatprep.subr.bf16.mxu0 0
      %6316 = vmatpush1.bf16.msra.mxu0 0
      %6317 = vmatprep.subr.bf16.mxu0 0
      %6318 = vmatpush1.bf16.msra.mxu0 0
      %6319 = vmatprep.subr.bf16.mxu0 0
      %6320 = vmatpush1.bf16.msra.mxu0 0
      %6321 = vmatprep.subr.bf16.mxu0 0
      %6322 = vmatpush1.bf16.msra.mxu0 0
      %6323 = vmatprep.subr.bf16.mxu0 0
      %6324 = vmatpush1.bf16.msra.mxu0 0
      %6325 = vmatprep.subr.bf16.mxu0 0
      %6326 = vmatpush1.bf16.msra.mxu0 0
      %6327 = vmatprep.subr.bf16.mxu0 0
      %6328 = vmatpush1.bf16.msra.mxu0 0
      %6329 = vmatprep.subr.bf16.mxu0 0
      %6330 = vmatpush1.bf16.msra.mxu0 0
      %6331 = vmatprep.subr.bf16.mxu0 0
      %6332 = vmatpush1.bf16.msra.mxu0 0
      %6333 = vmatprep.subr.bf16.mxu0 0
      %6334 = vmatpush1.bf16.msra.mxu0 0
      %6335 = vmatprep.subr.bf16.mxu0 0
      %6336 = vmatpush1.bf16.msra.mxu0 0
      %6337 = vmatprep.subr.bf16.mxu0 0
      %6338 = vmatpush1.bf16.msra.mxu0 0
      %6339 = vmatprep.mubr.bf16.mxu0 0
      %6340 = vmatmul.mubr.bf16.gmra.mrb[0].mxu0 %v6281
      %v6341 = vpop.f32.mrb[0].mxu0
      %v6342 = vadd.f32 0.0, %v6341
      %v6343 = vpop.f32.mrb[0].mxu0
      %v6344 = vpop.f32.mrb[0].mxu0
      %v6345 = vadd.f32 0.0, %v6344
      %v6346 = vpop.f32.mrb[0].mxu0
      %6347 = vmatprep.mubr.bf16.mxu0 0
      %6348 = vmatmul.mubr.bf16.gmra.mrb[0].mxu0 %v6284
      %v6349 = vpop.f32.mrb[0].mxu0
      %v6350 = vadd.f32 0.0, %v6349
      %v6351 = vpop.f32.mrb[0].mxu0
      %v6352 = vpop.f32.mrb[0].mxu0
      %v6353 = vadd.f32 0.0, %v6352
      %v6354 = vpop.f32.mrb[0].mxu0
      %6355 = vmatprep.mubr.bf16.mxu0 0
      %6356 = vmatmul.mubr.bf16.gmra.mrb[0].mxu0 %v6287
      %v6357 = vpop.f32.mrb[0].mxu0
      %v6358 = vadd.f32 0.0, %v6357
      %v6359 = vpop.f32.mrb[0].mxu0
      %v6360 = vpop.f32.mrb[0].mxu0
      %v6361 = vadd.f32 0.0, %v6360
      %v6362 = vpop.f32.mrb[0].mxu0
      %6363 = vmatprep.mubr.bf16.mxu0 0
      %6364 = vmatmul.mubr.bf16.gmra.mrb[0].mxu0 %v6290
      %v6365 = vpop.f32.mrb[0].mxu0
      %v6366 = vadd.f32 0.0, %v6365
      %v6367 = vpop.f32.mrb[0].mxu0
      %v6368 = vpop.f32.mrb[0].mxu0
      %v6369 = vadd.f32 0.0, %v6368
      %v6370 = vpop.f32.mrb[0].mxu0
      %6371 = vmatprep.mubr.bf16.mxu0 0
      %6372 = vmatmul.mubr.bf16.gmra.mrb[0].mxu0 %v6293
      %v6373 = vpop.f32.mrb[0].mxu0
      %v6374 = vadd.f32 0.0, %v6373
      %v6375 = vpop.f32.mrb[0].mxu0
      %v6376 = vpop.f32.mrb[0].mxu0
      %v6377 = vadd.f32 0.0, %v6376
      %v6378 = vpop.f32.mrb[0].mxu0
      %6379 = vmatprep.mubr.bf16.mxu0 0
      %6380 = vmatmul.mubr.bf16.gmra.mrb[0].mxu0 %v6296
      %v6381 = vpop.f32.mrb[0].mxu0
      %v6382 = vadd.f32 0.0, %v6381
      %v6383 = vpop.f32.mrb[0].mxu0
      %v6384 = vpop.f32.mrb[0].mxu0
      %v6385 = vadd.f32 0.0, %v6384
      %v6386 = vpop.f32.mrb[0].mxu0
      %6387 = vmatprep.mubr.bf16.mxu0 0
      %6388 = vmatmul.mubr.bf16.gmra.mrb[0].mxu0 %v6299
      %v6389 = vpop.f32.mrb[0].mxu0
      %v6390 = vadd.f32 0.0, %v6389
      %v6391 = vpop.f32.mrb[0].mxu0
      %v6392 = vpop.f32.mrb[0].mxu0
      %v6393 = vadd.f32 0.0, %v6392
      %v6394 = vpop.f32.mrb[0].mxu0
      %6395 = vmatprep.mubr.bf16.mxu0 0
      %6396 = vmatmul.mubr.bf16.gmra.mrb[0].mxu0 %v6302
      %v6397 = vpop.f32.mrb[0].mxu0
      %v6398 = vadd.f32 0.0, %v6397
      %v6399 = vpop.f32.mrb[0].mxu0
      %v6400 = vpop.f32.mrb[0].mxu0
      %v6401 = vadd.f32 0.0, %v6400
      %v6402 = vpop.f32.mrb[0].mxu0
      %6403 = vdwg.mxu0
      %v6404 = vadd.f32 %v6150, %v6342
      %v6405 = vadd.f32 %v6151, %v6345
      %v6406 = vadd.f32 %v6152, %v6350
      %v6407 = vadd.f32 %v6153, %v6353
      %v6408 = vadd.f32 %v6154, %v6358
      %v6409 = vadd.f32 %v6155, %v6361
      %v6410 = vadd.f32 %v6156, %v6366
      %v6411 = vadd.f32 %v6157, %v6369
      %v6412 = vadd.f32 %v6158, %v6374
      %v6413 = vadd.f32 %v6159, %v6377
      %v6414 = vadd.f32 %v6160, %v6382
      %v6415 = vadd.f32 %v6161, %v6385
      %v6416 = vadd.f32 %v6162, %v6390
      %v6417 = vadd.f32 %v6163, %v6393
      %v6418 = vadd.f32 %v6164, %v6398
      %v6419 = vadd.f32 %v6165, %v6401
      %v6420 = vld [vmem:[%s6] sm:$0x1]
      %v6422 = vlaneseq
      %v6423 = vshrl.u32 %v6422, 7
      %v6424 = vsub.s32 0, %v6423
      %v6425 = vrot.slane %v6420, %v6424
      %v6427 = vmul.f32 %v6404, %v6425
      %v6428 = vmul.f32 %v6405, %v6425
      %v6429 = vmul.f32 %v6406, %v6425
      %v6430 = vmul.f32 %v6407, %v6425
      %v6431 = vmul.f32 %v6408, %v6425
      %v6432 = vmul.f32 %v6409, %v6425
      %v6433 = vmul.f32 %v6410, %v6425
      %v6434 = vmul.f32 %v6411, %v6425
      %v6435 = vmul.f32 %v6412, %v6425
      %v6436 = vmul.f32 %v6413, %v6425
      %v6437 = vmul.f32 %v6414, %v6425
      %v6438 = vmul.f32 %v6415, %v6425
      %v6439 = vmul.f32 %v6416, %v6425
      %v6440 = vmul.f32 %v6417, %v6425
      %v6441 = vmul.f32 %v6418, %v6425
      %v6442 = vmul.f32 %v6419, %v6425
      %v6443 = vld [vmem:[%s7] sm:$0x1]
      %v6445 = vlaneseq
      %v6446 = vshrl.u32 %v6445, 7
      %v6447 = vsub.s32 0, %v6446
      %v6448 = vrot.slane %v6443, %v6447
      %v6450 = vadd.f32 %v6427, %v6448
      %v6451 = vadd.f32 %v6428, %v6448
      %v6452 = vadd.f32 %v6429, %v6448
      %v6453 = vadd.f32 %v6430, %v6448
      %v6454 = vadd.f32 %v6431, %v6448
      %v6455 = vadd.f32 %v6432, %v6448
      %v6456 = vadd.f32 %v6433, %v6448
      %v6457 = vadd.f32 %v6434, %v6448
      %v6458 = vadd.f32 %v6435, %v6448
      %v6459 = vadd.f32 %v6436, %v6448
      %v6460 = vadd.f32 %v6437, %v6448
      %v6461 = vadd.f32 %v6438, %v6448
      %v6462 = vadd.f32 %v6439, %v6448
      %v6463 = vadd.f32 %v6440, %v6448
      %v6464 = vadd.f32 %v6441, %v6448
      %v6465 = vadd.f32 %v6442, %v6448
      %v6466 = vmax.f32 %v6450, 0.0
      %v6467 = vmax.f32 %v6451, 0.0
      %v6468 = vmax.f32 %v6452, 0.0
      %v6469 = vmax.f32 %v6453, 0.0
      %v6470 = vmax.f32 %v6454, 0.0
      %v6471 = vmax.f32 %v6455, 0.0
      %v6472 = vmax.f32 %v6456, 0.0
      %v6473 = vmax.f32 %v6457, 0.0
      %v6474 = vmax.f32 %v6458, 0.0
      %v6475 = vmax.f32 %v6459, 0.0
      %v6476 = vmax.f32 %v6460, 0.0
      %v6477 = vmax.f32 %v6461, 0.0
      %v6478 = vmax.f32 %v6462, 0.0
      %v6479 = vmax.f32 %v6463, 0.0
      %v6480 = vmax.f32 %v6464, 0.0
      %v6481 = vmax.f32 %v6465, 0.0
      %6482 = vxpose.xlu0.b32.start [1/16] %v6466, 128
      %6483 = vxpose.xlu0.b32.cont [2/16] %v6467, 128
      %6484 = vxpose.xlu0.b32.cont [3/16] %v6468, 128
      %6485 = vxpose.xlu0.b32.cont [4/16] %v6469, 128
      %6486 = vxpose.xlu0.b32.cont [5/16] %v6470, 128
      %6487 = vxpose.xlu0.b32.cont [6/16] %v6471, 128
      %6488 = vxpose.xlu0.b32.cont [7/16] %v6472, 128
      %6489 = vxpose.xlu0.b32.cont [8/16] %v6473, 128
      %6490 = vxpose.xlu0.b32.cont [9/16] %v6474, 128
      %6491 = vxpose.xlu0.b32.cont [10/16] %v6475, 128
      %6492 = vxpose.xlu0.b32.cont [11/16] %v6476, 128
      %6493 = vxpose.xlu0.b32.cont [12/16] %v6477, 128
      %6494 = vxpose.xlu0.b32.cont [13/16] %v6478, 128
      %6495 = vxpose.xlu0.b32.cont [14/16] %v6479, 128
      %6496 = vxpose.xlu0.b32.cont [15/16] %v6480, 128
      %6497 = vxpose.xlu0.b32.end [16/16] %v6481, 128
      %v6498 = vpop.trf.xlu0
      %v6499 = vpop.trf.xlu0
      %v6500 = vpop.trf.xlu0
      %v6501 = vpop.trf.xlu0
      %v6502 = vpop.trf.xlu0
      %v6503 = vpop.trf.xlu0
      %v6504 = vpop.trf.xlu0
      %v6505 = vpop.trf.xlu0
      %v6506 = vpop.trf.xlu0
      %v6507 = vpop.trf.xlu0
      %v6508 = vpop.trf.xlu0
      %v6509 = vpop.trf.xlu0
      %v6510 = vpop.trf.xlu0
      %v6511 = vpop.trf.xlu0
      %v6512 = vpop.trf.xlu0
      %v6513 = vpop.trf.xlu0
      %6514 = vst [vmem:[%s422] sm:$0xff] %v6498
      %p6515 = scmp.lt.s32.totalorder %s23, 1
      %s6516 = scalar_select %p6515, %s23, 1
      %p6517 = scmp.lt.s32.totalorder %s24, 1
      %s6518 = scalar_select %p6517, %s24, 1
      %s6519 = smul.addr %s6516, 2
      %s6520 = sadd.s32 %s6518, %s6519
      %s6521 = smul.addr %s6520, 8
      %s6522 = scalar_lea.vmem %s8, %s6521
      // Predicated region
      $region61: #{_lambda_.1} parent=51 // pred_check
        %p6523 = pneg %p237
      $region62: #{_lambda_.1} parent=51 // pred_check_branch
        %6525 = sbr.rel (%p6523) target = $region64
      $region63: #{_lambda_.1} parent=51 // pred_region
        _
      $region64: #{_lambda_.1} parent=51 // pred_fallthru
        _
    $region52: #{_lambda_.1} parent=5 // pred_fallthru
      _
    %p6526 = scmp.le.s32.totalorder 2, %s14
    // Predicated region
    $region65: #{_lambda_.1} parent=5 // pred_check
      %p6527 = pneg %p6526
    $region66: #{_lambda_.1} parent=5 // pred_check_branch
      %6529 = sbr.rel (%p6527) target = $region68
    $region67: #{_lambda_.1} parent=5 // pred_region
      %s6530 = ssub.s32 %s14, 2
      // Predicated region
      $region69: #{_lambda_.1} parent=67 // pred_check
        %p6531 = pneg %p243
      $region70: #{_lambda_.1} parent=67 // pred_check_branch
        %6533 = sbr.rel (%p6531) target = $region72
      $region71: #{_lambda_.1} parent=67 // pred_region
        %p6534 = scmp.lt.s32.totalorder %s25, 1
        %s6535 = scalar_select %p6534, %s25, 1
        %p6536 = scmp.lt.s32.totalorder %s26, 1
        %s6537 = scalar_select %p6536, %s26, 1
        %s6538 = smul.addr %s6535, 2
        %s6539 = sadd.s32 %s6537, %s6538
        %s6540 = smul.addr %s6539, 8
        %s6541 = scalar_lea.vmem %s8, %s6540
      $region72: #{_lambda_.1} parent=67 // pred_fallthru
        _
    $region68: #{_lambda_.1} parent=5 // pred_fallthru
      _
  $region6: #{_lambda_.1} parent=0 // loop_footer
    %s18 = sadd.s32 1, %s14
  $region7: #{_lambda_.1} parent=0 // loop_footer_branch
    %13 = sbr.rel target = $region3
  $region8: #{_lambda_.1} parent=0 // loop_exit
    _

</llo_original>
